<compile_context>
chip_gen: v6e
topology: v6e:2x2x1
jax: 0.10.0
libtpu: 0.0.40
codegen_flags: <defaults>
</compile_context>

<pallas_src>
import functools

import jax
import jax.numpy as jnp
from jax import lax
from jax.experimental import pallas as pl
from jax.experimental.pallas import tpu as pltpu

LN_EPS = 1e-5  # PyTorch nn.LayerNorm default


# ---------------------------------------------------------------------------
# VMEM sizing helpers (generation-aware: v7x 64 MiB/TC, v5e/v6e 128 MiB)
# ---------------------------------------------------------------------------
@functools.lru_cache(maxsize=None)
def _vmem_capacity_bytes():
    try:
        return int(pltpu.get_tpu_info().vmem_capacity_bytes)
    except Exception:   # noqa: BLE001 - conservative default (v7x per-TC VMEM)
        return 64 << 20


def _vmem_limit_bytes():
    return int(_vmem_capacity_bytes()) * 3 // 4


def _layernorm(x, gamma, beta):
    mu = jnp.mean(x, axis=-1, keepdims=True)
    var = jnp.mean((x - mu) ** 2, axis=-1, keepdims=True)
    return (x - mu) * lax.rsqrt(var + LN_EPS) * gamma + beta


# Single-buffering of grid-invariant weight blocks halves their VMEM (BlockSpec
# double-buffers by default).  Some jax builds do not wire pipeline_mode into the
# pallas_call grid pipeline; fall back to default buffering in that case.
_SINGLE_BUFFER_WEIGHTS = True


def _invoke(make_call, args):
    global _SINGLE_BUFFER_WEIGHTS
    if _SINGLE_BUFFER_WEIGHTS:
        try:
            return make_call(True)(*args)
        except Exception:   # noqa: BLE001 - pipeline_mode=Buffered(1) unsupported
            _SINGLE_BUFFER_WEIGHTS = False
    return make_call(False)(*args)


# ---------------------------------------------------------------------------
# Fused TransformerBlock kernel:
#   out = FFN(LN2(MHA(LN1(x)) + x)) + x   (second residual adds the ORIGINAL input x,
#   exactly as the PyTorch module does)
# ---------------------------------------------------------------------------
def transformer_block_kernel(x_ref, ln1_g_ref, ln1_b_ref,
                             wqkv_ref, wproj_ref, bproj_ref,
                             ln2_g_ref, ln2_b_ref,
                             w1_ref, b1_ref, w2_ref, b2_ref,
                             o_ref, cat_ref, *, head_nb, head_size, seq_len):
    Bt = x_ref.shape[0]
    T = seq_len
    E = head_nb * head_size
    M = Bt * T

    x = x_ref[...].reshape(M, E)                            # (M, E) f32
    ln1 = _layernorm(x, ln1_g_ref[0], ln1_b_ref[0])

    # Fused QKV: one lane-dense (M, E) x (E, 3E) bf16 MXU matmul, f32 accumulation.
    # 1/sqrt(head_size) is already folded into the q-columns of Wqkv.
    qkv = jnp.dot(ln1.astype(jnp.bfloat16), wqkv_ref[...],
                  preferred_element_type=jnp.float32)       # (M, 3E) f32
    qkv = qkv.reshape(Bt, T, 3 * E)                         # split rows (f32, T % 8 == 0)

    row = lax.broadcasted_iota(jnp.int32, (T, T), 0)
    col = lax.broadcasted_iota(jnp.int32, (T, T), 1)
    # finite additive causal bias (NaN-safe vs. -inf)
    causal_bias = jnp.where(row >= col, jnp.float32(0.0), jnp.float32(-1e30))[None]

    # Per-head attention, batched over the Bt sequences with 3-D einsums.  Head
    # outputs are written straight into the VMEM scratch `cat_ref` (no concatenates).
    for h in range(head_nb):
        lo = h * head_size
        q = qkv[:, :, lo:lo + head_size].astype(jnp.bfloat16)              # (Bt, T, hs)
        k = qkv[:, :, E + lo:E + lo + head_size].astype(jnp.bfloat16)
        v = qkv[:, :, 2 * E + lo:2 * E + lo + head_size].astype(jnp.bfloat16)
        wei = jnp.einsum("bqd,bkd->bqk", q, k,
                         preferred_element_type=jnp.float32) + causal_bias  # (Bt, T, T)
        wei = wei - jnp.max(wei, axis=-1, keepdims=True)
        p = jnp.exp(wei)                                    # f32 softmax numerics
        p = p * pl.reciprocal(jnp.sum(p, axis=-1, keepdims=True), approx=True)
        out_h = jnp.einsum("bqk,bkd->bqd", p.astype(jnp.bfloat16), v,
                           preferred_element_type=jnp.float32)              # (Bt, T, hs)
        cat_ref[:, lo:lo + head_size] = out_h.reshape(M, head_size)
        # attention dropout: identity in eval mode

    # Single full-width output projection on the concatenated head outputs.
    mha = jnp.dot(cat_ref[...].astype(jnp.bfloat16), wproj_ref[...],
                  preferred_element_type=jnp.float32) + bproj_ref[0]
    # multi-head dropout: identity in eval mode

    out = mha + x
    ln2 = _layernorm(out, ln2_g_ref[0], ln2_b_ref[0])
    h1 = jnp.dot(ln2.astype(jnp.bfloat16), w1_ref[...],
                 preferred_element_type=jnp.float32) + b1_ref[0]
    h1 = jnp.maximum(h1, 0.0)
    ff = jnp.dot(h1.astype(jnp.bfloat16), w2_ref[...],
                 preferred_element_type=jnp.float32) + b2_ref[0]
    # FFN dropout: identity in eval mode

    # Second residual adds the ORIGINAL block input x (matches the PyTorch module).
    o_ref[...] = (ff + x).reshape(Bt, T, E)


def _pick_batch_tile(B, T, E, vmem_budget_bytes):
    """Largest divisor of B that leaves >= 2 grid steps when B > 1 (so both v7x
    TensorCores are busy and DMAs double-buffer) and fits the VMEM budget.  Prefers
    M = bt*T a multiple of 256 (fills the 256-wide MXU on v6e/v7x)."""
    max_bt = max(B // 2, 1)
    fitting = []
    for bt in range(1, max_bt + 1):
        if B % bt:
            continue
        M = bt * T
        est = (M * E * 4 * (2 * 2 + 3 + 4 + 1 + 3)   # x/out (dbl-buffered) + f32 temps
               + bt * T * T * 4 * 2                  # per-head attention scores/probs
               + 12 * E * E * 2)                     # bf16 weights (single-buffered)
        if est <= vmem_budget_bytes:
            fitting.append(bt)
    if not fitting:
        return 1
    preferred = [bt for bt in fitting if (bt * T) % 256 == 0]
    return max(preferred) if preferred else max(fitting)


def transformer_block(x, p, *, head_nb, head_size, batch_tile=None):
    B, T, E = x.shape
    if batch_tile is None:
        bt = _pick_batch_tile(B, T, E, _vmem_capacity_bytes() // 2)
    else:
        assert B % batch_tile == 0, (B, batch_tile)
        bt = batch_tile
    M = bt * T
    kern = functools.partial(transformer_block_kernel,
                             head_nb=head_nb, head_size=head_size, seq_len=T)
    per_b = lambda i: (i, 0, 0)

    def make(single_buffer):
        def w_spec(shape):
            # Grid-invariant block (index map constant) — single-buffer when possible.
            if single_buffer:
                return pl.BlockSpec(shape, lambda i: (0, 0),
                                    pipeline_mode=pl.Buffered(1))
            return pl.BlockSpec(shape, lambda i: (0, 0))

        return pl.pallas_call(
            kern,
            out_shape=jax.ShapeDtypeStruct((B, T, E), jnp.float32),
            grid_spec=pltpu.PrefetchScalarGridSpec(
                num_scalar_prefetch=0,
                grid=(B // bt,),
                in_specs=[
                    pl.BlockSpec((bt, T, E), per_b),       # x (pipelined per grid step)
                    w_spec((1, E)),                        # ln1 gamma
                    w_spec((1, E)),                        # ln1 beta
                    w_spec((E, 3 * E)),                    # Wqkv (bf16, q cols pre-scaled)
                    w_spec((E, E)),                        # Wproj (bf16)
                    w_spec((1, E)),                        # bproj
                    w_spec((1, E)),                        # ln2 gamma
                    w_spec((1, E)),                        # ln2 beta
                    w_spec((E, 4 * E)),                    # W1 (bf16)
                    w_spec((1, 4 * E)),                    # b1
                    w_spec((4 * E, E)),                    # W2 (bf16)
                    w_spec((1, E)),                        # b2
                ],
                out_specs=pl.BlockSpec((bt, T, E), per_b),
                scratch_shapes=[pltpu.VMEM((M, E), jnp.float32)]),   # concatenated heads
            compiler_params=pltpu.CompilerParams(
                dimension_semantics=("parallel",),
                vmem_limit_bytes=_vmem_limit_bytes()))

    args = (x, p["ln1_g"], p["ln1_b"], p["wqkv"], p["wproj"], p["bproj"],
            p["ln2_g"], p["ln2_b"], p["w1"], p["b1"], p["w2"], p["b2"])
    return _invoke(make, args)


# ---------------------------------------------------------------------------
# Fused final LayerNorm + lm_head, tiled over (B*T rows) x (vocab):
#   logits[r0:r0+tr, v0:v0+tv] = LN(x[r0:r0+tr]) @ W[:, v0:v0+tv] + b[v0:v0+tv]
# LN of a row block is computed once (v == 0), cached in VMEM (bf16) and reused for
# every vocab tile.
# ---------------------------------------------------------------------------
def head_kernel(x_ref, g_ref, b_ref, w_ref, bias_ref, o_ref, ln_ref):
    @pl.when(pl.program_id(1) == 0)
    def _():
        ln = _layernorm(x_ref[...], g_ref[0], b_ref[0])
        ln_ref[...] = ln.astype(jnp.bfloat16)
    o_ref[...] = jnp.dot(ln_ref[...], w_ref[...],
                         preferred_element_type=jnp.float32) + bias_ref[0]


def _pick_tile_rows(M, max_tile=512):
    if M <= max_tile:
        return M
    start = (min(max_tile, M // 2) // 8) * 8
    for t in range(start, 7, -8):
        if M % t == 0:
            return t
    return M   # full-extent block (allowed even if not a multiple of 8)


def _pick_tile_v(V, E, tile_rows, budget_bytes, max_tile=4096):
    if V % 128 != 0:
        return V
    best = 128
    for t in range(128, min(V, max_tile) + 1, 128):
        if V % t:
            continue
        need = (2 * E * t * 2            # double-buffered bf16 weight tiles
                + 2 * tile_rows * t * 4  # double-buffered f32 output tiles
                + tile_rows * E * 2)     # cached LN (bf16)
        if need <= budget_bytes:
            best = t
    return best


def lm_head(x, g, b, w, bias, *, tile_rows=None, tile_v=None):
    B, T, E = x.shape
    V = w.shape[1]
    M = B * T
    x2 = x.reshape(M, E)                 # row-tiled, lane-dense lm_head over B*T rows
    tr = tile_rows if tile_rows is not None else _pick_tile_rows(M)
    tv = tile_v if tile_v is not None else _pick_tile_v(V, E, tr,
                                                        _vmem_capacity_bytes() // 3)
    out = pl.pallas_call(
        head_kernel,
        out_shape=jax.ShapeDtypeStruct((M, V), jnp.float32),
        grid_spec=pltpu.PrefetchScalarGridSpec(
            num_scalar_prefetch=0,
            grid=(M // tr, V // tv),
            in_specs=[
                pl.BlockSpec((tr, E), lambda r, v: (r, 0)),    # activations row block
                pl.BlockSpec((1, E), lambda r, v: (0, 0)),     # lnf gamma
                pl.BlockSpec((1, E), lambda r, v: (0, 0)),     # lnf beta
                pl.BlockSpec((E, tv), lambda r, v: (0, v)),    # W_head vocab tile (bf16)
                pl.BlockSpec((1, tv), lambda r, v: (0, v)),    # b_head vocab tile
            ],
            out_specs=pl.BlockSpec((tr, tv), lambda r, v: (r, v)),
            scratch_shapes=[pltpu.VMEM((tr, E), jnp.bfloat16)]),   # cached LN(x)
        compiler_params=pltpu.CompilerParams(
            dimension_semantics=("parallel", "arbitrary"),
            vmem_limit_bytes=_vmem_limit_bytes()),
    )(x2, g, b, w, bias)
    return out.reshape(B, T, V)


# ---------------------------------------------------------------------------
# Parameter construction + full forward
# ---------------------------------------------------------------------------
def init_params(key, *, vocab_size, emb_size, head_nb, block_nb, block_size):
    assert emb_size % head_nb == 0
    head_size = emb_size // head_nb
    scale = 0.02
    keys = iter(jax.random.split(key, 8 + block_nb * 8))
    nrm = lambda shape: (scale * jax.random.normal(next(keys), shape)).astype(jnp.float32)

    params = {
        "tok_emb": nrm((vocab_size, emb_size)),
        "pos_emb": nrm((block_size, emb_size)),
        "lnf_g": jnp.ones((1, emb_size), jnp.float32),
        "lnf_b": jnp.zeros((1, emb_size), jnp.float32),
        "w_head": nrm((emb_size, vocab_size)).astype(jnp.bfloat16),   # y = x @ W
        "b_head": jnp.zeros((1, vocab_size), jnp.float32),
        "blocks": [],
    }
    for _ in range(block_nb):
        wqkv = nrm((emb_size, 3 * emb_size))
        # fold the attention scale 1/sqrt(head_size) into the q-columns (first E cols)
        wqkv = wqkv.at[:, :emb_size].multiply(head_size ** -0.5)
        blk = {
            "ln1_g": jnp.ones((1, emb_size), jnp.float32),
            "ln1_b": jnp.zeros((1, emb_size), jnp.float32),
            # columns: [q_h0..q_hN | k_h0..k_hN | v_h0..v_hN]
            "wqkv": wqkv.astype(jnp.bfloat16),
            "wproj": nrm((emb_size, emb_size)).astype(jnp.bfloat16),
            "bproj": jnp.zeros((1, emb_size), jnp.float32),
            "ln2_g": jnp.ones((1, emb_size), jnp.float32),
            "ln2_b": jnp.zeros((1, emb_size), jnp.float32),
            "w1": nrm((emb_size, 4 * emb_size)).astype(jnp.bfloat16),
            "b1": jnp.zeros((1, 4 * emb_size), jnp.float32),
            "w2": nrm((4 * emb_size, emb_size)).astype(jnp.bfloat16),
            "b2": jnp.zeros((1, emb_size), jnp.float32),
        }
        params["blocks"].append(blk)
    return params


def llm_forward(params, idx, *, head_nb, head_size):
    B, T = idx.shape
    # embedding gather (glue, plain JAX) -- the hot path lives in the Pallas kernels.
    tok = jnp.take(params["tok_emb"], idx, axis=0)          # (B, T, E)
    pos = params["pos_emb"][:T][None, :, :]                 # (1, T, E)
    out = tok + pos
    for blk in params["blocks"]:
        out = transformer_block(out, blk, head_nb=head_nb, head_size=head_size)
    # TODO(synk): carry bf16 activations between blocks (or fuse blocks along a
    #             'layer' grid axis) to halve the per-layer HBM round-trip.
    return lm_head(out, params["lnf_g"], params["lnf_b"],
                   params["w_head"], params["b_head"])


# ---------------------------------------------------------------------------
# Pure-JAX reference (same mixed precision: bf16 matmul operands, f32 accumulate;
# the attention scale lives inside wqkv's q columns, same as the kernel path)
# ---------------------------------------------------------------------------
def _mm(a, b):
    return jnp.matmul(a.astype(jnp.bfloat16).astype(jnp.float32),
                      b.astype(jnp.bfloat16).astype(jnp.float32),
                      precision=lax.Precision.HIGHEST)


def _ref_block(x, p, head_nb, head_size):
    B, T, E = x.shape
    ln1 = _layernorm(x, p["ln1_g"][0], p["ln1_b"][0])
    qkv = _mm(ln1, p["wqkv"])                               # (B, T, 3E)
    mask = jnp.tril(jnp.ones((T, T), bool))
    heads = []
    for h in range(head_nb):
        lo = h * head_size
        q = qkv[..., lo:lo + head_size]
        k = qkv[..., E + lo:E + lo + head_size]
        v = qkv[..., 2 * E + lo:2 * E + lo + head_size]
        qb = q.astype(jnp.bfloat16).astype(jnp.float32)
        kb = k.astype(jnp.bfloat16).astype(jnp.float32)
        vb = v.astype(jnp.bfloat16).astype(jnp.float32)
        wei = jnp.einsum("btd,bsd->bts", qb, kb, precision=lax.Precision.HIGHEST)
        wei = jnp.where(mask[None], wei, -1e30)
        wei = wei - wei.max(-1, keepdims=True)
        pw = jnp.exp(wei)
        pw = pw / pw.sum(-1, keepdims=True)
        pwb = pw.astype(jnp.bfloat16).astype(jnp.float32)
        heads.append(jnp.einsum("bts,bsd->btd", pwb, vb, precision=lax.Precision.HIGHEST))
    cat = jnp.concatenate(heads, axis=-1)
    mha = _mm(cat, p["wproj"]) + p["bproj"][0]
    out = mha + x
    ln2 = _layernorm(out, p["ln2_g"][0], p["ln2_b"][0])
    h1 = jnp.maximum(_mm(ln2, p["w1"]) + p["b1"][0], 0.0)
    ff = _mm(h1, p["w2"]) + p["b2"][0]
    return ff + x


def llm_forward_ref(params, idx, *, head_nb, head_size):
    T = idx.shape[1]
    out = jnp.take(params["tok_emb"], idx, axis=0) + params["pos_emb"][:T][None]
    for blk in params["blocks"]:
        out = _ref_block(out, blk, head_nb, head_size)
    out = _layernorm(out, params["lnf_g"][0], params["lnf_b"][0])
    return _mm(out, params["w_head"]) + params["b_head"][0]


if __name__ == "__main__":
    # Small config consistent with the module's forward.
    VOCAB, EMB, HEADS, BLOCKS, BLOCK_SIZE = 64, 32, 4, 2, 16
    HEAD_SIZE = EMB // HEADS
    B, T = 2, 8

    key = jax.random.PRNGKey(0)
    pkey, xkey = jax.random.split(key)
    params = init_params(pkey, vocab_size=VOCAB, emb_size=EMB, head_nb=HEADS,
                         block_nb=BLOCKS, block_size=BLOCK_SIZE)
    idx = jax.random.randint(xkey, (B, T), 0, VOCAB, dtype=jnp.int32)

    logits = llm_forward(params, idx, head_nb=HEADS, head_size=HEAD_SIZE)
    logits = jax.block_until_ready(logits)
    assert logits.shape == (B, T, VOCAB), logits.shape

    ref = llm_forward_ref(params, idx, head_nb=HEADS, head_size=HEAD_SIZE)
    max_err = float(jnp.max(jnp.abs(logits - ref)))
    assert jnp.allclose(logits, ref, atol=5e-3, rtol=5e-3), max_err

    print("KERNEL_OK")
</pallas_src>

<mosaic_0001>
module attributes {stable_mosaic.version = 11 : i64} {
  func.func @transformer_block_kernel(%arg0: i32, %arg1: memref<1x8x32xf32, #tpu.memory_space<vmem>>, %arg2: memref<1x32xf32, #tpu.memory_space<vmem>>, %arg3: memref<1x32xf32, #tpu.memory_space<vmem>>, %arg4: memref<32x96xbf16, #tpu.memory_space<vmem>>, %arg5: memref<32x32xbf16, #tpu.memory_space<vmem>>, %arg6: memref<1x32xf32, #tpu.memory_space<vmem>>, %arg7: memref<1x32xf32, #tpu.memory_space<vmem>>, %arg8: memref<1x32xf32, #tpu.memory_space<vmem>>, %arg9: memref<32x128xbf16, #tpu.memory_space<vmem>>, %arg10: memref<1x128xf32, #tpu.memory_space<vmem>>, %arg11: memref<128x32xbf16, #tpu.memory_space<vmem>>, %arg12: memref<1x32xf32, #tpu.memory_space<vmem>>, %arg13: memref<1x8x32xf32, #tpu.memory_space<vmem>>, %arg14: memref<8x32xf32, #tpu.memory_space<vmem>>) attributes {dimension_semantics = [#tpu.dimension_semantics<parallel>], iteration_bounds = array<i64: 2>, scalar_prefetch = 0 : i64, scratch_operands = 1 : i64, tpu.core_type = #tpu.core_type<tc>, window_params = [{transform_indices = @transform_0, window_bounds = array<i64: 1, 8, 32>}, {pipeline_mode = #tpu.pipeline_mode<synchronous>, transform_indices = @transform_1, window_bounds = array<i64: 1, 32>}, {pipeline_mode = #tpu.pipeline_mode<synchronous>, transform_indices = @transform_2, window_bounds = array<i64: 1, 32>}, {pipeline_mode = #tpu.pipeline_mode<synchronous>, transform_indices = @transform_3, window_bounds = array<i64: 32, 96>}, {pipeline_mode = #tpu.pipeline_mode<synchronous>, transform_indices = @transform_4, window_bounds = array<i64: 32, 32>}, {pipeline_mode = #tpu.pipeline_mode<synchronous>, transform_indices = @transform_5, window_bounds = array<i64: 1, 32>}, {pipeline_mode = #tpu.pipeline_mode<synchronous>, transform_indices = @transform_6, window_bounds = array<i64: 1, 32>}, {pipeline_mode = #tpu.pipeline_mode<synchronous>, transform_indices = @transform_7, window_bounds = array<i64: 1, 32>}, {pipeline_mode = #tpu.pipeline_mode<synchronous>, transform_indices = @transform_8, window_bounds = array<i64: 32, 128>}, {pipeline_mode = #tpu.pipeline_mode<synchronous>, transform_indices = @transform_9, window_bounds = array<i64: 1, 128>}, {pipeline_mode = #tpu.pipeline_mode<synchronous>, transform_indices = @transform_10, window_bounds = array<i64: 128, 32>}, {pipeline_mode = #tpu.pipeline_mode<synchronous>, transform_indices = @transform_11, window_bounds = array<i64: 1, 32>}, {transform_indices = @transform_12, window_bounds = array<i64: 1, 8, 32>}]} {
    %c0 = arith.constant 0 : index
    %c0_0 = arith.constant 0 : index
    %c0_1 = arith.constant 0 : index
    %0 = vector.load %arg1[%c0, %c0_0, %c0_1] : memref<1x8x32xf32, #tpu.memory_space<vmem>>, vector<1x8x32xf32>
    %1 = vector.shape_cast %0 : vector<1x8x32xf32> to vector<8x32xf32>
    %c0_2 = arith.constant 0 : index
    %c0_3 = arith.constant 0 : index
    %2 = vector.load %arg2[%c0_2, %c0_3] : memref<1x32xf32, #tpu.memory_space<vmem>>, vector<1x32xf32>
    %3 = vector.shape_cast %2 : vector<1x32xf32> to vector<32xf32>
    %c0_4 = arith.constant 0 : index
    %c0_5 = arith.constant 0 : index
    %4 = vector.load %arg3[%c0_4, %c0_5] : memref<1x32xf32, #tpu.memory_space<vmem>>, vector<1x32xf32>
    %5 = vector.shape_cast %4 : vector<1x32xf32> to vector<32xf32>
    %cst = arith.constant dense<0.000000e+00> : vector<8xf32>
    %6 = vector.multi_reduction <add>, %1, %cst [1] : vector<8x32xf32> to vector<8xf32>
    %7 = vector.shape_cast %6 : vector<8xf32> to vector<8x1xf32>
    %cst_6 = arith.constant 3.200000e+01 : f32
    %8 = vector.broadcast %cst_6 : f32 to vector<8x1xf32>
    %9 = arith.divf %7, %8 : vector<8x1xf32>
    %10 = vector.broadcast %9 : vector<8x1xf32> to vector<8x32xf32>
    %11 = arith.subf %1, %10 : vector<8x32xf32>
    %12 = arith.mulf %11, %11 : vector<8x32xf32>
    %cst_7 = arith.constant dense<0.000000e+00> : vector<8xf32>
    %13 = vector.multi_reduction <add>, %12, %cst_7 [1] : vector<8x32xf32> to vector<8xf32>
    %14 = vector.shape_cast %13 : vector<8xf32> to vector<8x1xf32>
    %cst_8 = arith.constant 3.200000e+01 : f32
    %15 = vector.broadcast %cst_8 : f32 to vector<8x1xf32>
    %16 = arith.divf %14, %15 : vector<8x1xf32>
    %17 = vector.broadcast %9 : vector<8x1xf32> to vector<8x32xf32>
    %18 = arith.subf %1, %17 : vector<8x32xf32>
    %cst_9 = arith.constant 9.99999974E-6 : f32
    %19 = vector.broadcast %cst_9 : f32 to vector<8x1xf32>
    %20 = arith.addf %16, %19 : vector<8x1xf32>
    %21 = math.rsqrt %20 : vector<8x1xf32>
    %22 = vector.broadcast %21 : vector<8x1xf32> to vector<8x32xf32>
    %23 = arith.mulf %18, %22 : vector<8x32xf32>
    %24 = vector.shape_cast %3 : vector<32xf32> to vector<1x32xf32>
    %25 = vector.broadcast %24 : vector<1x32xf32> to vector<8x32xf32>
    %26 = arith.mulf %23, %25 : vector<8x32xf32>
    %27 = vector.shape_cast %5 : vector<32xf32> to vector<1x32xf32>
    %28 = vector.broadcast %27 : vector<1x32xf32> to vector<8x32xf32>
    %29 = arith.addf %26, %28 : vector<8x32xf32>
    %30 = arith.truncf %29 : vector<8x32xf32> to vector<8x32xbf16>
    %c0_10 = arith.constant 0 : index
    %c0_11 = arith.constant 0 : index
    %31 = vector.load %arg4[%c0_10, %c0_11] : memref<32x96xbf16, #tpu.memory_space<vmem>>, vector<32x96xbf16>
    %cst_12 = arith.constant dense<0.000000e+00> : vector<8x96xf32>
    %32 = tpu.matmul %30, %31, %cst_12 {dimension_numbers = #tpu.dot_dimension_numbers<[1], [0], [0], [1], [0, 0, 1, 1], [], []>} : vector<8x32xbf16>, vector<32x96xbf16>, vector<8x96xf32> -> vector<8x96xf32>
    %33 = vector.shape_cast %32 : vector<8x96xf32> to vector<1x8x96xf32>
    %34 = tpu.iota {dimensions = array<i32: 0>} : vector<8x8xi32>
    %35 = tpu.iota {dimensions = array<i32: 1>} : vector<8x8xi32>
    %36 = arith.cmpi sge, %34, %35 : vector<8x8xi32>
    %cst_13 = arith.constant 0.000000e+00 : f32
    %cst_14 = arith.constant -1.000000e+30 : f32
    %37 = vector.broadcast %cst_13 : f32 to vector<8x8xf32>
    %38 = vector.broadcast %cst_14 : f32 to vector<8x8xf32>
    %39 = arith.select %36, %37, %38 : vector<8x8xi1>, vector<8x8xf32>
    %40 = vector.shape_cast %39 : vector<8x8xf32> to vector<1x8x8xf32>
    %41 = vector.extract_strided_slice %33 {offsets = [0, 0, 0], sizes = [1, 8, 8], strides = [1, 1, 1]} : vector<1x8x96xf32> to vector<1x8x8xf32>
    %42 = arith.truncf %41 : vector<1x8x8xf32> to vector<1x8x8xbf16>
    %43 = vector.extract_strided_slice %33 {offsets = [0, 0, 32], sizes = [1, 8, 8], strides = [1, 1, 1]} : vector<1x8x96xf32> to vector<1x8x8xf32>
    %44 = arith.truncf %43 : vector<1x8x8xf32> to vector<1x8x8xbf16>
    %45 = vector.extract_strided_slice %33 {offsets = [0, 0, 64], sizes = [1, 8, 8], strides = [1, 1, 1]} : vector<1x8x96xf32> to vector<1x8x8xf32>
    %46 = arith.truncf %45 : vector<1x8x8xf32> to vector<1x8x8xbf16>
    "tpu.trace_start"() <{level = 10 : i32, message = "bqd,bkd->bqk"}> : () -> ()
    %cst_15 = arith.constant dense<0.000000e+00> : vector<1x8x8xf32>
    %47 = tpu.matmul %42, %44, %cst_15 {dimension_numbers = #tpu.dot_dimension_numbers<[2], [2], [1], [1], [0, 0, 0, 1, 1, 1], [0], [0]>} : vector<1x8x8xbf16>, vector<1x8x8xbf16>, vector<1x8x8xf32> -> vector<1x8x8xf32>
    "tpu.trace_stop"() : () -> ()
    %48 = arith.addf %47, %40 : vector<1x8x8xf32>
    %cst_16 = arith.constant dense<0xFF800000> : vector<1x8xf32>
    %49 = vector.multi_reduction <maximumf>, %48, %cst_16 [2] : vector<1x8x8xf32> to vector<1x8xf32>
    %50 = vector.shape_cast %49 : vector<1x8xf32> to vector<1x8x1xf32>
    %51 = vector.broadcast %50 : vector<1x8x1xf32> to vector<1x8x8xf32>
    %52 = arith.subf %48, %51 : vector<1x8x8xf32>
    %53 = math.exp %52 : vector<1x8x8xf32>
    %cst_17 = arith.constant dense<0.000000e+00> : vector<1x8xf32>
    %54 = vector.multi_reduction <add>, %53, %cst_17 [2] : vector<1x8x8xf32> to vector<1x8xf32>
    %55 = vector.shape_cast %54 : vector<1x8xf32> to vector<1x8x1xf32>
    %56 = tpu.reciprocal %55 {approx = true} : vector<1x8x1xf32> -> vector<1x8x1xf32>
    %57 = vector.broadcast %56 : vector<1x8x1xf32> to vector<1x8x8xf32>
    %58 = arith.mulf %53, %57 : vector<1x8x8xf32>
    %59 = arith.truncf %58 : vector<1x8x8xf32> to vector<1x8x8xbf16>
    "tpu.trace_start"() <{level = 10 : i32, message = "bqk,bkd->bqd"}> : () -> ()
    %cst_18 = arith.constant dense<0.000000e+00> : vector<1x8x8xf32>
    %60 = tpu.matmul %59, %46, %cst_18 {dimension_numbers = #tpu.dot_dimension_numbers<[2], [1], [1], [2], [0, 0, 0, 1, 1, 2], [0], [0]>} : vector<1x8x8xbf16>, vector<1x8x8xbf16>, vector<1x8x8xf32> -> vector<1x8x8xf32>
    "tpu.trace_stop"() : () -> ()
    %61 = vector.shape_cast %60 : vector<1x8x8xf32> to vector<8x8xf32>
    %c0_19 = arith.constant 0 : index
    %c0_20 = arith.constant 0 : index
    %62 = vector.load %arg14[%c0_19, %c0_20] : memref<8x32xf32, #tpu.memory_space<vmem>>, vector<8x8xf32>
    tpu.vector_store %arg14[%c0_19, %c0_20], %61 {strides = array<i32>} : memref<8x32xf32, #tpu.memory_space<vmem>>, vector<8x8xf32>,
    %63 = vector.extract_strided_slice %33 {offsets = [0, 0, 8], sizes = [1, 8, 8], strides = [1, 1, 1]} : vector<1x8x96xf32> to vector<1x8x8xf32>
    %64 = arith.truncf %63 : vector<1x8x8xf32> to vector<1x8x8xbf16>
    %65 = vector.extract_strided_slice %33 {offsets = [0, 0, 40], sizes = [1, 8, 8], strides = [1, 1, 1]} : vector<1x8x96xf32> to vector<1x8x8xf32>
    %66 = arith.truncf %65 : vector<1x8x8xf32> to vector<1x8x8xbf16>
    %67 = vector.extract_strided_slice %33 {offsets = [0, 0, 72], sizes = [1, 8, 8], strides = [1, 1, 1]} : vector<1x8x96xf32> to vector<1x8x8xf32>
    %68 = arith.truncf %67 : vector<1x8x8xf32> to vector<1x8x8xbf16>
    "tpu.trace_start"() <{level = 10 : i32, message = "bqd,bkd->bqk"}> : () -> ()
    %cst_21 = arith.constant dense<0.000000e+00> : vector<1x8x8xf32>
    %69 = tpu.matmul %64, %66, %cst_21 {dimension_numbers = #tpu.dot_dimension_numbers<[2], [2], [1], [1], [0, 0, 0, 1, 1, 1], [0], [0]>} : vector<1x8x8xbf16>, vector<1x8x8xbf16>, vector<1x8x8xf32> -> vector<1x8x8xf32>
    "tpu.trace_stop"() : () -> ()
    %70 = arith.addf %69, %40 : vector<1x8x8xf32>
    %cst_22 = arith.constant dense<0xFF800000> : vector<1x8xf32>
    %71 = vector.multi_reduction <maximumf>, %70, %cst_22 [2] : vector<1x8x8xf32> to vector<1x8xf32>
    %72 = vector.shape_cast %71 : vector<1x8xf32> to vector<1x8x1xf32>
    %73 = vector.broadcast %72 : vector<1x8x1xf32> to vector<1x8x8xf32>
    %74 = arith.subf %70, %73 : vector<1x8x8xf32>
    %75 = math.exp %74 : vector<1x8x8xf32>
    %cst_23 = arith.constant dense<0.000000e+00> : vector<1x8xf32>
    %76 = vector.multi_reduction <add>, %75, %cst_23 [2] : vector<1x8x8xf32> to vector<1x8xf32>
    %77 = vector.shape_cast %76 : vector<1x8xf32> to vector<1x8x1xf32>
    %78 = tpu.reciprocal %77 {approx = true} : vector<1x8x1xf32> -> vector<1x8x1xf32>
    %79 = vector.broadcast %78 : vector<1x8x1xf32> to vector<1x8x8xf32>
    %80 = arith.mulf %75, %79 : vector<1x8x8xf32>
    %81 = arith.truncf %80 : vector<1x8x8xf32> to vector<1x8x8xbf16>
    "tpu.trace_start"() <{level = 10 : i32, message = "bqk,bkd->bqd"}> : () -> ()
    %cst_24 = arith.constant dense<0.000000e+00> : vector<1x8x8xf32>
    %82 = tpu.matmul %81, %68, %cst_24 {dimension_numbers = #tpu.dot_dimension_numbers<[2], [1], [1], [2], [0, 0, 0, 1, 1, 2], [0], [0]>} : vector<1x8x8xbf16>, vector<1x8x8xbf16>, vector<1x8x8xf32> -> vector<1x8x8xf32>
    "tpu.trace_stop"() : () -> ()
    %83 = vector.shape_cast %82 : vector<1x8x8xf32> to vector<8x8xf32>
    %c0_25 = arith.constant 0 : index
    %c8 = arith.constant 8 : index
    %84 = vector.load %arg14[%c0_25, %c8] : memref<8x32xf32, #tpu.memory_space<vmem>>, vector<8x8xf32>
    tpu.vector_store %arg14[%c0_25, %c8], %83 {strides = array<i32>} : memref<8x32xf32, #tpu.memory_space<vmem>>, vector<8x8xf32>,
    %85 = vector.extract_strided_slice %33 {offsets = [0, 0, 16], sizes = [1, 8, 8], strides = [1, 1, 1]} : vector<1x8x96xf32> to vector<1x8x8xf32>
    %86 = arith.truncf %85 : vector<1x8x8xf32> to vector<1x8x8xbf16>
    %87 = vector.extract_strided_slice %33 {offsets = [0, 0, 48], sizes = [1, 8, 8], strides = [1, 1, 1]} : vector<1x8x96xf32> to vector<1x8x8xf32>
    %88 = arith.truncf %87 : vector<1x8x8xf32> to vector<1x8x8xbf16>
    %89 = vector.extract_strided_slice %33 {offsets = [0, 0, 80], sizes = [1, 8, 8], strides = [1, 1, 1]} : vector<1x8x96xf32> to vector<1x8x8xf32>
    %90 = arith.truncf %89 : vector<1x8x8xf32> to vector<1x8x8xbf16>
    "tpu.trace_start"() <{level = 10 : i32, message = "bqd,bkd->bqk"}> : () -> ()
    %cst_26 = arith.constant dense<0.000000e+00> : vector<1x8x8xf32>
    %91 = tpu.matmul %86, %88, %cst_26 {dimension_numbers = #tpu.dot_dimension_numbers<[2], [2], [1], [1], [0, 0, 0, 1, 1, 1], [0], [0]>} : vector<1x8x8xbf16>, vector<1x8x8xbf16>, vector<1x8x8xf32> -> vector<1x8x8xf32>
    "tpu.trace_stop"() : () -> ()
    %92 = arith.addf %91, %40 : vector<1x8x8xf32>
    %cst_27 = arith.constant dense<0xFF800000> : vector<1x8xf32>
    %93 = vector.multi_reduction <maximumf>, %92, %cst_27 [2] : vector<1x8x8xf32> to vector<1x8xf32>
    %94 = vector.shape_cast %93 : vector<1x8xf32> to vector<1x8x1xf32>
    %95 = vector.broadcast %94 : vector<1x8x1xf32> to vector<1x8x8xf32>
    %96 = arith.subf %92, %95 : vector<1x8x8xf32>
    %97 = math.exp %96 : vector<1x8x8xf32>
    %cst_28 = arith.constant dense<0.000000e+00> : vector<1x8xf32>
    %98 = vector.multi_reduction <add>, %97, %cst_28 [2] : vector<1x8x8xf32> to vector<1x8xf32>
    %99 = vector.shape_cast %98 : vector<1x8xf32> to vector<1x8x1xf32>
    %100 = tpu.reciprocal %99 {approx = true} : vector<1x8x1xf32> -> vector<1x8x1xf32>
    %101 = vector.broadcast %100 : vector<1x8x1xf32> to vector<1x8x8xf32>
    %102 = arith.mulf %97, %101 : vector<1x8x8xf32>
    %103 = arith.truncf %102 : vector<1x8x8xf32> to vector<1x8x8xbf16>
    "tpu.trace_start"() <{level = 10 : i32, message = "bqk,bkd->bqd"}> : () -> ()
    %cst_29 = arith.constant dense<0.000000e+00> : vector<1x8x8xf32>
    %104 = tpu.matmul %103, %90, %cst_29 {dimension_numbers = #tpu.dot_dimension_numbers<[2], [1], [1], [2], [0, 0, 0, 1, 1, 2], [0], [0]>} : vector<1x8x8xbf16>, vector<1x8x8xbf16>, vector<1x8x8xf32> -> vector<1x8x8xf32>
    "tpu.trace_stop"() : () -> ()
    %105 = vector.shape_cast %104 : vector<1x8x8xf32> to vector<8x8xf32>
    %c0_30 = arith.constant 0 : index
    %c16 = arith.constant 16 : index
    %106 = vector.load %arg14[%c0_30, %c16] : memref<8x32xf32, #tpu.memory_space<vmem>>, vector<8x8xf32>
    tpu.vector_store %arg14[%c0_30, %c16], %105 {strides = array<i32>} : memref<8x32xf32, #tpu.memory_space<vmem>>, vector<8x8xf32>,
    %107 = vector.extract_strided_slice %33 {offsets = [0, 0, 24], sizes = [1, 8, 8], strides = [1, 1, 1]} : vector<1x8x96xf32> to vector<1x8x8xf32>
    %108 = arith.truncf %107 : vector<1x8x8xf32> to vector<1x8x8xbf16>
    %109 = vector.extract_strided_slice %33 {offsets = [0, 0, 56], sizes = [1, 8, 8], strides = [1, 1, 1]} : vector<1x8x96xf32> to vector<1x8x8xf32>
    %110 = arith.truncf %109 : vector<1x8x8xf32> to vector<1x8x8xbf16>
    %111 = vector.extract_strided_slice %33 {offsets = [0, 0, 88], sizes = [1, 8, 8], strides = [1, 1, 1]} : vector<1x8x96xf32> to vector<1x8x8xf32>
    %112 = arith.truncf %111 : vector<1x8x8xf32> to vector<1x8x8xbf16>
    "tpu.trace_start"() <{level = 10 : i32, message = "bqd,bkd->bqk"}> : () -> ()
    %cst_31 = arith.constant dense<0.000000e+00> : vector<1x8x8xf32>
    %113 = tpu.matmul %108, %110, %cst_31 {dimension_numbers = #tpu.dot_dimension_numbers<[2], [2], [1], [1], [0, 0, 0, 1, 1, 1], [0], [0]>} : vector<1x8x8xbf16>, vector<1x8x8xbf16>, vector<1x8x8xf32> -> vector<1x8x8xf32>
    "tpu.trace_stop"() : () -> ()
    %114 = arith.addf %113, %40 : vector<1x8x8xf32>
    %cst_32 = arith.constant dense<0xFF800000> : vector<1x8xf32>
    %115 = vector.multi_reduction <maximumf>, %114, %cst_32 [2] : vector<1x8x8xf32> to vector<1x8xf32>
    %116 = vector.shape_cast %115 : vector<1x8xf32> to vector<1x8x1xf32>
    %117 = vector.broadcast %116 : vector<1x8x1xf32> to vector<1x8x8xf32>
    %118 = arith.subf %114, %117 : vector<1x8x8xf32>
    %119 = math.exp %118 : vector<1x8x8xf32>
    %cst_33 = arith.constant dense<0.000000e+00> : vector<1x8xf32>
    %120 = vector.multi_reduction <add>, %119, %cst_33 [2] : vector<1x8x8xf32> to vector<1x8xf32>
    %121 = vector.shape_cast %120 : vector<1x8xf32> to vector<1x8x1xf32>
    %122 = tpu.reciprocal %121 {approx = true} : vector<1x8x1xf32> -> vector<1x8x1xf32>
    %123 = vector.broadcast %122 : vector<1x8x1xf32> to vector<1x8x8xf32>
    %124 = arith.mulf %119, %123 : vector<1x8x8xf32>
    %125 = arith.truncf %124 : vector<1x8x8xf32> to vector<1x8x8xbf16>
    "tpu.trace_start"() <{level = 10 : i32, message = "bqk,bkd->bqd"}> : () -> ()
    %cst_34 = arith.constant dense<0.000000e+00> : vector<1x8x8xf32>
    %126 = tpu.matmul %125, %112, %cst_34 {dimension_numbers = #tpu.dot_dimension_numbers<[2], [1], [1], [2], [0, 0, 0, 1, 1, 2], [0], [0]>} : vector<1x8x8xbf16>, vector<1x8x8xbf16>, vector<1x8x8xf32> -> vector<1x8x8xf32>
    "tpu.trace_stop"() : () -> ()
    %127 = vector.shape_cast %126 : vector<1x8x8xf32> to vector<8x8xf32>
    %c0_35 = arith.constant 0 : index
    %c24 = arith.constant 24 : index
    %128 = vector.load %arg14[%c0_35, %c24] : memref<8x32xf32, #tpu.memory_space<vmem>>, vector<8x8xf32>
    tpu.vector_store %arg14[%c0_35, %c24], %127 {strides = array<i32>} : memref<8x32xf32, #tpu.memory_space<vmem>>, vector<8x8xf32>,
    %c0_36 = arith.constant 0 : index
    %c0_37 = arith.constant 0 : index
    %129 = vector.load %arg14[%c0_36, %c0_37] : memref<8x32xf32, #tpu.memory_space<vmem>>, vector<8x32xf32>
    %130 = arith.truncf %129 : vector<8x32xf32> to vector<8x32xbf16>
    %c0_38 = arith.constant 0 : index
    %c0_39 = arith.constant 0 : index
    %131 = vector.load %arg5[%c0_38, %c0_39] : memref<32x32xbf16, #tpu.memory_space<vmem>>, vector<32x32xbf16>
    %cst_40 = arith.constant dense<0.000000e+00> : vector<8x32xf32>
    %132 = tpu.matmul %130, %131, %cst_40 {dimension_numbers = #tpu.dot_dimension_numbers<[1], [0], [0], [1], [0, 0, 1, 1], [], []>} : vector<8x32xbf16>, vector<32x32xbf16>, vector<8x32xf32> -> vector<8x32xf32>
    %c0_41 = arith.constant 0 : index
    %c0_42 = arith.constant 0 : index
    %133 = vector.load %arg6[%c0_41, %c0_42] : memref<1x32xf32, #tpu.memory_space<vmem>>, vector<1x32xf32>
    %134 = vector.shape_cast %133 : vector<1x32xf32> to vector<32xf32>
    %135 = vector.shape_cast %134 : vector<32xf32> to vector<1x32xf32>
    %136 = vector.broadcast %135 : vector<1x32xf32> to vector<8x32xf32>
    %137 = arith.addf %132, %136 : vector<8x32xf32>
    %138 = arith.addf %137, %1 : vector<8x32xf32>
    %c0_43 = arith.constant 0 : index
    %c0_44 = arith.constant 0 : index
    %139 = vector.load %arg7[%c0_43, %c0_44] : memref<1x32xf32, #tpu.memory_space<vmem>>, vector<1x32xf32>
    %140 = vector.shape_cast %139 : vector<1x32xf32> to vector<32xf32>
    %c0_45 = arith.constant 0 : index
    %c0_46 = arith.constant 0 : index
    %141 = vector.load %arg8[%c0_45, %c0_46] : memref<1x32xf32, #tpu.memory_space<vmem>>, vector<1x32xf32>
    %142 = vector.shape_cast %141 : vector<1x32xf32> to vector<32xf32>
    %cst_47 = arith.constant dense<0.000000e+00> : vector<8xf32>
    %143 = vector.multi_reduction <add>, %138, %cst_47 [1] : vector<8x32xf32> to vector<8xf32>
    %144 = vector.shape_cast %143 : vector<8xf32> to vector<8x1xf32>
    %cst_48 = arith.constant 3.200000e+01 : f32
    %145 = vector.broadcast %cst_48 : f32 to vector<8x1xf32>
    %146 = arith.divf %144, %145 : vector<8x1xf32>
    %147 = vector.broadcast %146 : vector<8x1xf32> to vector<8x32xf32>
    %148 = arith.subf %138, %147 : vector<8x32xf32>
    %149 = arith.mulf %148, %148 : vector<8x32xf32>
    %cst_49 = arith.constant dense<0.000000e+00> : vector<8xf32>
    %150 = vector.multi_reduction <add>, %149, %cst_49 [1] : vector<8x32xf32> to vector<8xf32>
    %151 = vector.shape_cast %150 : vector<8xf32> to vector<8x1xf32>
    %cst_50 = arith.constant 3.200000e+01 : f32
    %152 = vector.broadcast %cst_50 : f32 to vector<8x1xf32>
    %153 = arith.divf %151, %152 : vector<8x1xf32>
    %154 = vector.broadcast %146 : vector<8x1xf32> to vector<8x32xf32>
    %155 = arith.subf %138, %154 : vector<8x32xf32>
    %cst_51 = arith.constant 9.99999974E-6 : f32
    %156 = vector.broadcast %cst_51 : f32 to vector<8x1xf32>
    %157 = arith.addf %153, %156 : vector<8x1xf32>
    %158 = math.rsqrt %157 : vector<8x1xf32>
    %159 = vector.broadcast %158 : vector<8x1xf32> to vector<8x32xf32>
    %160 = arith.mulf %155, %159 : vector<8x32xf32>
    %161 = vector.shape_cast %140 : vector<32xf32> to vector<1x32xf32>
    %162 = vector.broadcast %161 : vector<1x32xf32> to vector<8x32xf32>
    %163 = arith.mulf %160, %162 : vector<8x32xf32>
    %164 = vector.shape_cast %142 : vector<32xf32> to vector<1x32xf32>
    %165 = vector.broadcast %164 : vector<1x32xf32> to vector<8x32xf32>
    %166 = arith.addf %163, %165 : vector<8x32xf32>
    %167 = arith.truncf %166 : vector<8x32xf32> to vector<8x32xbf16>
    %c0_52 = arith.constant 0 : index
    %c0_53 = arith.constant 0 : index
    %168 = vector.load %arg9[%c0_52, %c0_53] : memref<32x128xbf16, #tpu.memory_space<vmem>>, vector<32x128xbf16>
    %cst_54 = arith.constant dense<0.000000e+00> : vector<8x128xf32>
    %169 = tpu.matmul %167, %168, %cst_54 {dimension_numbers = #tpu.dot_dimension_numbers<[1], [0], [0], [1], [0, 0, 1, 1], [], []>} : vector<8x32xbf16>, vector<32x128xbf16>, vector<8x128xf32> -> vector<8x128xf32>
    %c0_55 = arith.constant 0 : index
    %c0_56 = arith.constant 0 : index
    %170 = vector.load %arg10[%c0_55, %c0_56] : memref<1x128xf32, #tpu.memory_space<vmem>>, vector<1x128xf32>
    %171 = vector.shape_cast %170 : vector<1x128xf32> to vector<128xf32>
    %172 = vector.shape_cast %171 : vector<128xf32> to vector<1x128xf32>
    %173 = vector.broadcast %172 : vector<1x128xf32> to vector<8x128xf32>
    %174 = arith.addf %169, %173 : vector<8x128xf32>
    %cst_57 = arith.constant 0.000000e+00 : f32
    %175 = vector.broadcast %cst_57 : f32 to vector<8x128xf32>
    %176 = arith.maximumf %174, %175 : vector<8x128xf32>
    %177 = arith.truncf %176 : vector<8x128xf32> to vector<8x128xbf16>
    %c0_58 = arith.constant 0 : index
    %c0_59 = arith.constant 0 : index
    %178 = vector.load %arg11[%c0_58, %c0_59] : memref<128x32xbf16, #tpu.memory_space<vmem>>, vector<128x32xbf16>
    %cst_60 = arith.constant dense<0.000000e+00> : vector<8x32xf32>
    %179 = tpu.matmul %177, %178, %cst_60 {dimension_numbers = #tpu.dot_dimension_numbers<[1], [0], [0], [1], [0, 0, 1, 1], [], []>} : vector<8x128xbf16>, vector<128x32xbf16>, vector<8x32xf32> -> vector<8x32xf32>
    %c0_61 = arith.constant 0 : index
    %c0_62 = arith.constant 0 : index
    %180 = vector.load %arg12[%c0_61, %c0_62] : memref<1x32xf32, #tpu.memory_space<vmem>>, vector<1x32xf32>
    %181 = vector.shape_cast %180 : vector<1x32xf32> to vector<32xf32>
    %182 = vector.shape_cast %181 : vector<32xf32> to vector<1x32xf32>
    %183 = vector.broadcast %182 : vector<1x32xf32> to vector<8x32xf32>
    %184 = arith.addf %179, %183 : vector<8x32xf32>
    %185 = arith.addf %184, %1 : vector<8x32xf32>
    %186 = vector.shape_cast %185 : vector<8x32xf32> to vector<1x8x32xf32>
    %c0_63 = arith.constant 0 : index
    %c0_64 = arith.constant 0 : index
    %c0_65 = arith.constant 0 : index
    %187 = vector.load %arg13[%c0_63, %c0_64, %c0_65] : memref<1x8x32xf32, #tpu.memory_space<vmem>>, vector<1x8x32xf32>
    tpu.vector_store %arg13[%c0_63, %c0_64, %c0_65], %186 {strides = array<i32>} : memref<1x8x32xf32, #tpu.memory_space<vmem>>, vector<1x8x32xf32>,
    return
  }
  func.func @transform_0(%arg0: i32) -> (i32, i32, i32) {
    %c0_i32 = arith.constant 0 : i32
    %c0_i32_0 = arith.constant 0 : i32
    %c0_i32_1 = arith.constant 0 : i32
    return %arg0, %c0_i32, %c0_i32_0 : i32, i32, i32
  }
  func.func @transform_1(%arg0: i32) -> (i32, i32) {
    %c0_i32 = arith.constant 0 : i32
    %c0_i32_0 = arith.constant 0 : i32
    %c0_i32_1 = arith.constant 0 : i32
    return %c0_i32, %c0_i32_0 : i32, i32
  }
  func.func @transform_2(%arg0: i32) -> (i32, i32) {
    %c0_i32 = arith.constant 0 : i32
    %c0_i32_0 = arith.constant 0 : i32
    %c0_i32_1 = arith.constant 0 : i32
    return %c0_i32, %c0_i32_0 : i32, i32
  }
  func.func @transform_3(%arg0: i32) -> (i32, i32) {
    %c0_i32 = arith.constant 0 : i32
    %c0_i32_0 = arith.constant 0 : i32
    %c0_i32_1 = arith.constant 0 : i32
    return %c0_i32, %c0_i32_0 : i32, i32
  }
  func.func @transform_4(%arg0: i32) -> (i32, i32) {
    %c0_i32 = arith.constant 0 : i32
    %c0_i32_0 = arith.constant 0 : i32
    %c0_i32_1 = arith.constant 0 : i32
    return %c0_i32, %c0_i32_0 : i32, i32
  }
  func.func @transform_5(%arg0: i32) -> (i32, i32) {
    %c0_i32 = arith.constant 0 : i32
    %c0_i32_0 = arith.constant 0 : i32
    %c0_i32_1 = arith.constant 0 : i32
    return %c0_i32, %c0_i32_0 : i32, i32
  }
  func.func @transform_6(%arg0: i32) -> (i32, i32) {
    %c0_i32 = arith.constant 0 : i32
    %c0_i32_0 = arith.constant 0 : i32
    %c0_i32_1 = arith.constant 0 : i32
    return %c0_i32, %c0_i32_0 : i32, i32
  }
  func.func @transform_7(%arg0: i32) -> (i32, i32) {
    %c0_i32 = arith.constant 0 : i32
    %c0_i32_0 = arith.constant 0 : i32
    %c0_i32_1 = arith.constant 0 : i32
    return %c0_i32, %c0_i32_0 : i32, i32
  }
  func.func @transform_8(%arg0: i32) -> (i32, i32) {
    %c0_i32 = arith.constant 0 : i32
    %c0_i32_0 = arith.constant 0 : i32
    %c0_i32_1 = arith.constant 0 : i32
    return %c0_i32, %c0_i32_0 : i32, i32
  }
  func.func @transform_9(%arg0: i32) -> (i32, i32) {
    %c0_i32 = arith.constant 0 : i32
    %c0_i32_0 = arith.constant 0 : i32
    %c0_i32_1 = arith.constant 0 : i32
    return %c0_i32, %c0_i32_0 : i32, i32
  }
  func.func @transform_10(%arg0: i32) -> (i32, i32) {
    %c0_i32 = arith.constant 0 : i32
    %c0_i32_0 = arith.constant 0 : i32
    %c0_i32_1 = arith.constant 0 : i32
    return %c0_i32, %c0_i32_0 : i32, i32
  }
  func.func @transform_11(%arg0: i32) -> (i32, i32) {
    %c0_i32 = arith.constant 0 : i32
    %c0_i32_0 = arith.constant 0 : i32
    %c0_i32_1 = arith.constant 0 : i32
    return %c0_i32, %c0_i32_0 : i32, i32
  }
  func.func @transform_12(%arg0: i32) -> (i32, i32, i32) {
    %c0_i32 = arith.constant 0 : i32
    %c0_i32_0 = arith.constant 0 : i32
    %c0_i32_1 = arith.constant 0 : i32
    return %arg0, %c0_i32, %c0_i32_0 : i32, i32, i32
  }
}

module attributes {stable_mosaic.version = 11 : i64} {
  func.func @transformer_block_kernel(%arg0: i32, %arg1: memref<1x8x32xf32, #tpu.memory_space<vmem>>, %arg2: memref<1x32xf32, #tpu.memory_space<vmem>>, %arg3: memref<1x32xf32, #tpu.memory_space<vmem>>, %arg4: memref<32x96xbf16, #tpu.memory_space<vmem>>, %arg5: memref<32x32xbf16, #tpu.memory_space<vmem>>, %arg6: memref<1x32xf32, #tpu.memory_space<vmem>>, %arg7: memref<1x32xf32, #tpu.memory_space<vmem>>, %arg8: memref<1x32xf32, #tpu.memory_space<vmem>>, %arg9: memref<32x128xbf16, #tpu.memory_space<vmem>>, %arg10: memref<1x128xf32, #tpu.memory_space<vmem>>, %arg11: memref<128x32xbf16, #tpu.memory_space<vmem>>, %arg12: memref<1x32xf32, #tpu.memory_space<vmem>>, %arg13: memref<1x8x32xf32, #tpu.memory_space<vmem>>, %arg14: memref<8x32xf32, #tpu.memory_space<vmem>>) attributes {dimension_semantics = [#tpu.dimension_semantics<parallel>], iteration_bounds = array<i64: 2>, scalar_prefetch = 0 : i64, scratch_operands = 1 : i64, tpu.core_type = #tpu.core_type<tc>, window_params = [{transform_indices = @transform_0, window_bounds = array<i64: 1, 8, 32>}, {pipeline_mode = #tpu.pipeline_mode<synchronous>, transform_indices = @transform_1, window_bounds = array<i64: 1, 32>}, {pipeline_mode = #tpu.pipeline_mode<synchronous>, transform_indices = @transform_2, window_bounds = array<i64: 1, 32>}, {pipeline_mode = #tpu.pipeline_mode<synchronous>, transform_indices = @transform_3, window_bounds = array<i64: 32, 96>}, {pipeline_mode = #tpu.pipeline_mode<synchronous>, transform_indices = @transform_4, window_bounds = array<i64: 32, 32>}, {pipeline_mode = #tpu.pipeline_mode<synchronous>, transform_indices = @transform_5, window_bounds = array<i64: 1, 32>}, {pipeline_mode = #tpu.pipeline_mode<synchronous>, transform_indices = @transform_6, window_bounds = array<i64: 1, 32>}, {pipeline_mode = #tpu.pipeline_mode<synchronous>, transform_indices = @transform_7, window_bounds = array<i64: 1, 32>}, {pipeline_mode = #tpu.pipeline_mode<synchronous>, transform_indices = @transform_8, window_bounds = array<i64: 32, 128>}, {pipeline_mode = #tpu.pipeline_mode<synchronous>, transform_indices = @transform_9, window_bounds = array<i64: 1, 128>}, {pipeline_mode = #tpu.pipeline_mode<synchronous>, transform_indices = @transform_10, window_bounds = array<i64: 128, 32>}, {pipeline_mode = #tpu.pipeline_mode<synchronous>, transform_indices = @transform_11, window_bounds = array<i64: 1, 32>}, {transform_indices = @transform_12, window_bounds = array<i64: 1, 8, 32>}]} {
    %c0 = arith.constant 0 : index
    %c0_0 = arith.constant 0 : index
    %c0_1 = arith.constant 0 : index
    %0 = vector.load %arg1[%c0, %c0_0, %c0_1] : memref<1x8x32xf32, #tpu.memory_space<vmem>>, vector<1x8x32xf32>
    %1 = vector.shape_cast %0 : vector<1x8x32xf32> to vector<8x32xf32>
    %c0_2 = arith.constant 0 : index
    %c0_3 = arith.constant 0 : index
    %2 = vector.load %arg2[%c0_2, %c0_3] : memref<1x32xf32, #tpu.memory_space<vmem>>, vector<1x32xf32>
    %3 = vector.shape_cast %2 : vector<1x32xf32> to vector<32xf32>
    %c0_4 = arith.constant 0 : index
    %c0_5 = arith.constant 0 : index
    %4 = vector.load %arg3[%c0_4, %c0_5] : memref<1x32xf32, #tpu.memory_space<vmem>>, vector<1x32xf32>
    %5 = vector.shape_cast %4 : vector<1x32xf32> to vector<32xf32>
    %cst = arith.constant dense<0.000000e+00> : vector<8xf32>
    %6 = vector.multi_reduction <add>, %1, %cst [1] : vector<8x32xf32> to vector<8xf32>
    %7 = vector.shape_cast %6 : vector<8xf32> to vector<8x1xf32>
    %cst_6 = arith.constant 3.200000e+01 : f32
    %8 = vector.broadcast %cst_6 : f32 to vector<8x1xf32>
    %9 = arith.divf %7, %8 : vector<8x1xf32>
    %10 = vector.broadcast %9 : vector<8x1xf32> to vector<8x32xf32>
    %11 = arith.subf %1, %10 : vector<8x32xf32>
    %12 = arith.mulf %11, %11 : vector<8x32xf32>
    %cst_7 = arith.constant dense<0.000000e+00> : vector<8xf32>
    %13 = vector.multi_reduction <add>, %12, %cst_7 [1] : vector<8x32xf32> to vector<8xf32>
    %14 = vector.shape_cast %13 : vector<8xf32> to vector<8x1xf32>
    %cst_8 = arith.constant 3.200000e+01 : f32
    %15 = vector.broadcast %cst_8 : f32 to vector<8x1xf32>
    %16 = arith.divf %14, %15 : vector<8x1xf32>
    %17 = vector.broadcast %9 : vector<8x1xf32> to vector<8x32xf32>
    %18 = arith.subf %1, %17 : vector<8x32xf32>
    %cst_9 = arith.constant 9.99999974E-6 : f32
    %19 = vector.broadcast %cst_9 : f32 to vector<8x1xf32>
    %20 = arith.addf %16, %19 : vector<8x1xf32>
    %21 = math.rsqrt %20 : vector<8x1xf32>
    %22 = vector.broadcast %21 : vector<8x1xf32> to vector<8x32xf32>
    %23 = arith.mulf %18, %22 : vector<8x32xf32>
    %24 = vector.shape_cast %3 : vector<32xf32> to vector<1x32xf32>
    %25 = vector.broadcast %24 : vector<1x32xf32> to vector<8x32xf32>
    %26 = arith.mulf %23, %25 : vector<8x32xf32>
    %27 = vector.shape_cast %5 : vector<32xf32> to vector<1x32xf32>
    %28 = vector.broadcast %27 : vector<1x32xf32> to vector<8x32xf32>
    %29 = arith.addf %26, %28 : vector<8x32xf32>
    %30 = arith.truncf %29 : vector<8x32xf32> to vector<8x32xbf16>
    %c0_10 = arith.constant 0 : index
    %c0_11 = arith.constant 0 : index
    %31 = vector.load %arg4[%c0_10, %c0_11] : memref<32x96xbf16, #tpu.memory_space<vmem>>, vector<32x96xbf16>
    %cst_12 = arith.constant dense<0.000000e+00> : vector<8x96xf32>
    %32 = tpu.matmul %30, %31, %cst_12 {dimension_numbers = #tpu.dot_dimension_numbers<[1], [0], [0], [1], [0, 0, 1, 1], [], []>} : vector<8x32xbf16>, vector<32x96xbf16>, vector<8x96xf32> -> vector<8x96xf32>
    %33 = vector.shape_cast %32 : vector<8x96xf32> to vector<1x8x96xf32>
    %34 = tpu.iota {dimensions = array<i32: 0>} : vector<8x8xi32>
    %35 = tpu.iota {dimensions = array<i32: 1>} : vector<8x8xi32>
    %36 = arith.cmpi sge, %34, %35 : vector<8x8xi32>
    %cst_13 = arith.constant 0.000000e+00 : f32
    %cst_14 = arith.constant -1.000000e+30 : f32
    %37 = vector.broadcast %cst_13 : f32 to vector<8x8xf32>
    %38 = vector.broadcast %cst_14 : f32 to vector<8x8xf32>
    %39 = arith.select %36, %37, %38 : vector<8x8xi1>, vector<8x8xf32>
    %40 = vector.shape_cast %39 : vector<8x8xf32> to vector<1x8x8xf32>
    %41 = vector.extract_strided_slice %33 {offsets = [0, 0, 0], sizes = [1, 8, 8], strides = [1, 1, 1]} : vector<1x8x96xf32> to vector<1x8x8xf32>
    %42 = arith.truncf %41 : vector<1x8x8xf32> to vector<1x8x8xbf16>
    %43 = vector.extract_strided_slice %33 {offsets = [0, 0, 32], sizes = [1, 8, 8], strides = [1, 1, 1]} : vector<1x8x96xf32> to vector<1x8x8xf32>
    %44 = arith.truncf %43 : vector<1x8x8xf32> to vector<1x8x8xbf16>
    %45 = vector.extract_strided_slice %33 {offsets = [0, 0, 64], sizes = [1, 8, 8], strides = [1, 1, 1]} : vector<1x8x96xf32> to vector<1x8x8xf32>
    %46 = arith.truncf %45 : vector<1x8x8xf32> to vector<1x8x8xbf16>
    "tpu.trace_start"() <{level = 10 : i32, message = "bqd,bkd->bqk"}> : () -> ()
    %cst_15 = arith.constant dense<0.000000e+00> : vector<1x8x8xf32>
    %47 = tpu.matmul %42, %44, %cst_15 {dimension_numbers = #tpu.dot_dimension_numbers<[2], [2], [1], [1], [0, 0, 0, 1, 1, 1], [0], [0]>} : vector<1x8x8xbf16>, vector<1x8x8xbf16>, vector<1x8x8xf32> -> vector<1x8x8xf32>
    "tpu.trace_stop"() : () -> ()
    %48 = arith.addf %47, %40 : vector<1x8x8xf32>
    %cst_16 = arith.constant dense<0xFF800000> : vector<1x8xf32>
    %49 = vector.multi_reduction <maximumf>, %48, %cst_16 [2] : vector<1x8x8xf32> to vector<1x8xf32>
    %50 = vector.shape_cast %49 : vector<1x8xf32> to vector<1x8x1xf32>
    %51 = vector.broadcast %50 : vector<1x8x1xf32> to vector<1x8x8xf32>
    %52 = arith.subf %48, %51 : vector<1x8x8xf32>
    %53 = math.exp %52 : vector<1x8x8xf32>
    %cst_17 = arith.constant dense<0.000000e+00> : vector<1x8xf32>
    %54 = vector.multi_reduction <add>, %53, %cst_17 [2] : vector<1x8x8xf32> to vector<1x8xf32>
    %55 = vector.shape_cast %54 : vector<1x8xf32> to vector<1x8x1xf32>
    %56 = tpu.reciprocal %55 {approx = true} : vector<1x8x1xf32> -> vector<1x8x1xf32>
    %57 = vector.broadcast %56 : vector<1x8x1xf32> to vector<1x8x8xf32>
    %58 = arith.mulf %53, %57 : vector<1x8x8xf32>
    %59 = arith.truncf %58 : vector<1x8x8xf32> to vector<1x8x8xbf16>
    "tpu.trace_start"() <{level = 10 : i32, message = "bqk,bkd->bqd"}> : () -> ()
    %cst_18 = arith.constant dense<0.000000e+00> : vector<1x8x8xf32>
    %60 = tpu.matmul %59, %46, %cst_18 {dimension_numbers = #tpu.dot_dimension_numbers<[2], [1], [1], [2], [0, 0, 0, 1, 1, 2], [0], [0]>} : vector<1x8x8xbf16>, vector<1x8x8xbf16>, vector<1x8x8xf32> -> vector<1x8x8xf32>
    "tpu.trace_stop"() : () -> ()
    %61 = vector.shape_cast %60 : vector<1x8x8xf32> to vector<8x8xf32>
    %c0_19 = arith.constant 0 : index
    %c0_20 = arith.constant 0 : index
    %62 = vector.load %arg14[%c0_19, %c0_20] : memref<8x32xf32, #tpu.memory_space<vmem>>, vector<8x8xf32>
    tpu.vector_store %arg14[%c0_19, %c0_20], %61 {strides = array<i32>} : memref<8x32xf32, #tpu.memory_space<vmem>>, vector<8x8xf32>,
    %63 = vector.extract_strided_slice %33 {offsets = [0, 0, 8], sizes = [1, 8, 8], strides = [1, 1, 1]} : vector<1x8x96xf32> to vector<1x8x8xf32>
    %64 = arith.truncf %63 : vector<1x8x8xf32> to vector<1x8x8xbf16>
    %65 = vector.extract_strided_slice %33 {offsets = [0, 0, 40], sizes = [1, 8, 8], strides = [1, 1, 1]} : vector<1x8x96xf32> to vector<1x8x8xf32>
    %66 = arith.truncf %65 : vector<1x8x8xf32> to vector<1x8x8xbf16>
    %67 = vector.extract_strided_slice %33 {offsets = [0, 0, 72], sizes = [1, 8, 8], strides = [1, 1, 1]} : vector<1x8x96xf32> to vector<1x8x8xf32>
    %68 = arith.truncf %67 : vector<1x8x8xf32> to vector<1x8x8xbf16>
    "tpu.trace_start"() <{level = 10 : i32, message = "bqd,bkd->bqk"}> : () -> ()
    %cst_21 = arith.constant dense<0.000000e+00> : vector<1x8x8xf32>
    %69 = tpu.matmul %64, %66, %cst_21 {dimension_numbers = #tpu.dot_dimension_numbers<[2], [2], [1], [1], [0, 0, 0, 1, 1, 1], [0], [0]>} : vector<1x8x8xbf16>, vector<1x8x8xbf16>, vector<1x8x8xf32> -> vector<1x8x8xf32>
    "tpu.trace_stop"() : () -> ()
    %70 = arith.addf %69, %40 : vector<1x8x8xf32>
    %cst_22 = arith.constant dense<0xFF800000> : vector<1x8xf32>
    %71 = vector.multi_reduction <maximumf>, %70, %cst_22 [2] : vector<1x8x8xf32> to vector<1x8xf32>
    %72 = vector.shape_cast %71 : vector<1x8xf32> to vector<1x8x1xf32>
    %73 = vector.broadcast %72 : vector<1x8x1xf32> to vector<1x8x8xf32>
    %74 = arith.subf %70, %73 : vector<1x8x8xf32>
    %75 = math.exp %74 : vector<1x8x8xf32>
    %cst_23 = arith.constant dense<0.000000e+00> : vector<1x8xf32>
    %76 = vector.multi_reduction <add>, %75, %cst_23 [2] : vector<1x8x8xf32> to vector<1x8xf32>
    %77 = vector.shape_cast %76 : vector<1x8xf32> to vector<1x8x1xf32>
    %78 = tpu.reciprocal %77 {approx = true} : vector<1x8x1xf32> -> vector<1x8x1xf32>
    %79 = vector.broadcast %78 : vector<1x8x1xf32> to vector<1x8x8xf32>
    %80 = arith.mulf %75, %79 : vector<1x8x8xf32>
    %81 = arith.truncf %80 : vector<1x8x8xf32> to vector<1x8x8xbf16>
    "tpu.trace_start"() <{level = 10 : i32, message = "bqk,bkd->bqd"}> : () -> ()
    %cst_24 = arith.constant dense<0.000000e+00> : vector<1x8x8xf32>
    %82 = tpu.matmul %81, %68, %cst_24 {dimension_numbers = #tpu.dot_dimension_numbers<[2], [1], [1], [2], [0, 0, 0, 1, 1, 2], [0], [0]>} : vector<1x8x8xbf16>, vector<1x8x8xbf16>, vector<1x8x8xf32> -> vector<1x8x8xf32>
    "tpu.trace_stop"() : () -> ()
    %83 = vector.shape_cast %82 : vector<1x8x8xf32> to vector<8x8xf32>
    %c0_25 = arith.constant 0 : index
    %c8 = arith.constant 8 : index
    %84 = vector.load %arg14[%c0_25, %c8] : memref<8x32xf32, #tpu.memory_space<vmem>>, vector<8x8xf32>
    tpu.vector_store %arg14[%c0_25, %c8], %83 {strides = array<i32>} : memref<8x32xf32, #tpu.memory_space<vmem>>, vector<8x8xf32>,
    %85 = vector.extract_strided_slice %33 {offsets = [0, 0, 16], sizes = [1, 8, 8], strides = [1, 1, 1]} : vector<1x8x96xf32> to vector<1x8x8xf32>
    %86 = arith.truncf %85 : vector<1x8x8xf32> to vector<1x8x8xbf16>
    %87 = vector.extract_strided_slice %33 {offsets = [0, 0, 48], sizes = [1, 8, 8], strides = [1, 1, 1]} : vector<1x8x96xf32> to vector<1x8x8xf32>
    %88 = arith.truncf %87 : vector<1x8x8xf32> to vector<1x8x8xbf16>
    %89 = vector.extract_strided_slice %33 {offsets = [0, 0, 80], sizes = [1, 8, 8], strides = [1, 1, 1]} : vector<1x8x96xf32> to vector<1x8x8xf32>
    %90 = arith.truncf %89 : vector<1x8x8xf32> to vector<1x8x8xbf16>
    "tpu.trace_start"() <{level = 10 : i32, message = "bqd,bkd->bqk"}> : () -> ()
    %cst_26 = arith.constant dense<0.000000e+00> : vector<1x8x8xf32>
    %91 = tpu.matmul %86, %88, %cst_26 {dimension_numbers = #tpu.dot_dimension_numbers<[2], [2], [1], [1], [0, 0, 0, 1, 1, 1], [0], [0]>} : vector<1x8x8xbf16>, vector<1x8x8xbf16>, vector<1x8x8xf32> -> vector<1x8x8xf32>
    "tpu.trace_stop"() : () -> ()
    %92 = arith.addf %91, %40 : vector<1x8x8xf32>
    %cst_27 = arith.constant dense<0xFF800000> : vector<1x8xf32>
    %93 = vector.multi_reduction <maximumf>, %92, %cst_27 [2] : vector<1x8x8xf32> to vector<1x8xf32>
    %94 = vector.shape_cast %93 : vector<1x8xf32> to vector<1x8x1xf32>
    %95 = vector.broadcast %94 : vector<1x8x1xf32> to vector<1x8x8xf32>
    %96 = arith.subf %92, %95 : vector<1x8x8xf32>
    %97 = math.exp %96 : vector<1x8x8xf32>
    %cst_28 = arith.constant dense<0.000000e+00> : vector<1x8xf32>
    %98 = vector.multi_reduction <add>, %97, %cst_28 [2] : vector<1x8x8xf32> to vector<1x8xf32>
    %99 = vector.shape_cast %98 : vector<1x8xf32> to vector<1x8x1xf32>
    %100 = tpu.reciprocal %99 {approx = true} : vector<1x8x1xf32> -> vector<1x8x1xf32>
    %101 = vector.broadcast %100 : vector<1x8x1xf32> to vector<1x8x8xf32>
    %102 = arith.mulf %97, %101 : vector<1x8x8xf32>
    %103 = arith.truncf %102 : vector<1x8x8xf32> to vector<1x8x8xbf16>
    "tpu.trace_start"() <{level = 10 : i32, message = "bqk,bkd->bqd"}> : () -> ()
    %cst_29 = arith.constant dense<0.000000e+00> : vector<1x8x8xf32>
    %104 = tpu.matmul %103, %90, %cst_29 {dimension_numbers = #tpu.dot_dimension_numbers<[2], [1], [1], [2], [0, 0, 0, 1, 1, 2], [0], [0]>} : vector<1x8x8xbf16>, vector<1x8x8xbf16>, vector<1x8x8xf32> -> vector<1x8x8xf32>
    "tpu.trace_stop"() : () -> ()
    %105 = vector.shape_cast %104 : vector<1x8x8xf32> to vector<8x8xf32>
    %c0_30 = arith.constant 0 : index
    %c16 = arith.constant 16 : index
    %106 = vector.load %arg14[%c0_30, %c16] : memref<8x32xf32, #tpu.memory_space<vmem>>, vector<8x8xf32>
    tpu.vector_store %arg14[%c0_30, %c16], %105 {strides = array<i32>} : memref<8x32xf32, #tpu.memory_space<vmem>>, vector<8x8xf32>,
    %107 = vector.extract_strided_slice %33 {offsets = [0, 0, 24], sizes = [1, 8, 8], strides = [1, 1, 1]} : vector<1x8x96xf32> to vector<1x8x8xf32>
    %108 = arith.truncf %107 : vector<1x8x8xf32> to vector<1x8x8xbf16>
    %109 = vector.extract_strided_slice %33 {offsets = [0, 0, 56], sizes = [1, 8, 8], strides = [1, 1, 1]} : vector<1x8x96xf32> to vector<1x8x8xf32>
    %110 = arith.truncf %109 : vector<1x8x8xf32> to vector<1x8x8xbf16>
    %111 = vector.extract_strided_slice %33 {offsets = [0, 0, 88], sizes = [1, 8, 8], strides = [1, 1, 1]} : vector<1x8x96xf32> to vector<1x8x8xf32>
    %112 = arith.truncf %111 : vector<1x8x8xf32> to vector<1x8x8xbf16>
    "tpu.trace_start"() <{level = 10 : i32, message = "bqd,bkd->bqk"}> : () -> ()
    %cst_31 = arith.constant dense<0.000000e+00> : vector<1x8x8xf32>
    %113 = tpu.matmul %108, %110, %cst_31 {dimension_numbers = #tpu.dot_dimension_numbers<[2], [2], [1], [1], [0, 0, 0, 1, 1, 1], [0], [0]>} : vector<1x8x8xbf16>, vector<1x8x8xbf16>, vector<1x8x8xf32> -> vector<1x8x8xf32>
    "tpu.trace_stop"() : () -> ()
    %114 = arith.addf %113, %40 : vector<1x8x8xf32>
    %cst_32 = arith.constant dense<0xFF800000> : vector<1x8xf32>
    %115 = vector.multi_reduction <maximumf>, %114, %cst_32 [2] : vector<1x8x8xf32> to vector<1x8xf32>
    %116 = vector.shape_cast %115 : vector<1x8xf32> to vector<1x8x1xf32>
    %117 = vector.broadcast %116 : vector<1x8x1xf32> to vector<1x8x8xf32>
    %118 = arith.subf %114, %117 : vector<1x8x8xf32>
    %119 = math.exp %118 : vector<1x8x8xf32>
    %cst_33 = arith.constant dense<0.000000e+00> : vector<1x8xf32>
    %120 = vector.multi_reduction <add>, %119, %cst_33 [2] : vector<1x8x8xf32> to vector<1x8xf32>
    %121 = vector.shape_cast %120 : vector<1x8xf32> to vector<1x8x1xf32>
    %122 = tpu.reciprocal %121 {approx = true} : vector<1x8x1xf32> -> vector<1x8x1xf32>
    %123 = vector.broadcast %122 : vector<1x8x1xf32> to vector<1x8x8xf32>
    %124 = arith.mulf %119, %123 : vector<1x8x8xf32>
    %125 = arith.truncf %124 : vector<1x8x8xf32> to vector<1x8x8xbf16>
    "tpu.trace_start"() <{level = 10 : i32, message = "bqk,bkd->bqd"}> : () -> ()
    %cst_34 = arith.constant dense<0.000000e+00> : vector<1x8x8xf32>
    %126 = tpu.matmul %125, %112, %cst_34 {dimension_numbers = #tpu.dot_dimension_numbers<[2], [1], [1], [2], [0, 0, 0, 1, 1, 2], [0], [0]>} : vector<1x8x8xbf16>, vector<1x8x8xbf16>, vector<1x8x8xf32> -> vector<1x8x8xf32>
    "tpu.trace_stop"() : () -> ()
    %127 = vector.shape_cast %126 : vector<1x8x8xf32> to vector<8x8xf32>
    %c0_35 = arith.constant 0 : index
    %c24 = arith.constant 24 : index
    %128 = vector.load %arg14[%c0_35, %c24] : memref<8x32xf32, #tpu.memory_space<vmem>>, vector<8x8xf32>
    tpu.vector_store %arg14[%c0_35, %c24], %127 {strides = array<i32>} : memref<8x32xf32, #tpu.memory_space<vmem>>, vector<8x8xf32>,
    %c0_36 = arith.constant 0 : index
    %c0_37 = arith.constant 0 : index
    %129 = vector.load %arg14[%c0_36, %c0_37] : memref<8x32xf32, #tpu.memory_space<vmem>>, vector<8x32xf32>
    %130 = arith.truncf %129 : vector<8x32xf32> to vector<8x32xbf16>
    %c0_38 = arith.constant 0 : index
    %c0_39 = arith.constant 0 : index
    %131 = vector.load %arg5[%c0_38, %c0_39] : memref<32x32xbf16, #tpu.memory_space<vmem>>, vector<32x32xbf16>
    %cst_40 = arith.constant dense<0.000000e+00> : vector<8x32xf32>
    %132 = tpu.matmul %130, %131, %cst_40 {dimension_numbers = #tpu.dot_dimension_numbers<[1], [0], [0], [1], [0, 0, 1, 1], [], []>} : vector<8x32xbf16>, vector<32x32xbf16>, vector<8x32xf32> -> vector<8x32xf32>
    %c0_41 = arith.constant 0 : index
    %c0_42 = arith.constant 0 : index
    %133 = vector.load %arg6[%c0_41, %c0_42] : memref<1x32xf32, #tpu.memory_space<vmem>>, vector<1x32xf32>
    %134 = vector.shape_cast %133 : vector<1x32xf32> to vector<32xf32>
    %135 = vector.shape_cast %134 : vector<32xf32> to vector<1x32xf32>
    %136 = vector.broadcast %135 : vector<1x32xf32> to vector<8x32xf32>
    %137 = arith.addf %132, %136 : vector<8x32xf32>
    %138 = arith.addf %137, %1 : vector<8x32xf32>
    %c0_43 = arith.constant 0 : index
    %c0_44 = arith.constant 0 : index
    %139 = vector.load %arg7[%c0_43, %c0_44] : memref<1x32xf32, #tpu.memory_space<vmem>>, vector<1x32xf32>
    %140 = vector.shape_cast %139 : vector<1x32xf32> to vector<32xf32>
    %c0_45 = arith.constant 0 : index
    %c0_46 = arith.constant 0 : index
    %141 = vector.load %arg8[%c0_45, %c0_46] : memref<1x32xf32, #tpu.memory_space<vmem>>, vector<1x32xf32>
    %142 = vector.shape_cast %141 : vector<1x32xf32> to vector<32xf32>
    %cst_47 = arith.constant dense<0.000000e+00> : vector<8xf32>
    %143 = vector.multi_reduction <add>, %138, %cst_47 [1] : vector<8x32xf32> to vector<8xf32>
    %144 = vector.shape_cast %143 : vector<8xf32> to vector<8x1xf32>
    %cst_48 = arith.constant 3.200000e+01 : f32
    %145 = vector.broadcast %cst_48 : f32 to vector<8x1xf32>
    %146 = arith.divf %144, %145 : vector<8x1xf32>
    %147 = vector.broadcast %146 : vector<8x1xf32> to vector<8x32xf32>
    %148 = arith.subf %138, %147 : vector<8x32xf32>
    %149 = arith.mulf %148, %148 : vector<8x32xf32>
    %cst_49 = arith.constant dense<0.000000e+00> : vector<8xf32>
    %150 = vector.multi_reduction <add>, %149, %cst_49 [1] : vector<8x32xf32> to vector<8xf32>
    %151 = vector.shape_cast %150 : vector<8xf32> to vector<8x1xf32>
    %cst_50 = arith.constant 3.200000e+01 : f32
    %152 = vector.broadcast %cst_50 : f32 to vector<8x1xf32>
    %153 = arith.divf %151, %152 : vector<8x1xf32>
    %154 = vector.broadcast %146 : vector<8x1xf32> to vector<8x32xf32>
    %155 = arith.subf %138, %154 : vector<8x32xf32>
    %cst_51 = arith.constant 9.99999974E-6 : f32
    %156 = vector.broadcast %cst_51 : f32 to vector<8x1xf32>
    %157 = arith.addf %153, %156 : vector<8x1xf32>
    %158 = math.rsqrt %157 : vector<8x1xf32>
    %159 = vector.broadcast %158 : vector<8x1xf32> to vector<8x32xf32>
    %160 = arith.mulf %155, %159 : vector<8x32xf32>
    %161 = vector.shape_cast %140 : vector<32xf32> to vector<1x32xf32>
    %162 = vector.broadcast %161 : vector<1x32xf32> to vector<8x32xf32>
    %163 = arith.mulf %160, %162 : vector<8x32xf32>
    %164 = vector.shape_cast %142 : vector<32xf32> to vector<1x32xf32>
    %165 = vector.broadcast %164 : vector<1x32xf32> to vector<8x32xf32>
    %166 = arith.addf %163, %165 : vector<8x32xf32>
    %167 = arith.truncf %166 : vector<8x32xf32> to vector<8x32xbf16>
    %c0_52 = arith.constant 0 : index
    %c0_53 = arith.constant 0 : index
    %168 = vector.load %arg9[%c0_52, %c0_53] : memref<32x128xbf16, #tpu.memory_space<vmem>>, vector<32x128xbf16>
    %cst_54 = arith.constant dense<0.000000e+00> : vector<8x128xf32>
    %169 = tpu.matmul %167, %168, %cst_54 {dimension_numbers = #tpu.dot_dimension_numbers<[1], [0], [0], [1], [0, 0, 1, 1], [], []>} : vector<8x32xbf16>, vector<32x128xbf16>, vector<8x128xf32> -> vector<8x128xf32>
    %c0_55 = arith.constant 0 : index
    %c0_56 = arith.constant 0 : index
    %170 = vector.load %arg10[%c0_55, %c0_56] : memref<1x128xf32, #tpu.memory_space<vmem>>, vector<1x128xf32>
    %171 = vector.shape_cast %170 : vector<1x128xf32> to vector<128xf32>
    %172 = vector.shape_cast %171 : vector<128xf32> to vector<1x128xf32>
    %173 = vector.broadcast %172 : vector<1x128xf32> to vector<8x128xf32>
    %174 = arith.addf %169, %173 : vector<8x128xf32>
    %cst_57 = arith.constant 0.000000e+00 : f32
    %175 = vector.broadcast %cst_57 : f32 to vector<8x128xf32>
    %176 = arith.maximumf %174, %175 : vector<8x128xf32>
    %177 = arith.truncf %176 : vector<8x128xf32> to vector<8x128xbf16>
    %c0_58 = arith.constant 0 : index
    %c0_59 = arith.constant 0 : index
    %178 = vector.load %arg11[%c0_58, %c0_59] : memref<128x32xbf16, #tpu.memory_space<vmem>>, vector<128x32xbf16>
    %cst_60 = arith.constant dense<0.000000e+00> : vector<8x32xf32>
    %179 = tpu.matmul %177, %178, %cst_60 {dimension_numbers = #tpu.dot_dimension_numbers<[1], [0], [0], [1], [0, 0, 1, 1], [], []>} : vector<8x128xbf16>, vector<128x32xbf16>, vector<8x32xf32> -> vector<8x32xf32>
    %c0_61 = arith.constant 0 : index
    %c0_62 = arith.constant 0 : index
    %180 = vector.load %arg12[%c0_61, %c0_62] : memref<1x32xf32, #tpu.memory_space<vmem>>, vector<1x32xf32>
    %181 = vector.shape_cast %180 : vector<1x32xf32> to vector<32xf32>
    %182 = vector.shape_cast %181 : vector<32xf32> to vector<1x32xf32>
    %183 = vector.broadcast %182 : vector<1x32xf32> to vector<8x32xf32>
    %184 = arith.addf %179, %183 : vector<8x32xf32>
    %185 = arith.addf %184, %1 : vector<8x32xf32>
    %186 = vector.shape_cast %185 : vector<8x32xf32> to vector<1x8x32xf32>
    %c0_63 = arith.constant 0 : index
    %c0_64 = arith.constant 0 : index
    %c0_65 = arith.constant 0 : index
    %187 = vector.load %arg13[%c0_63, %c0_64, %c0_65] : memref<1x8x32xf32, #tpu.memory_space<vmem>>, vector<1x8x32xf32>
    tpu.vector_store %arg13[%c0_63, %c0_64, %c0_65], %186 {strides = array<i32>} : memref<1x8x32xf32, #tpu.memory_space<vmem>>, vector<1x8x32xf32>,
    return
  }
  func.func @transform_0(%arg0: i32) -> (i32, i32, i32) {
    %c0_i32 = arith.constant 0 : i32
    %c0_i32_0 = arith.constant 0 : i32
    %c0_i32_1 = arith.constant 0 : i32
    return %arg0, %c0_i32, %c0_i32_0 : i32, i32, i32
  }
  func.func @transform_1(%arg0: i32) -> (i32, i32) {
    %c0_i32 = arith.constant 0 : i32
    %c0_i32_0 = arith.constant 0 : i32
    %c0_i32_1 = arith.constant 0 : i32
    return %c0_i32, %c0_i32_0 : i32, i32
  }
  func.func @transform_2(%arg0: i32) -> (i32, i32) {
    %c0_i32 = arith.constant 0 : i32
    %c0_i32_0 = arith.constant 0 : i32
    %c0_i32_1 = arith.constant 0 : i32
    return %c0_i32, %c0_i32_0 : i32, i32
  }
  func.func @transform_3(%arg0: i32) -> (i32, i32) {
    %c0_i32 = arith.constant 0 : i32
    %c0_i32_0 = arith.constant 0 : i32
    %c0_i32_1 = arith.constant 0 : i32
    return %c0_i32, %c0_i32_0 : i32, i32
  }
  func.func @transform_4(%arg0: i32) -> (i32, i32) {
    %c0_i32 = arith.constant 0 : i32
    %c0_i32_0 = arith.constant 0 : i32
    %c0_i32_1 = arith.constant 0 : i32
    return %c0_i32, %c0_i32_0 : i32, i32
  }
  func.func @transform_5(%arg0: i32) -> (i32, i32) {
    %c0_i32 = arith.constant 0 : i32
    %c0_i32_0 = arith.constant 0 : i32
    %c0_i32_1 = arith.constant 0 : i32
    return %c0_i32, %c0_i32_0 : i32, i32
  }
  func.func @transform_6(%arg0: i32) -> (i32, i32) {
    %c0_i32 = arith.constant 0 : i32
    %c0_i32_0 = arith.constant 0 : i32
    %c0_i32_1 = arith.constant 0 : i32
    return %c0_i32, %c0_i32_0 : i32, i32
  }
  func.func @transform_7(%arg0: i32) -> (i32, i32) {
    %c0_i32 = arith.constant 0 : i32
    %c0_i32_0 = arith.constant 0 : i32
    %c0_i32_1 = arith.constant 0 : i32
    return %c0_i32, %c0_i32_0 : i32, i32
  }
  func.func @transform_8(%arg0: i32) -> (i32, i32) {
    %c0_i32 = arith.constant 0 : i32
    %c0_i32_0 = arith.constant 0 : i32
    %c0_i32_1 = arith.constant 0 : i32
    return %c0_i32, %c0_i32_0 : i32, i32
  }
  func.func @transform_9(%arg0: i32) -> (i32, i32) {
    %c0_i32 = arith.constant 0 : i32
    %c0_i32_0 = arith.constant 0 : i32
    %c0_i32_1 = arith.constant 0 : i32
    return %c0_i32, %c0_i32_0 : i32, i32
  }
  func.func @transform_10(%arg0: i32) -> (i32, i32) {
    %c0_i32 = arith.constant 0 : i32
    %c0_i32_0 = arith.constant 0 : i32
    %c0_i32_1 = arith.constant 0 : i32
    return %c0_i32, %c0_i32_0 : i32, i32
  }
  func.func @transform_11(%arg0: i32) -> (i32, i32) {
    %c0_i32 = arith.constant 0 : i32
    %c0_i32_0 = arith.constant 0 : i32
    %c0_i32_1 = arith.constant 0 : i32
    return %c0_i32, %c0_i32_0 : i32, i32
  }
  func.func @transform_12(%arg0: i32) -> (i32, i32, i32) {
    %c0_i32 = arith.constant 0 : i32
    %c0_i32_0 = arith.constant 0 : i32
    %c0_i32_1 = arith.constant 0 : i32
    return %arg0, %c0_i32, %c0_i32_0 : i32, i32, i32
  }
}

</mosaic_0001>

<llo_original>
// kernel: tpu_custom_call.1
$region0: #{tpu_custom_call.1}
  #allocation0 [shape = 'u32[]', space=smem, size = 0x4, offset = 0x4, fixed_abs, tag = 'smem constant byte address 0x4 - core index']
  #allocation1 [shape = 'u32[144,128]{1,0:T(1,128)}', space=vmem, size = 0x12000, scoped, tag = 'internal scratch']
  #allocation2 [shape = 'f32[8,32]{1,0:T(8,128)}', space=vmem, size = 0x1000, scoped, tag = 'scratch operand']
  %s0 = inlined_call_operand.vmem [shape: f32[2,8,32], index: 0, kind: input, shape index: {}]
  %s1 = inlined_call_operand.vmem [shape: f32[1,32], index: 1, kind: input, shape index: {}]
  %s2 = inlined_call_operand.vmem [shape: f32[1,32], index: 2, kind: input, shape index: {}]
  %s3 = inlined_call_operand.vmem [shape: bf16[32,96], index: 3, kind: input, shape index: {}]
  %s4 = inlined_call_operand.vmem [shape: bf16[32,32], index: 4, kind: input, shape index: {}]
  %s5 = inlined_call_operand.vmem [shape: f32[1,32], index: 5, kind: input, shape index: {}]
  %s6 = inlined_call_operand.vmem [shape: f32[1,32], index: 6, kind: input, shape index: {}]
  %s7 = inlined_call_operand.vmem [shape: f32[1,32], index: 7, kind: input, shape index: {}]
  %s8 = inlined_call_operand.vmem [shape: bf16[32,128], index: 8, kind: input, shape index: {}]
  %s9 = inlined_call_operand.vmem [shape: f32[1,128], index: 9, kind: input, shape index: {}]
  %s10 = inlined_call_operand.vmem [shape: bf16[128,32], index: 10, kind: input, shape index: {}]
  %s11 = inlined_call_operand.vmem [shape: f32[1,32], index: 11, kind: input, shape index: {}]
  %s12 = inlined_call_operand.hbm [shape: f32[2,8,32], index: 12, kind: output, shape index: {}]
  %s13 = sld [smem:[#allocation0]]
  $region81: #{tpu_custom_call.1} parent=0
    _
  %s15 = ssub.s32 1, %s13
  %s16 = scalar_select 0, %s15, %s13
  $region1: #{tpu_custom_call.1} parent=0
    #allocation3 [shape = 'u8[8192]{0}', space=vmem, size = 0x2000, scoped, tag = 'output window, operand 0']
    #allocation4 [shape = 's32[2]{0}', space=sflag, size = 0x8, scoped, tag = 'scoped memory for tpu_custom_call.1']
    %17 = vsyncpa [#allocation4], 0
    %s18 = scalar_lea.sflag [#allocation4], 1
    %19 = vsyncpa %s18, 0
    loop: start=0, step=1, limit=4
    $region2: #{tpu_custom_call.1} parent=1 // loop_pre_header
      _
    $region3: #{tpu_custom_call.1} parent=1 // loop_header
      %s21 = sphi 0, %s25
      %p22 = scmp.ge.s32.totalorder %s21, 4
      %s31 = sphi 0, %s33
      %s34 = sphi 0, %s31
      %s35 = sphi 0, %s34
      %s51 = sphi 0, %s35
      %s55 = sphi 0, %s55
      %s57 = sphi 0, %s55
      %s58 = sphi 0, %s57
      %s72 = sphi 0, %s58
      %s76 = sphi 0, %s76
      %s78 = sphi 0, %s76
      %s79 = sphi 0, %s78
      %s93 = sphi 0, %s79
      %s97 = sphi 0, %s97
      %s99 = sphi 0, %s97
      %s100 = sphi 0, %s99
      %s114 = sphi 0, %s100
      %s118 = sphi 0, %s118
      %s120 = sphi 0, %s118
      %s121 = sphi 0, %s120
      %s135 = sphi 0, %s121
      %s139 = sphi 0, %s139
      %s141 = sphi 0, %s139
      %s142 = sphi 0, %s141
      %s156 = sphi 0, %s142
      %s160 = sphi 0, %s160
      %s162 = sphi 0, %s160
      %s163 = sphi 0, %s162
      %s177 = sphi 0, %s163
      %s181 = sphi 0, %s181
      %s183 = sphi 0, %s181
      %s184 = sphi 0, %s183
      %s198 = sphi 0, %s184
      %s202 = sphi 0, %s202
      %s204 = sphi 0, %s202
      %s205 = sphi 0, %s204
      %s219 = sphi 0, %s205
      %s223 = sphi 0, %s223
      %s225 = sphi 0, %s223
      %s226 = sphi 0, %s225
      %s240 = sphi 0, %s226
      %s244 = sphi 0, %s244
      %s246 = sphi 0, %s244
      %s247 = sphi 0, %s246
      %s261 = sphi 0, %s247
      %s265 = sphi 0, %s265
      %s267 = sphi 0, %s265
      %s268 = sphi 0, %s267
      %s282 = sphi 0, %s268
      %s288 = sphi 0, %s290
      %s291 = sphi 0, %s288
      %s292 = sphi 0, %s291
      %s308 = sphi 0, %s292
    $region4: #{tpu_custom_call.1} parent=1 // loop_header_branch
      %24 = sbr.rel (%p22) target = $region8
    $region5: #{tpu_custom_call.1} parent=1 // loop_body
      %s26 = ssub.s32 %s21, 1
      %s27 = ssub.s32 %s21, 2
      %s28 = sadd.s32 %s21, 1
      %s29 = ssub.s32 %s21, %s28
      %p30 = scmp.eq.s32.totalorder %s29, 0
      %s32 = sadd.s32 %s31, 1
      %s33 = scalar_select %p30, %s31, %s32
      %p36 = pneg %p30
      %p37 = scmp.eq.s32.totalorder %s21, 1
      %p38 = por %p36, %p37
      %p39 = scmp.ne.s32.totalorder %s31, %s34
      %p40 = scmp.eq.s32.totalorder %s21, 0
      %p41 = por %p39, %p40
      %p42 = scmp.ne.s32.totalorder %s31, %s34
      %p43 = scmp.eq.s32.totalorder %s26, 1
      %p44 = por %p42, %p43
      %p45 = scmp.ne.s32.totalorder %s34, %s35
      %p46 = scmp.eq.s32.totalorder %s26, 0
      %p47 = por %p45, %p46
      %p48 = scmp.ne.s32.totalorder %s34, %s35
      %p49 = scmp.eq.s32.totalorder %s27, 1
      %p50 = por %p48, %p49
      %p52 = scmp.ne.s32.totalorder %s35, %s51
      %p53 = scmp.eq.s32.totalorder %s27, 0
      %p54 = por %p52, %p53
      %s56 = sadd.s32 %s55, 1
      %p59 = scmp.eq.s32.totalorder %s21, 1
      %p60 = scmp.ne.s32.totalorder %s55, %s57
      %p61 = scmp.eq.s32.totalorder %s21, 0
      %p62 = por %p60, %p61
      %p63 = scmp.ne.s32.totalorder %s55, %s57
      %p64 = scmp.eq.s32.totalorder %s26, 1
      %p65 = por %p63, %p64
      %p66 = scmp.ne.s32.totalorder %s57, %s58
      %p67 = scmp.eq.s32.totalorder %s26, 0
      %p68 = por %p66, %p67
      %p69 = scmp.ne.s32.totalorder %s57, %s58
      %p70 = scmp.eq.s32.totalorder %s27, 1
      %p71 = por %p69, %p70
      %p73 = scmp.ne.s32.totalorder %s58, %s72
      %p74 = scmp.eq.s32.totalorder %s27, 0
      %p75 = por %p73, %p74
      %s77 = sadd.s32 %s76, 1
      %p80 = scmp.eq.s32.totalorder %s21, 1
      %p81 = scmp.ne.s32.totalorder %s76, %s78
      %p82 = scmp.eq.s32.totalorder %s21, 0
      %p83 = por %p81, %p82
      %p84 = scmp.ne.s32.totalorder %s76, %s78
      %p85 = scmp.eq.s32.totalorder %s26, 1
      %p86 = por %p84, %p85
      %p87 = scmp.ne.s32.totalorder %s78, %s79
      %p88 = scmp.eq.s32.totalorder %s26, 0
      %p89 = por %p87, %p88
      %p90 = scmp.ne.s32.totalorder %s78, %s79
      %p91 = scmp.eq.s32.totalorder %s27, 1
      %p92 = por %p90, %p91
      %p94 = scmp.ne.s32.totalorder %s79, %s93
      %p95 = scmp.eq.s32.totalorder %s27, 0
      %p96 = por %p94, %p95
      %s98 = sadd.s32 %s97, 1
      %p101 = scmp.eq.s32.totalorder %s21, 1
      %p102 = scmp.ne.s32.totalorder %s97, %s99
      %p103 = scmp.eq.s32.totalorder %s21, 0
      %p104 = por %p102, %p103
      %p105 = scmp.ne.s32.totalorder %s97, %s99
      %p106 = scmp.eq.s32.totalorder %s26, 1
      %p107 = por %p105, %p106
      %p108 = scmp.ne.s32.totalorder %s99, %s100
      %p109 = scmp.eq.s32.totalorder %s26, 0
      %p110 = por %p108, %p109
      %p111 = scmp.ne.s32.totalorder %s99, %s100
      %p112 = scmp.eq.s32.totalorder %s27, 1
      %p113 = por %p111, %p112
      %p115 = scmp.ne.s32.totalorder %s100, %s114
      %p116 = scmp.eq.s32.totalorder %s27, 0
      %p117 = por %p115, %p116
      %s119 = sadd.s32 %s118, 1
      %p122 = scmp.eq.s32.totalorder %s21, 1
      %p123 = scmp.ne.s32.totalorder %s118, %s120
      %p124 = scmp.eq.s32.totalorder %s21, 0
      %p125 = por %p123, %p124
      %p126 = scmp.ne.s32.totalorder %s118, %s120
      %p127 = scmp.eq.s32.totalorder %s26, 1
      %p128 = por %p126, %p127
      %p129 = scmp.ne.s32.totalorder %s120, %s121
      %p130 = scmp.eq.s32.totalorder %s26, 0
      %p131 = por %p129, %p130
      %p132 = scmp.ne.s32.totalorder %s120, %s121
      %p133 = scmp.eq.s32.totalorder %s27, 1
      %p134 = por %p132, %p133
      %p136 = scmp.ne.s32.totalorder %s121, %s135
      %p137 = scmp.eq.s32.totalorder %s27, 0
      %p138 = por %p136, %p137
      %s140 = sadd.s32 %s139, 1
      %p143 = scmp.eq.s32.totalorder %s21, 1
      %p144 = scmp.ne.s32.totalorder %s139, %s141
      %p145 = scmp.eq.s32.totalorder %s21, 0
      %p146 = por %p144, %p145
      %p147 = scmp.ne.s32.totalorder %s139, %s141
      %p148 = scmp.eq.s32.totalorder %s26, 1
      %p149 = por %p147, %p148
      %p150 = scmp.ne.s32.totalorder %s141, %s142
      %p151 = scmp.eq.s32.totalorder %s26, 0
      %p152 = por %p150, %p151
      %p153 = scmp.ne.s32.totalorder %s141, %s142
      %p154 = scmp.eq.s32.totalorder %s27, 1
      %p155 = por %p153, %p154
      %p157 = scmp.ne.s32.totalorder %s142, %s156
      %p158 = scmp.eq.s32.totalorder %s27, 0
      %p159 = por %p157, %p158
      %s161 = sadd.s32 %s160, 1
      %p164 = scmp.eq.s32.totalorder %s21, 1
      %p165 = scmp.ne.s32.totalorder %s160, %s162
      %p166 = scmp.eq.s32.totalorder %s21, 0
      %p167 = por %p165, %p166
      %p168 = scmp.ne.s32.totalorder %s160, %s162
      %p169 = scmp.eq.s32.totalorder %s26, 1
      %p170 = por %p168, %p169
      %p171 = scmp.ne.s32.totalorder %s162, %s163
      %p172 = scmp.eq.s32.totalorder %s26, 0
      %p173 = por %p171, %p172
      %p174 = scmp.ne.s32.totalorder %s162, %s163
      %p175 = scmp.eq.s32.totalorder %s27, 1
      %p176 = por %p174, %p175
      %p178 = scmp.ne.s32.totalorder %s163, %s177
      %p179 = scmp.eq.s32.totalorder %s27, 0
      %p180 = por %p178, %p179
      %s182 = sadd.s32 %s181, 1
      %p185 = scmp.eq.s32.totalorder %s21, 1
      %p186 = scmp.ne.s32.totalorder %s181, %s183
      %p187 = scmp.eq.s32.totalorder %s21, 0
      %p188 = por %p186, %p187
      %p189 = scmp.ne.s32.totalorder %s181, %s183
      %p190 = scmp.eq.s32.totalorder %s26, 1
      %p191 = por %p189, %p190
      %p192 = scmp.ne.s32.totalorder %s183, %s184
      %p193 = scmp.eq.s32.totalorder %s26, 0
      %p194 = por %p192, %p193
      %p195 = scmp.ne.s32.totalorder %s183, %s184
      %p196 = scmp.eq.s32.totalorder %s27, 1
      %p197 = por %p195, %p196
      %p199 = scmp.ne.s32.totalorder %s184, %s198
      %p200 = scmp.eq.s32.totalorder %s27, 0
      %p201 = por %p199, %p200
      %s203 = sadd.s32 %s202, 1
      %p206 = scmp.eq.s32.totalorder %s21, 1
      %p207 = scmp.ne.s32.totalorder %s202, %s204
      %p208 = scmp.eq.s32.totalorder %s21, 0
      %p209 = por %p207, %p208
      %p210 = scmp.ne.s32.totalorder %s202, %s204
      %p211 = scmp.eq.s32.totalorder %s26, 1
      %p212 = por %p210, %p211
      %p213 = scmp.ne.s32.totalorder %s204, %s205
      %p214 = scmp.eq.s32.totalorder %s26, 0
      %p215 = por %p213, %p214
      %p216 = scmp.ne.s32.totalorder %s204, %s205
      %p217 = scmp.eq.s32.totalorder %s27, 1
      %p218 = por %p216, %p217
      %p220 = scmp.ne.s32.totalorder %s205, %s219
      %p221 = scmp.eq.s32.totalorder %s27, 0
      %p222 = por %p220, %p221
      %s224 = sadd.s32 %s223, 1
      %p227 = scmp.eq.s32.totalorder %s21, 1
      %p228 = scmp.ne.s32.totalorder %s223, %s225
      %p229 = scmp.eq.s32.totalorder %s21, 0
      %p230 = por %p228, %p229
      %p231 = scmp.ne.s32.totalorder %s223, %s225
      %p232 = scmp.eq.s32.totalorder %s26, 1
      %p233 = por %p231, %p232
      %p234 = scmp.ne.s32.totalorder %s225, %s226
      %p235 = scmp.eq.s32.totalorder %s26, 0
      %p236 = por %p234, %p235
      %p237 = scmp.ne.s32.totalorder %s225, %s226
      %p238 = scmp.eq.s32.totalorder %s27, 1
      %p239 = por %p237, %p238
      %p241 = scmp.ne.s32.totalorder %s226, %s240
      %p242 = scmp.eq.s32.totalorder %s27, 0
      %p243 = por %p241, %p242
      %s245 = sadd.s32 %s244, 1
      %p248 = scmp.eq.s32.totalorder %s21, 1
      %p249 = scmp.ne.s32.totalorder %s244, %s246
      %p250 = scmp.eq.s32.totalorder %s21, 0
      %p251 = por %p249, %p250
      %p252 = scmp.ne.s32.totalorder %s244, %s246
      %p253 = scmp.eq.s32.totalorder %s26, 1
      %p254 = por %p252, %p253
      %p255 = scmp.ne.s32.totalorder %s246, %s247
      %p256 = scmp.eq.s32.totalorder %s26, 0
      %p257 = por %p255, %p256
      %p258 = scmp.ne.s32.totalorder %s246, %s247
      %p259 = scmp.eq.s32.totalorder %s27, 1
      %p260 = por %p258, %p259
      %p262 = scmp.ne.s32.totalorder %s247, %s261
      %p263 = scmp.eq.s32.totalorder %s27, 0
      %p264 = por %p262, %p263
      %s266 = sadd.s32 %s265, 1
      %p269 = scmp.eq.s32.totalorder %s21, 1
      %p270 = scmp.ne.s32.totalorder %s265, %s267
      %p271 = scmp.eq.s32.totalorder %s21, 0
      %p272 = por %p270, %p271
      %p273 = scmp.ne.s32.totalorder %s265, %s267
      %p274 = scmp.eq.s32.totalorder %s26, 1
      %p275 = por %p273, %p274
      %p276 = scmp.ne.s32.totalorder %s267, %s268
      %p277 = scmp.eq.s32.totalorder %s26, 0
      %p278 = por %p276, %p277
      %p279 = scmp.ne.s32.totalorder %s267, %s268
      %p280 = scmp.eq.s32.totalorder %s27, 1
      %p281 = por %p279, %p280
      %p283 = scmp.ne.s32.totalorder %s268, %s282
      %p284 = scmp.eq.s32.totalorder %s27, 0
      %p285 = por %p283, %p284
      %s286 = ssub.s32 %s21, %s28
      %p287 = scmp.eq.s32.totalorder %s286, 0
      %s289 = sadd.s32 %s288, 1
      %s290 = scalar_select %p287, %s288, %s289
      %p293 = pneg %p287
      %p294 = scmp.eq.s32.totalorder %s21, 1
      %p295 = por %p293, %p294
      %p296 = scmp.ne.s32.totalorder %s288, %s291
      %p297 = scmp.eq.s32.totalorder %s21, 0
      %p298 = por %p296, %p297
      %p299 = scmp.ne.s32.totalorder %s288, %s291
      %p300 = scmp.eq.s32.totalorder %s26, 1
      %p301 = por %p299, %p300
      %p302 = scmp.ne.s32.totalorder %s291, %s292
      %p303 = scmp.eq.s32.totalorder %s26, 0
      %p304 = por %p302, %p303
      %p305 = scmp.ne.s32.totalorder %s291, %s292
      %p306 = scmp.eq.s32.totalorder %s27, 1
      %p307 = por %p305, %p306
      %p309 = scmp.ne.s32.totalorder %s292, %s308
      %p310 = scmp.eq.s32.totalorder %s27, 0
      %p311 = por %p309, %p310
      %p312 = scmp.le.s32.totalorder 1, %s21
      %p313 = scmp.lt.s32.totalorder %s21, 3
      %p314 = pnand %p312, %p313
      %p315 = pneg %p314
      // Predicated region
      $region9: #{tpu_custom_call.1} parent=5 // pred_check
        _
      $region10: #{tpu_custom_call.1} parent=5 // pred_check_branch
        %317 = sbr.rel (%p314) target = $region12
      $region11: #{tpu_custom_call.1} parent=5 // pred_region
        %s318 = ssub.s32 %s21, 1
        // Predicated region
        $region13: #{tpu_custom_call.1} parent=11 // pred_check
          %p319 = pneg %p68
        $region14: #{tpu_custom_call.1} parent=11 // pred_check_branch
          %321 = sbr.rel (%p319) target = $region16
        $region15: #{tpu_custom_call.1} parent=11 // pred_region
          _
        $region16: #{tpu_custom_call.1} parent=11 // pred_fallthru
          _
        // Predicated region
        $region17: #{tpu_custom_call.1} parent=11 // pred_check
          %p322 = pneg %p89
        $region18: #{tpu_custom_call.1} parent=11 // pred_check_branch
          %324 = sbr.rel (%p322) target = $region20
        $region19: #{tpu_custom_call.1} parent=11 // pred_region
          _
        $region20: #{tpu_custom_call.1} parent=11 // pred_fallthru
          _
        // Predicated region
        $region21: #{tpu_custom_call.1} parent=11 // pred_check
          %p325 = pneg %p110
        $region22: #{tpu_custom_call.1} parent=11 // pred_check_branch
          %327 = sbr.rel (%p325) target = $region24
        $region23: #{tpu_custom_call.1} parent=11 // pred_region
          _
        $region24: #{tpu_custom_call.1} parent=11 // pred_fallthru
          _
        // Predicated region
        $region25: #{tpu_custom_call.1} parent=11 // pred_check
          %p328 = pneg %p131
        $region26: #{tpu_custom_call.1} parent=11 // pred_check_branch
          %330 = sbr.rel (%p328) target = $region28
        $region27: #{tpu_custom_call.1} parent=11 // pred_region
          _
        $region28: #{tpu_custom_call.1} parent=11 // pred_fallthru
          _
        // Predicated region
        $region29: #{tpu_custom_call.1} parent=11 // pred_check
          %p331 = pneg %p152
        $region30: #{tpu_custom_call.1} parent=11 // pred_check_branch
          %333 = sbr.rel (%p331) target = $region32
        $region31: #{tpu_custom_call.1} parent=11 // pred_region
          _
        $region32: #{tpu_custom_call.1} parent=11 // pred_fallthru
          _
        // Predicated region
        $region33: #{tpu_custom_call.1} parent=11 // pred_check
          %p334 = pneg %p173
        $region34: #{tpu_custom_call.1} parent=11 // pred_check_branch
          %336 = sbr.rel (%p334) target = $region36
        $region35: #{tpu_custom_call.1} parent=11 // pred_region
          _
        $region36: #{tpu_custom_call.1} parent=11 // pred_fallthru
          _
        // Predicated region
        $region37: #{tpu_custom_call.1} parent=11 // pred_check
          %p337 = pneg %p194
        $region38: #{tpu_custom_call.1} parent=11 // pred_check_branch
          %339 = sbr.rel (%p337) target = $region40
        $region39: #{tpu_custom_call.1} parent=11 // pred_region
          _
        $region40: #{tpu_custom_call.1} parent=11 // pred_fallthru
          _
        // Predicated region
        $region41: #{tpu_custom_call.1} parent=11 // pred_check
          %p340 = pneg %p215
        $region42: #{tpu_custom_call.1} parent=11 // pred_check_branch
          %342 = sbr.rel (%p340) target = $region44
        $region43: #{tpu_custom_call.1} parent=11 // pred_region
          _
        $region44: #{tpu_custom_call.1} parent=11 // pred_fallthru
          _
        // Predicated region
        $region45: #{tpu_custom_call.1} parent=11 // pred_check
          %p343 = pneg %p236
        $region46: #{tpu_custom_call.1} parent=11 // pred_check_branch
          %345 = sbr.rel (%p343) target = $region48
        $region47: #{tpu_custom_call.1} parent=11 // pred_region
          _
        $region48: #{tpu_custom_call.1} parent=11 // pred_fallthru
          _
        // Predicated region
        $region49: #{tpu_custom_call.1} parent=11 // pred_check
          %p346 = pneg %p257
        $region50: #{tpu_custom_call.1} parent=11 // pred_check_branch
          %348 = sbr.rel (%p346) target = $region52
        $region51: #{tpu_custom_call.1} parent=11 // pred_region
          _
        $region52: #{tpu_custom_call.1} parent=11 // pred_fallthru
          _
        // Predicated region
        $region53: #{tpu_custom_call.1} parent=11 // pred_check
          %p349 = pneg %p278
        $region54: #{tpu_custom_call.1} parent=11 // pred_check_branch
          %351 = sbr.rel (%p349) target = $region56
        $region55: #{tpu_custom_call.1} parent=11 // pred_region
          _
        $region56: #{tpu_custom_call.1} parent=11 // pred_fallthru
          _
      $region12: #{tpu_custom_call.1} parent=5 // pred_fallthru
        _
      %p352 = scmp.lt.s32.totalorder %s21, 2
      // Predicated region
      $region57: #{tpu_custom_call.1} parent=5 // pred_check
        %p353 = pneg %p352
      $region58: #{tpu_custom_call.1} parent=5 // pred_check_branch
        %355 = sbr.rel (%p353) target = $region60
      $region59: #{tpu_custom_call.1} parent=5 // pred_region
        // Predicated region
        $region61: #{tpu_custom_call.1} parent=59 // pred_check
          %p356 = pneg %p41
        $region62: #{tpu_custom_call.1} parent=59 // pred_check_branch
          %358 = sbr.rel (%p356) target = $region64
        $region63: #{tpu_custom_call.1} parent=59 // pred_region
          %p359 = scmp.lt.s32.totalorder %s21, 1
          %s360 = scalar_select %p359, %s21, 1
          %s361 = smul.addr %s360, 8
          %s362 = scalar_lea.vmem %s0, %s361
        $region64: #{tpu_custom_call.1} parent=59 // pred_fallthru
          _
      $region60: #{tpu_custom_call.1} parent=5 // pred_fallthru
        _
      %p363 = scmp.le.s32.totalorder 1, %s21
      %p364 = scmp.lt.s32.totalorder %s21, 3
      %p365 = pnand %p363, %p364
      %p366 = pneg %p365
      // Predicated region
      $region65: #{tpu_custom_call.1} parent=5 // pred_check
        _
      $region66: #{tpu_custom_call.1} parent=5 // pred_check_branch
        %368 = sbr.rel (%p365) target = $region68
      $region67: #{tpu_custom_call.1} parent=5 // pred_region
        %s369 = ssub.s32 %s21, 1
        %p370 = scmp.lt.s32.totalorder %s26, 1
        %s371 = scalar_select %p370, %s26, 1
        %s372 = smul.addr %s371, 8
        %s373 = scalar_lea.vmem %s0, %s372
        %p374 = pneg %p47
        %p375 = pneg %p44
        %p376 = pneg %p68
        %p377 = pneg %p65
        %p378 = pneg %p89
        %p379 = pneg %p86
        %p380 = pneg %p110
        %p381 = pneg %p107
        %p382 = pneg %p131
        %p383 = pneg %p128
        %p384 = pneg %p152
        %p385 = pneg %p149
        %p386 = pneg %p173
        %p387 = pneg %p170
        %p388 = pneg %p194
        %p389 = pneg %p191
        %p390 = pneg %p215
        %p391 = pneg %p212
        %p392 = pneg %p236
        %p393 = pneg %p233
        %p394 = pneg %p257
        %p395 = pneg %p254
        %p396 = pneg %p278
        %p397 = pneg %p275
        %p398 = pneg %p304
        %p399 = pneg %p301
        %s400 = sand.u32 %s291, 1
        %s401 = scalar_lea.sflag [#allocation4], %s400
        %s402 = sand.u32 %s291, 1
        %s403 = smul.addr %s402, 8
        %s404 = scalar_lea.vmem [#allocation3], %s403
        %p405 = scmp.lt.s32.totalorder %s26, 1
        %s406 = scalar_select %p405, %s26, 1
        %s407 = smul.addr %s406, 8
        %s408 = scalar_lea.vmem %s0, %s407
        %v410 = vld [vmem:[%s408] sm:$0xff]
        %v411 = vld [vmem:[%s1] sm:$0x1]
        %v412 = vld [vmem:[%s2] sm:$0x1]
        %vm413 = vcmask 261120
        %v414 = vsel %vm413, %v410, 0.0
        %415 = vadd.xlane.f32.xlu0 %v414
        %v416 = vpop.xlane.xlu0 %415
        %v417 = vrcp.pop 32.0
        %v418 = vmul.f32 %v416, %v417
        %v419 = vsub.f32 %v410, %v418
        %v420 = vmul.f32 %v419, %v419
        %v421 = vsel %vm413, %v420, 0.0
        %422 = vadd.xlane.f32.xlu0 %v421
        %v423 = vpop.xlane.xlu0 %422
        %v424 = vmul.f32 %v423, %v417
        %v425 = vadd.f32 %v424, 1e-05
        %v426 = vrsqrt.pop %v425
        %v427 = vmul.f32 %v419, %v426
        %v429 = vlaneseq
        %v430 = vshrl.u32 %v429, 7
        %v431 = vsub.s32 0, %v430
        %v432 = vrot.slane %v411, %v431
        %v434 = vmul.f32 %v427, %v432
        %v436 = vlaneseq
        %v437 = vshrl.u32 %v436, 7
        %v438 = vsub.s32 0, %v437
        %v439 = vrot.slane %v412, %v438
        %v441 = vadd.f32 %v434, %v439
        %v442 = vpack.c.bf16 %v441, %v441
        %v443 = vld [vmem:[%s3] sm:$0xf]
        %v444 = vld [vmem:[%s3 + $0x4] sm:$0xf]
        %v445 = vld [vmem:[%s3 + $0x8] sm:$0xf]
        %v446 = vld [vmem:[%s3 + $0xc] sm:$0xf]
        %v451 = vunpack.c.l.b16 %v443
        %v452 = vunpack.c.l.b16 %v444
        %v453 = vunpack.c.l.b16 %v445
        %v454 = vunpack.c.l.b16 %v446
        %v455 = vpack.c.b16 %v452, %v451
        %v456 = vpack.c.b16 %v454, %v453
        %v460 = vsel %vm413, %v442, 0
        %462 = vmatprep.subr.bf16.mxu0 0
        %463 = vmatpush1.bf16.msra.mxu0 0
        %464 = vmatprep.subr.bf16.mxu0 0
        %465 = vmatpush1.bf16.msra.mxu0 0
        %466 = vmatprep.subr.bf16.mxu0 0
        %467 = vmatpush1.bf16.msra.mxu0 0
        %468 = vmatprep.subr.bf16.mxu0 0
        %469 = vmatpush1.bf16.msra.mxu0 0
        %470 = vmatprep.subr.bf16.mxu0 0
        %471 = vmatpush1.bf16.msra.mxu0 0
        %472 = vmatprep.subr.bf16.mxu0 0
        %473 = vmatpush1.bf16.msra.mxu0 0
        %474 = vmatprep.subr.bf16.mxu0 0
        %475 = vmatpush1.bf16.msra.mxu0 %v456
        %476 = vmatprep.subr.bf16.mxu0 0
        %477 = vmatpush1.bf16.msra.mxu0 %v455
        %478 = vmatprep.subr.bf16.mxu0 0
        %479 = vmatpush2.bf16.msra.mxu0 0
        %480 = vmatprep.subr.bf16.mxu0 0
        %481 = vmatpush2.bf16.msra.mxu0 0
        %482 = vmatprep.subr.bf16.mxu0 0
        %483 = vmatpush2.bf16.msra.mxu0 0
        %484 = vmatprep.subr.bf16.mxu0 0
        %485 = vmatpush2.bf16.msra.mxu0 0
        %486 = vmatprep.subr.bf16.mxu0 0
        %487 = vmatpush2.bf16.msra.mxu0 0
        %488 = vmatprep.subr.bf16.mxu0 0
        %489 = vmatpush2.bf16.msra.mxu0 0
        %490 = vmatprep.subr.bf16.mxu0 0
        %491 = vmatpush2.bf16.msra.mxu0 0
        %492 = vmatprep.subr.bf16.mxu0 0
        %493 = vmatpush2.bf16.msra.mxu0 0
        %494 = vmatprep.mubr.bf16.mxu0 0
        %495 = vmatmul.mubr.bf16.gmra.mxu0 %v460
        %v496 = vpop.f32.mrf.mxu0
        %v497 = vadd.f32 0.0, %v496
        %v498 = vpop.f32.mrf.mxu0
        %v499 = vpop.f32.mrf.mxu0
        %v500 = vpop.f32.mrf.mxu0
        %501 = vdwg.mxu0
        %v502 = vlaneseq
        %v503 = vshrl.u32 %v502, 7
        %v504 = vlaneseq
        %v505 = vand.u32 %v504, 127
        %vm506 = vcmp.ge.s32.totalorder %v503, %v505
        %v507 = vsel %vm506, 0.0, -1e+30
        %v508 = vpack.c.bf16 %v497, %v497
        %510 = vrot.lane.b32.xlu0 %v508, 96
        %v511 = vpop.permute.xlu0 %510
        %vm512 = vcmask 64512
        %v514 = vsel %vm512, %v508, 0
        %v517 = vsel %vm512, %v511, 0
        %519 = vmatprep.subr.bf16.mxu0 0
        %520 = vmatpush1.bf16.xpose.msra.mxu0 0
        %521 = vmatprep.subr.bf16.mxu0 0
        %522 = vmatpush1.bf16.xpose.msra.mxu0 0
        %523 = vmatprep.subr.bf16.mxu0 0
        %524 = vmatpush1.bf16.xpose.msra.mxu0 0
        %525 = vmatprep.subr.bf16.mxu0 0
        %526 = vmatpush1.bf16.xpose.msra.mxu0 0
        %527 = vmatprep.subr.bf16.mxu0 0
        %528 = vmatpush1.bf16.xpose.msra.mxu0 0
        %529 = vmatprep.subr.bf16.mxu0 0
        %530 = vmatpush1.bf16.xpose.msra.mxu0 0
        %531 = vmatprep.subr.bf16.mxu0 0
        %532 = vmatpush1.bf16.xpose.msra.mxu0 0
        %533 = vmatprep.subr.bf16.mxu0 0
        %534 = vmatpush1.bf16.xpose.msra.mxu0 %v517
        %535 = vmatprep.subr.bf16.mxu0 0
        %536 = vmatpush2.bf16.xpose.msra.mxu0 0
        %537 = vmatprep.subr.bf16.mxu0 0
        %538 = vmatpush2.bf16.xpose.msra.mxu0 0
        %539 = vmatprep.subr.bf16.mxu0 0
        %540 = vmatpush2.bf16.xpose.msra.mxu0 0
        %541 = vmatprep.subr.bf16.mxu0 0
        %542 = vmatpush2.bf16.xpose.msra.mxu0 0
        %543 = vmatprep.subr.bf16.mxu0 0
        %544 = vmatpush2.bf16.xpose.msra.mxu0 0
        %545 = vmatprep.subr.bf16.mxu0 0
        %546 = vmatpush2.bf16.xpose.msra.mxu0 0
        %547 = vmatprep.subr.bf16.mxu0 0
        %548 = vmatpush2.bf16.xpose.msra.mxu0 0
        %549 = vmatprep.subr.bf16.mxu0 0
        %550 = vmatpush2.bf16.xpose.msra.mxu0 0
        %551 = vmatprep.mubr.bf16.mxu0 0
        %552 = vmatmul.mubr.bf16.gmra.mxu0 %v514
        %v553 = vpop.f32.mrf.mxu0
        %v554 = vadd.f32 %v507, %v553
        %v555 = vpop.f32.mrf.mxu0
        %v556 = vpop.f32.mrf.mxu0
        %v557 = vpop.f32.mrf.mxu0
        %558 = vdwg.mxu0
        %v559 = vsel %vm512, %v554, -inf
        %560 = vmax.xlane.f32.xlu0 %v559
        %v561 = vpop.xlane.xlu0 %560
        %v562 = vsub.f32 %v554, %v561
        %v563 = vmul.f32 %v562, 1.442695
        %v564 = vpow.pop %v563
        %v565 = vsel %vm512, %v564, 0.0
        %566 = vadd.xlane.f32.xlu0 %v565
        %v567 = vpop.xlane.xlu0 %566
        %v568 = vrcp.pop %v567
        %v569 = vmul.f32 %v564, %v568
        %v570 = vpack.c.bf16 %v569, %v569
        %571 = vrot.lane.b32.xlu0 %v508, 64
        %v572 = vpop.permute.xlu0 %571
        %v574 = vsel %vm512, %v570, 0
        %vm576 = vcmask 1043456
        %v578 = vsel %vm576, %v572, 0
        %580 = vmatprep.subr.bf16.mxu0 0
        %581 = vmatpush1.bf16.msra.mxu0 0
        %582 = vmatprep.subr.bf16.mxu0 0
        %583 = vmatpush1.bf16.msra.mxu0 0
        %584 = vmatprep.subr.bf16.mxu0 0
        %585 = vmatpush1.bf16.msra.mxu0 0
        %586 = vmatprep.subr.bf16.mxu0 0
        %587 = vmatpush1.bf16.msra.mxu0 0
        %588 = vmatprep.subr.bf16.mxu0 0
        %589 = vmatpush1.bf16.msra.mxu0 0
        %590 = vmatprep.subr.bf16.mxu0 0
        %591 = vmatpush1.bf16.msra.mxu0 0
        %592 = vmatprep.subr.bf16.mxu0 0
        %593 = vmatpush1.bf16.msra.mxu0 0
        %594 = vmatprep.subr.bf16.mxu0 0
        %595 = vmatpush1.bf16.msra.mxu0 %v578
        %596 = vmatprep.subr.bf16.mxu0 0
        %597 = vmatpush2.bf16.msra.mxu0 0
        %598 = vmatprep.subr.bf16.mxu0 0
        %599 = vmatpush2.bf16.msra.mxu0 0
        %600 = vmatprep.subr.bf16.mxu0 0
        %601 = vmatpush2.bf16.msra.mxu0 0
        %602 = vmatprep.subr.bf16.mxu0 0
        %603 = vmatpush2.bf16.msra.mxu0 0
        %604 = vmatprep.subr.bf16.mxu0 0
        %605 = vmatpush2.bf16.msra.mxu0 0
        %606 = vmatprep.subr.bf16.mxu0 0
        %607 = vmatpush2.bf16.msra.mxu0 0
        %608 = vmatprep.subr.bf16.mxu0 0
        %609 = vmatpush2.bf16.msra.mxu0 0
        %610 = vmatprep.subr.bf16.mxu0 0
        %611 = vmatpush2.bf16.msra.mxu0 0
        %612 = vmatprep.mubr.bf16.mxu0 0
        %613 = vmatmul.mubr.bf16.gmra.mxu0 %v574
        %v614 = vpop.f32.mrf.mxu0
        %v615 = vadd.f32 0.0, %v614
        %v616 = vpop.f32.mrf.mxu0
        %v617 = vpop.f32.mrf.mxu0
        %v618 = vpop.f32.mrf.mxu0
        %619 = vdwg.mxu0
        %620 = vst.msk [vmem:[#allocation2] sm:$0xff] %vm512, %v615
        %621 = vrot.lane.b32.xlu0 %v508, 120
        %v622 = vpop.permute.xlu0 %621
        %623 = vrot.lane.b32.xlu0 %v508, 88
        %v624 = vpop.permute.xlu0 %623
        %v626 = vsel %vm512, %v622, 0
        %v629 = vsel %vm512, %v624, 0
        %631 = vmatprep.subr.bf16.mxu0 0
        %632 = vmatpush1.bf16.xpose.msra.mxu0 0
        %633 = vmatprep.subr.bf16.mxu0 0
        %634 = vmatpush1.bf16.xpose.msra.mxu0 0
        %635 = vmatprep.subr.bf16.mxu0 0
        %636 = vmatpush1.bf16.xpose.msra.mxu0 0
        %637 = vmatprep.subr.bf16.mxu0 0
        %638 = vmatpush1.bf16.xpose.msra.mxu0 0
        %639 = vmatprep.subr.bf16.mxu0 0
        %640 = vmatpush1.bf16.xpose.msra.mxu0 0
        %641 = vmatprep.subr.bf16.mxu0 0
        %642 = vmatpush1.bf16.xpose.msra.mxu0 0
        %643 = vmatprep.subr.bf16.mxu0 0
        %644 = vmatpush1.bf16.xpose.msra.mxu0 0
        %645 = vmatprep.subr.bf16.mxu0 0
        %646 = vmatpush1.bf16.xpose.msra.mxu0 %v629
        %647 = vmatprep.subr.bf16.mxu0 0
        %648 = vmatpush2.bf16.xpose.msra.mxu0 0
        %649 = vmatprep.subr.bf16.mxu0 0
        %650 = vmatpush2.bf16.xpose.msra.mxu0 0
        %651 = vmatprep.subr.bf16.mxu0 0
        %652 = vmatpush2.bf16.xpose.msra.mxu0 0
        %653 = vmatprep.subr.bf16.mxu0 0
        %654 = vmatpush2.bf16.xpose.msra.mxu0 0
        %655 = vmatprep.subr.bf16.mxu0 0
        %656 = vmatpush2.bf16.xpose.msra.mxu0 0
        %657 = vmatprep.subr.bf16.mxu0 0
        %658 = vmatpush2.bf16.xpose.msra.mxu0 0
        %659 = vmatprep.subr.bf16.mxu0 0
        %660 = vmatpush2.bf16.xpose.msra.mxu0 0
        %661 = vmatprep.subr.bf16.mxu0 0
        %662 = vmatpush2.bf16.xpose.msra.mxu0 0
        %663 = vmatprep.mubr.bf16.mxu0 0
        %664 = vmatmul.mubr.bf16.gmra.mxu0 %v626
        %v665 = vpop.f32.mrf.mxu0
        %v666 = vadd.f32 %v507, %v665
        %v667 = vpop.f32.mrf.mxu0
        %v668 = vpop.f32.mrf.mxu0
        %v669 = vpop.f32.mrf.mxu0
        %670 = vdwg.mxu0
        %v671 = vsel %vm512, %v666, -inf
        %672 = vmax.xlane.f32.xlu0 %v671
        %v673 = vpop.xlane.xlu0 %672
        %v674 = vsub.f32 %v666, %v673
        %v675 = vmul.f32 %v674, 1.442695
        %v676 = vpow.pop %v675
        %v677 = vsel %vm512, %v676, 0.0
        %678 = vadd.xlane.f32.xlu0 %v677
        %v679 = vpop.xlane.xlu0 %678
        %v680 = vrcp.pop %v679
        %v681 = vmul.f32 %v676, %v680
        %v682 = vpack.c.bf16 %v681, %v681
        %683 = vrot.lane.b32.xlu0 %v508, 56
        %v684 = vpop.permute.xlu0 %683
        %v686 = vsel %vm512, %v682, 0
        %v689 = vsel %vm576, %v684, 0
        %691 = vmatprep.subr.bf16.mxu0 0
        %692 = vmatpush1.bf16.msra.mxu0 0
        %693 = vmatprep.subr.bf16.mxu0 0
        %694 = vmatpush1.bf16.msra.mxu0 0
        %695 = vmatprep.subr.bf16.mxu0 0
        %696 = vmatpush1.bf16.msra.mxu0 0
        %697 = vmatprep.subr.bf16.mxu0 0
        %698 = vmatpush1.bf16.msra.mxu0 0
        %699 = vmatprep.subr.bf16.mxu0 0
        %700 = vmatpush1.bf16.msra.mxu0 0
        %701 = vmatprep.subr.bf16.mxu0 0
        %702 = vmatpush1.bf16.msra.mxu0 0
        %703 = vmatprep.subr.bf16.mxu0 0
        %704 = vmatpush1.bf16.msra.mxu0 0
        %705 = vmatprep.subr.bf16.mxu0 0
        %706 = vmatpush1.bf16.msra.mxu0 %v689
        %707 = vmatprep.subr.bf16.mxu0 0
        %708 = vmatpush2.bf16.msra.mxu0 0
        %709 = vmatprep.subr.bf16.mxu0 0
        %710 = vmatpush2.bf16.msra.mxu0 0
        %711 = vmatprep.subr.bf16.mxu0 0
        %712 = vmatpush2.bf16.msra.mxu0 0
        %713 = vmatprep.subr.bf16.mxu0 0
        %714 = vmatpush2.bf16.msra.mxu0 0
        %715 = vmatprep.subr.bf16.mxu0 0
        %716 = vmatpush2.bf16.msra.mxu0 0
        %717 = vmatprep.subr.bf16.mxu0 0
        %718 = vmatpush2.bf16.msra.mxu0 0
        %719 = vmatprep.subr.bf16.mxu0 0
        %720 = vmatpush2.bf16.msra.mxu0 0
        %721 = vmatprep.subr.bf16.mxu0 0
        %722 = vmatpush2.bf16.msra.mxu0 0
        %723 = vmatprep.mubr.bf16.mxu0 0
        %724 = vmatmul.mubr.bf16.gmra.mxu0 %v686
        %v725 = vpop.f32.mrf.mxu0
        %v726 = vadd.f32 0.0, %v725
        %v727 = vpop.f32.mrf.mxu0
        %v728 = vpop.f32.mrf.mxu0
        %v729 = vpop.f32.mrf.mxu0
        %730 = vdwg.mxu0
        %732 = vrot.lane.b32.xlu0 %v726, 8
        %v733 = vpop.permute.xlu0 %732
        %vm735 = vcmask 130112
        %736 = vst.msk [vmem:[#allocation2] sm:$0xff] %vm735, %v733
        %737 = vrot.lane.b32.xlu0 %v508, 112
        %v738 = vpop.permute.xlu0 %737
        %739 = vrot.lane.b32.xlu0 %v508, 80
        %v740 = vpop.permute.xlu0 %739
        %v742 = vsel %vm512, %v738, 0
        %v745 = vsel %vm512, %v740, 0
        %747 = vmatprep.subr.bf16.mxu0 0
        %748 = vmatpush1.bf16.xpose.msra.mxu0 0
        %749 = vmatprep.subr.bf16.mxu0 0
        %750 = vmatpush1.bf16.xpose.msra.mxu0 0
        %751 = vmatprep.subr.bf16.mxu0 0
        %752 = vmatpush1.bf16.xpose.msra.mxu0 0
        %753 = vmatprep.subr.bf16.mxu0 0
        %754 = vmatpush1.bf16.xpose.msra.mxu0 0
        %755 = vmatprep.subr.bf16.mxu0 0
        %756 = vmatpush1.bf16.xpose.msra.mxu0 0
        %757 = vmatprep.subr.bf16.mxu0 0
        %758 = vmatpush1.bf16.xpose.msra.mxu0 0
        %759 = vmatprep.subr.bf16.mxu0 0
        %760 = vmatpush1.bf16.xpose.msra.mxu0 0
        %761 = vmatprep.subr.bf16.mxu0 0
        %762 = vmatpush1.bf16.xpose.msra.mxu0 %v745
        %763 = vmatprep.subr.bf16.mxu0 0
        %764 = vmatpush2.bf16.xpose.msra.mxu0 0
        %765 = vmatprep.subr.bf16.mxu0 0
        %766 = vmatpush2.bf16.xpose.msra.mxu0 0
        %767 = vmatprep.subr.bf16.mxu0 0
        %768 = vmatpush2.bf16.xpose.msra.mxu0 0
        %769 = vmatprep.subr.bf16.mxu0 0
        %770 = vmatpush2.bf16.xpose.msra.mxu0 0
        %771 = vmatprep.subr.bf16.mxu0 0
        %772 = vmatpush2.bf16.xpose.msra.mxu0 0
        %773 = vmatprep.subr.bf16.mxu0 0
        %774 = vmatpush2.bf16.xpose.msra.mxu0 0
        %775 = vmatprep.subr.bf16.mxu0 0
        %776 = vmatpush2.bf16.xpose.msra.mxu0 0
        %777 = vmatprep.subr.bf16.mxu0 0
        %778 = vmatpush2.bf16.xpose.msra.mxu0 0
        %779 = vmatprep.mubr.bf16.mxu0 0
        %780 = vmatmul.mubr.bf16.gmra.mxu0 %v742
        %v781 = vpop.f32.mrf.mxu0
        %v782 = vadd.f32 %v507, %v781
        %v783 = vpop.f32.mrf.mxu0
        %v784 = vpop.f32.mrf.mxu0
        %v785 = vpop.f32.mrf.mxu0
        %786 = vdwg.mxu0
        %v787 = vsel %vm512, %v782, -inf
        %788 = vmax.xlane.f32.xlu0 %v787
        %v789 = vpop.xlane.xlu0 %788
        %v790 = vsub.f32 %v782, %v789
        %v791 = vmul.f32 %v790, 1.442695
        %v792 = vpow.pop %v791
        %v793 = vsel %vm512, %v792, 0.0
        %794 = vadd.xlane.f32.xlu0 %v793
        %v795 = vpop.xlane.xlu0 %794
        %v796 = vrcp.pop %v795
        %v797 = vmul.f32 %v792, %v796
        %v798 = vpack.c.bf16 %v797, %v797
        %799 = vrot.lane.b32.xlu0 %v508, 48
        %v800 = vpop.permute.xlu0 %799
        %v802 = vsel %vm512, %v798, 0
        %v805 = vsel %vm576, %v800, 0
        %807 = vmatprep.subr.bf16.mxu0 0
        %808 = vmatpush1.bf16.msra.mxu0 0
        %809 = vmatprep.subr.bf16.mxu0 0
        %810 = vmatpush1.bf16.msra.mxu0 0
        %811 = vmatprep.subr.bf16.mxu0 0
        %812 = vmatpush1.bf16.msra.mxu0 0
        %813 = vmatprep.subr.bf16.mxu0 0
        %814 = vmatpush1.bf16.msra.mxu0 0
        %815 = vmatprep.subr.bf16.mxu0 0
        %816 = vmatpush1.bf16.msra.mxu0 0
        %817 = vmatprep.subr.bf16.mxu0 0
        %818 = vmatpush1.bf16.msra.mxu0 0
        %819 = vmatprep.subr.bf16.mxu0 0
        %820 = vmatpush1.bf16.msra.mxu0 0
        %821 = vmatprep.subr.bf16.mxu0 0
        %822 = vmatpush1.bf16.msra.mxu0 %v805
        %823 = vmatprep.subr.bf16.mxu0 0
        %824 = vmatpush2.bf16.msra.mxu0 0
        %825 = vmatprep.subr.bf16.mxu0 0
        %826 = vmatpush2.bf16.msra.mxu0 0
        %827 = vmatprep.subr.bf16.mxu0 0
        %828 = vmatpush2.bf16.msra.mxu0 0
        %829 = vmatprep.subr.bf16.mxu0 0
        %830 = vmatpush2.bf16.msra.mxu0 0
        %831 = vmatprep.subr.bf16.mxu0 0
        %832 = vmatpush2.bf16.msra.mxu0 0
        %833 = vmatprep.subr.bf16.mxu0 0
        %834 = vmatpush2.bf16.msra.mxu0 0
        %835 = vmatprep.subr.bf16.mxu0 0
        %836 = vmatpush2.bf16.msra.mxu0 0
        %837 = vmatprep.subr.bf16.mxu0 0
        %838 = vmatpush2.bf16.msra.mxu0 0
        %839 = vmatprep.mubr.bf16.mxu0 0
        %840 = vmatmul.mubr.bf16.gmra.mxu0 %v802
        %v841 = vpop.f32.mrf.mxu0
        %v842 = vadd.f32 0.0, %v841
        %v843 = vpop.f32.mrf.mxu0
        %v844 = vpop.f32.mrf.mxu0
        %v845 = vpop.f32.mrf.mxu0
        %846 = vdwg.mxu0
        %848 = vrot.lane.b32.xlu0 %v842, 16
        %v849 = vpop.permute.xlu0 %848
        %vm851 = vcmask 195712
        %852 = vst.msk [vmem:[#allocation2] sm:$0xff] %vm851, %v849
        %853 = vrot.lane.b32.xlu0 %v508, 104
        %v854 = vpop.permute.xlu0 %853
        %855 = vrot.lane.b32.xlu0 %v508, 72
        %v856 = vpop.permute.xlu0 %855
        %v858 = vsel %vm512, %v854, 0
        %v861 = vsel %vm512, %v856, 0
        %863 = vmatprep.subr.bf16.mxu0 0
        %864 = vmatpush1.bf16.xpose.msra.mxu0 0
        %865 = vmatprep.subr.bf16.mxu0 0
        %866 = vmatpush1.bf16.xpose.msra.mxu0 0
        %867 = vmatprep.subr.bf16.mxu0 0
        %868 = vmatpush1.bf16.xpose.msra.mxu0 0
        %869 = vmatprep.subr.bf16.mxu0 0
        %870 = vmatpush1.bf16.xpose.msra.mxu0 0
        %871 = vmatprep.subr.bf16.mxu0 0
        %872 = vmatpush1.bf16.xpose.msra.mxu0 0
        %873 = vmatprep.subr.bf16.mxu0 0
        %874 = vmatpush1.bf16.xpose.msra.mxu0 0
        %875 = vmatprep.subr.bf16.mxu0 0
        %876 = vmatpush1.bf16.xpose.msra.mxu0 0
        %877 = vmatprep.subr.bf16.mxu0 0
        %878 = vmatpush1.bf16.xpose.msra.mxu0 %v861
        %879 = vmatprep.subr.bf16.mxu0 0
        %880 = vmatpush2.bf16.xpose.msra.mxu0 0
        %881 = vmatprep.subr.bf16.mxu0 0
        %882 = vmatpush2.bf16.xpose.msra.mxu0 0
        %883 = vmatprep.subr.bf16.mxu0 0
        %884 = vmatpush2.bf16.xpose.msra.mxu0 0
        %885 = vmatprep.subr.bf16.mxu0 0
        %886 = vmatpush2.bf16.xpose.msra.mxu0 0
        %887 = vmatprep.subr.bf16.mxu0 0
        %888 = vmatpush2.bf16.xpose.msra.mxu0 0
        %889 = vmatprep.subr.bf16.mxu0 0
        %890 = vmatpush2.bf16.xpose.msra.mxu0 0
        %891 = vmatprep.subr.bf16.mxu0 0
        %892 = vmatpush2.bf16.xpose.msra.mxu0 0
        %893 = vmatprep.subr.bf16.mxu0 0
        %894 = vmatpush2.bf16.xpose.msra.mxu0 0
        %895 = vmatprep.mubr.bf16.mxu0 0
        %896 = vmatmul.mubr.bf16.gmra.mxu0 %v858
        %v897 = vpop.f32.mrf.mxu0
        %v898 = vadd.f32 %v507, %v897
        %v899 = vpop.f32.mrf.mxu0
        %v900 = vpop.f32.mrf.mxu0
        %v901 = vpop.f32.mrf.mxu0
        %902 = vdwg.mxu0
        %v903 = vsel %vm512, %v898, -inf
        %904 = vmax.xlane.f32.xlu0 %v903
        %v905 = vpop.xlane.xlu0 %904
        %v906 = vsub.f32 %v898, %v905
        %v907 = vmul.f32 %v906, 1.442695
        %v908 = vpow.pop %v907
        %v909 = vsel %vm512, %v908, 0.0
        %910 = vadd.xlane.f32.xlu0 %v909
        %v911 = vpop.xlane.xlu0 %910
        %v912 = vrcp.pop %v911
        %v913 = vmul.f32 %v908, %v912
        %v914 = vpack.c.bf16 %v913, %v913
        %915 = vrot.lane.b32.xlu0 %v508, 40
        %v916 = vpop.permute.xlu0 %915
        %v918 = vsel %vm512, %v914, 0
        %v921 = vsel %vm576, %v916, 0
        %923 = vmatprep.subr.bf16.mxu0 0
        %924 = vmatpush1.bf16.msra.mxu0 0
        %925 = vmatprep.subr.bf16.mxu0 0
        %926 = vmatpush1.bf16.msra.mxu0 0
        %927 = vmatprep.subr.bf16.mxu0 0
        %928 = vmatpush1.bf16.msra.mxu0 0
        %929 = vmatprep.subr.bf16.mxu0 0
        %930 = vmatpush1.bf16.msra.mxu0 0
        %931 = vmatprep.subr.bf16.mxu0 0
        %932 = vmatpush1.bf16.msra.mxu0 0
        %933 = vmatprep.subr.bf16.mxu0 0
        %934 = vmatpush1.bf16.msra.mxu0 0
        %935 = vmatprep.subr.bf16.mxu0 0
        %936 = vmatpush1.bf16.msra.mxu0 0
        %937 = vmatprep.subr.bf16.mxu0 0
        %938 = vmatpush1.bf16.msra.mxu0 %v921
        %939 = vmatprep.subr.bf16.mxu0 0
        %940 = vmatpush2.bf16.msra.mxu0 0
        %941 = vmatprep.subr.bf16.mxu0 0
        %942 = vmatpush2.bf16.msra.mxu0 0
        %943 = vmatprep.subr.bf16.mxu0 0
        %944 = vmatpush2.bf16.msra.mxu0 0
        %945 = vmatprep.subr.bf16.mxu0 0
        %946 = vmatpush2.bf16.msra.mxu0 0
        %947 = vmatprep.subr.bf16.mxu0 0
        %948 = vmatpush2.bf16.msra.mxu0 0
        %949 = vmatprep.subr.bf16.mxu0 0
        %950 = vmatpush2.bf16.msra.mxu0 0
        %951 = vmatprep.subr.bf16.mxu0 0
        %952 = vmatpush2.bf16.msra.mxu0 0
        %953 = vmatprep.subr.bf16.mxu0 0
        %954 = vmatpush2.bf16.msra.mxu0 0
        %955 = vmatprep.mubr.bf16.mxu0 0
        %956 = vmatmul.mubr.bf16.gmra.mxu0 %v918
        %v957 = vpop.f32.mrf.mxu0
        %v958 = vadd.f32 0.0, %v957
        %v959 = vpop.f32.mrf.mxu0
        %v960 = vpop.f32.mrf.mxu0
        %v961 = vpop.f32.mrf.mxu0
        %962 = vdwg.mxu0
        %964 = vrot.lane.b32.xlu0 %v958, 24
        %v965 = vpop.permute.xlu0 %964
        %vm967 = vcmask 261312
        %968 = vst.msk [vmem:[#allocation2] sm:$0xff] %vm967, %v965
        %v969 = vld [vmem:[#allocation2] sm:$0xff]
        %v970 = vpack.c.bf16 %v969, %v969
        %v971 = vld [vmem:[%s4] sm:$0xf]
        %v972 = vld [vmem:[%s4 + $0x4] sm:$0xf]
        %v973 = vld [vmem:[%s4 + $0x8] sm:$0xf]
        %v974 = vld [vmem:[%s4 + $0xc] sm:$0xf]
        %v975 = vld [vmem:[%s5] sm:$0x1]
        %v977 = vlaneseq
        %v978 = vshrl.u32 %v977, 7
        %v979 = vsub.s32 0, %v978
        %v980 = vrot.slane %v975, %v979
        %v986 = vunpack.c.l.b16 %v971
        %v987 = vunpack.c.l.b16 %v972
        %v988 = vunpack.c.l.b16 %v973
        %v989 = vunpack.c.l.b16 %v974
        %v990 = vpack.c.b16 %v987, %v986
        %v991 = vpack.c.b16 %v989, %v988
        %v995 = vsel %vm413, %v970, 0
        %997 = vmatprep.subr.bf16.mxu0 0
        %998 = vmatpush1.bf16.msra.mxu0 0
        %999 = vmatprep.subr.bf16.mxu0 0
        %1000 = vmatpush1.bf16.msra.mxu0 0
        %1001 = vmatprep.subr.bf16.mxu0 0
        %1002 = vmatpush1.bf16.msra.mxu0 0
        %1003 = vmatprep.subr.bf16.mxu0 0
        %1004 = vmatpush1.bf16.msra.mxu0 0
        %1005 = vmatprep.subr.bf16.mxu0 0
        %1006 = vmatpush1.bf16.msra.mxu0 0
        %1007 = vmatprep.subr.bf16.mxu0 0
        %1008 = vmatpush1.bf16.msra.mxu0 0
        %1009 = vmatprep.subr.bf16.mxu0 0
        %1010 = vmatpush1.bf16.msra.mxu0 %v991
        %1011 = vmatprep.subr.bf16.mxu0 0
        %1012 = vmatpush1.bf16.msra.mxu0 %v990
        %1013 = vmatprep.subr.bf16.mxu0 0
        %1014 = vmatpush2.bf16.msra.mxu0 0
        %1015 = vmatprep.subr.bf16.mxu0 0
        %1016 = vmatpush2.bf16.msra.mxu0 0
        %1017 = vmatprep.subr.bf16.mxu0 0
        %1018 = vmatpush2.bf16.msra.mxu0 0
        %1019 = vmatprep.subr.bf16.mxu0 0
        %1020 = vmatpush2.bf16.msra.mxu0 0
        %1021 = vmatprep.subr.bf16.mxu0 0
        %1022 = vmatpush2.bf16.msra.mxu0 0
        %1023 = vmatprep.subr.bf16.mxu0 0
        %1024 = vmatpush2.bf16.msra.mxu0 0
        %1025 = vmatprep.subr.bf16.mxu0 0
        %1026 = vmatpush2.bf16.msra.mxu0 0
        %1027 = vmatprep.subr.bf16.mxu0 0
        %1028 = vmatpush2.bf16.msra.mxu0 0
        %1029 = vmatprep.mubr.bf16.mxu0 0
        %1030 = vmatmul.mubr.bf16.gmra.mxu0 %v995
        %v1031 = vpop.f32.mrf.mxu0
        %v1032 = vadd.f32 %v980, %v1031
        %v1033 = vpop.f32.mrf.mxu0
        %v1034 = vpop.f32.mrf.mxu0
        %v1035 = vpop.f32.mrf.mxu0
        %1036 = vdwg.mxu0
        %v1037 = vadd.f32 %v1032, %v410
        %v1038 = vld [vmem:[%s6] sm:$0x1]
        %v1039 = vld [vmem:[%s7] sm:$0x1]
        %v1040 = vsel %vm413, %v1037, 0.0
        %1041 = vadd.xlane.f32.xlu0 %v1040
        %v1042 = vpop.xlane.xlu0 %1041
        %v1043 = vmul.f32 %v1042, %v417
        %v1044 = vsub.f32 %v1037, %v1043
        %v1045 = vmul.f32 %v1044, %v1044
        %v1046 = vsel %vm413, %v1045, 0.0
        %1047 = vadd.xlane.f32.xlu0 %v1046
        %v1048 = vpop.xlane.xlu0 %1047
        %v1049 = vmul.f32 %v1048, %v417
        %v1050 = vadd.f32 %v1049, 1e-05
        %v1051 = vrsqrt.pop %v1050
        %v1052 = vmul.f32 %v1044, %v1051
        %v1054 = vlaneseq
        %v1055 = vshrl.u32 %v1054, 7
        %v1056 = vsub.s32 0, %v1055
        %v1057 = vrot.slane %v1038, %v1056
        %v1059 = vmul.f32 %v1052, %v1057
        %v1061 = vlaneseq
        %v1062 = vshrl.u32 %v1061, 7
        %v1063 = vsub.s32 0, %v1062
        %v1064 = vrot.slane %v1039, %v1063
        %v1066 = vadd.f32 %v1059, %v1064
        %v1067 = vpack.c.bf16 %v1066, %v1066
        %v1068 = vld [vmem:[%s8] sm:$0xf]
        %v1069 = vld [vmem:[%s8 + $0x4] sm:$0xf]
        %v1070 = vld [vmem:[%s8 + $0x8] sm:$0xf]
        %v1071 = vld [vmem:[%s8 + $0xc] sm:$0xf]
        %v1072 = vld [vmem:[%s9] sm:$0x1]
        %v1074 = vlaneseq
        %v1075 = vshrl.u32 %v1074, 7
        %v1076 = vsub.s32 0, %v1075
        %v1077 = vrot.slane %v1072, %v1076
        %v1083 = vunpack.c.l.b16 %v1068
        %v1084 = vunpack.c.l.b16 %v1069
        %v1085 = vunpack.c.l.b16 %v1070
        %v1086 = vunpack.c.l.b16 %v1071
        %v1087 = vpack.c.b16 %v1084, %v1083
        %v1088 = vpack.c.b16 %v1086, %v1085
        %v1092 = vsel %vm413, %v1067, 0
        %1094 = vmatprep.subr.bf16.mxu0 0
        %1095 = vmatpush1.bf16.msra.mxu0 0
        %1096 = vmatprep.subr.bf16.mxu0 0
        %1097 = vmatpush1.bf16.msra.mxu0 0
        %1098 = vmatprep.subr.bf16.mxu0 0
        %1099 = vmatpush1.bf16.msra.mxu0 0
        %1100 = vmatprep.subr.bf16.mxu0 0
        %1101 = vmatpush1.bf16.msra.mxu0 0
        %1102 = vmatprep.subr.bf16.mxu0 0
        %1103 = vmatpush1.bf16.msra.mxu0 0
        %1104 = vmatprep.subr.bf16.mxu0 0
        %1105 = vmatpush1.bf16.msra.mxu0 0
        %1106 = vmatprep.subr.bf16.mxu0 0
        %1107 = vmatpush1.bf16.msra.mxu0 %v1088
        %1108 = vmatprep.subr.bf16.mxu0 0
        %1109 = vmatpush1.bf16.msra.mxu0 %v1087
        %1110 = vmatprep.subr.bf16.mxu0 0
        %1111 = vmatpush2.bf16.msra.mxu0 0
        %1112 = vmatprep.subr.bf16.mxu0 0
        %1113 = vmatpush2.bf16.msra.mxu0 0
        %1114 = vmatprep.subr.bf16.mxu0 0
        %1115 = vmatpush2.bf16.msra.mxu0 0
        %1116 = vmatprep.subr.bf16.mxu0 0
        %1117 = vmatpush2.bf16.msra.mxu0 0
        %1118 = vmatprep.subr.bf16.mxu0 0
        %1119 = vmatpush2.bf16.msra.mxu0 0
        %1120 = vmatprep.subr.bf16.mxu0 0
        %1121 = vmatpush2.bf16.msra.mxu0 0
        %1122 = vmatprep.subr.bf16.mxu0 0
        %1123 = vmatpush2.bf16.msra.mxu0 0
        %1124 = vmatprep.subr.bf16.mxu0 0
        %1125 = vmatpush2.bf16.msra.mxu0 0
        %1126 = vmatprep.mubr.bf16.mxu0 0
        %1127 = vmatmul.mubr.bf16.gmra.mxu0 %v1092
        %v1128 = vpop.f32.mrf.mxu0
        %v1129 = vadd.f32 %v1077, %v1128
        %v1130 = vpop.f32.mrf.mxu0
        %v1131 = vpop.f32.mrf.mxu0
        %v1132 = vpop.f32.mrf.mxu0
        %1133 = vdwg.mxu0
        %v1134 = vmax.f32 %v1129, 0.0
        %v1135 = vpack.c.bf16 %v1134, %v1134
        %v1136 = vld [vmem:[%s10] sm:$0xf]
        %v1137 = vld [vmem:[%s10 + $0x4] sm:$0xf]
        %v1138 = vld [vmem:[%s10 + $0x8] sm:$0xf]
        %v1139 = vld [vmem:[%s10 + $0xc] sm:$0xf]
        %v1140 = vld [vmem:[%s10 + $0x10] sm:$0xf]
        %v1141 = vld [vmem:[%s10 + $0x14] sm:$0xf]
        %v1142 = vld [vmem:[%s10 + $0x18] sm:$0xf]
        %v1143 = vld [vmem:[%s10 + $0x1c] sm:$0xf]
        %v1144 = vld [vmem:[%s10 + $0x20] sm:$0xf]
        %v1145 = vld [vmem:[%s10 + $0x24] sm:$0xf]
        %v1146 = vld [vmem:[%s10 + $0x28] sm:$0xf]
        %v1147 = vld [vmem:[%s10 + $0x2c] sm:$0xf]
        %v1148 = vld [vmem:[%s10 + $0x30] sm:$0xf]
        %v1149 = vld [vmem:[%s10 + $0x34] sm:$0xf]
        %v1150 = vld [vmem:[%s10 + $0x38] sm:$0xf]
        %v1151 = vld [vmem:[%s10 + $0x3c] sm:$0xf]
        %v1152 = vld [vmem:[%s11] sm:$0x1]
        %v1154 = vlaneseq
        %v1155 = vshrl.u32 %v1154, 7
        %v1156 = vsub.s32 0, %v1155
        %v1157 = vrot.slane %v1152, %v1156
        %v1175 = vunpack.c.l.b16 %v1136
        %v1176 = vunpack.c.l.b16 %v1137
        %v1177 = vunpack.c.l.b16 %v1138
        %v1178 = vunpack.c.l.b16 %v1139
        %v1179 = vunpack.c.l.b16 %v1140
        %v1180 = vunpack.c.l.b16 %v1141
        %v1181 = vunpack.c.l.b16 %v1142
        %v1182 = vunpack.c.l.b16 %v1143
        %v1183 = vunpack.c.l.b16 %v1144
        %v1184 = vunpack.c.l.b16 %v1145
        %v1185 = vunpack.c.l.b16 %v1146
        %v1186 = vunpack.c.l.b16 %v1147
        %v1187 = vunpack.c.l.b16 %v1148
        %v1188 = vunpack.c.l.b16 %v1149
        %v1189 = vunpack.c.l.b16 %v1150
        %v1190 = vunpack.c.l.b16 %v1151
        %v1191 = vpack.c.b16 %v1176, %v1175
        %v1192 = vpack.c.b16 %v1178, %v1177
        %v1193 = vpack.c.b16 %v1180, %v1179
        %v1194 = vpack.c.b16 %v1182, %v1181
        %v1195 = vpack.c.b16 %v1184, %v1183
        %v1196 = vpack.c.b16 %v1186, %v1185
        %v1197 = vpack.c.b16 %v1188, %v1187
        %v1198 = vpack.c.b16 %v1190, %v1189
        %1207 = vmatprep.subr.bf16.mxu0 0
        %1208 = vmatpush1.bf16.msra.mxu0 %v1198
        %1209 = vmatprep.subr.bf16.mxu0 0
        %1210 = vmatpush1.bf16.msra.mxu0 %v1197
        %1211 = vmatprep.subr.bf16.mxu0 0
        %1212 = vmatpush1.bf16.msra.mxu0 %v1196
        %1213 = vmatprep.subr.bf16.mxu0 0
        %1214 = vmatpush1.bf16.msra.mxu0 %v1195
        %1215 = vmatprep.subr.bf16.mxu0 0
        %1216 = vmatpush1.bf16.msra.mxu0 %v1194
        %1217 = vmatprep.subr.bf16.mxu0 0
        %1218 = vmatpush1.bf16.msra.mxu0 %v1193
        %1219 = vmatprep.subr.bf16.mxu0 0
        %1220 = vmatpush1.bf16.msra.mxu0 %v1192
        %1221 = vmatprep.subr.bf16.mxu0 0
        %1222 = vmatpush1.bf16.msra.mxu0 %v1191
        %1223 = vmatprep.subr.bf16.mxu0 0
        %1224 = vmatpush2.bf16.msra.mxu0 0
        %1225 = vmatprep.subr.bf16.mxu0 0
        %1226 = vmatpush2.bf16.msra.mxu0 0
        %1227 = vmatprep.subr.bf16.mxu0 0
        %1228 = vmatpush2.bf16.msra.mxu0 0
        %1229 = vmatprep.subr.bf16.mxu0 0
        %1230 = vmatpush2.bf16.msra.mxu0 0
        %1231 = vmatprep.subr.bf16.mxu0 0
        %1232 = vmatpush2.bf16.msra.mxu0 0
        %1233 = vmatprep.subr.bf16.mxu0 0
        %1234 = vmatpush2.bf16.msra.mxu0 0
        %1235 = vmatprep.subr.bf16.mxu0 0
        %1236 = vmatpush2.bf16.msra.mxu0 0
        %1237 = vmatprep.subr.bf16.mxu0 0
        %1238 = vmatpush2.bf16.msra.mxu0 0
        %1239 = vmatprep.mubr.bf16.mxu0 0
        %1240 = vmatmul.mubr.bf16.gmra.mxu0 %v1135
        %v1241 = vpop.f32.mrf.mxu0
        %v1242 = vadd.f32 %v1157, %v1241
        %v1243 = vpop.f32.mrf.mxu0
        %v1244 = vpop.f32.mrf.mxu0
        %v1245 = vpop.f32.mrf.mxu0
        %1246 = vdwg.mxu0
        %v1247 = vadd.f32 %v1242, %v410
        %1248 = vst.msk [vmem:[%s404] sm:$0xff] %vm413, %v1247
        %s1249 = sand.u32 %s291, 1
        %s1250 = scalar_lea.sflag [#allocation4], %s1249
        %s1251 = sand.u32 %s291, 1
        %s1252 = smul.addr %s1251, 8
        %s1253 = scalar_lea.vmem [#allocation3], %s1252
        // Predicated region
        $region69: #{tpu_custom_call.1} parent=67 // pred_check
          %p1254 = pneg %p301
        $region70: #{tpu_custom_call.1} parent=67 // pred_check_branch
          %1256 = sbr.rel (%p1254) target = $region72
        $region71: #{tpu_custom_call.1} parent=67 // pred_region
          %s1258 = ssub.s32 128, 128
          %1259 = vsyncadd %s1250, %s1258
          %s1260 = smul.addr %s26, 128
          %s1261 = scalar_lea.hbm %s12, %s1260
          %s1263 = sshll.u32 %s1253, 4
          %s1264 = int_to_ptr.vmem [resolvable:$true] %s1263
          %1266 = dma.vmem_to_hbm [thread:$0]  %s1264, 128, %s1261, %s1250
        $region72: #{tpu_custom_call.1} parent=67 // pred_fallthru
          _
      $region68: #{tpu_custom_call.1} parent=5 // pred_fallthru
        _
      %p1267 = scmp.le.s32.totalorder 2, %s21
      // Predicated region
      $region73: #{tpu_custom_call.1} parent=5 // pred_check
        %p1268 = pneg %p1267
      $region74: #{tpu_custom_call.1} parent=5 // pred_check_branch
        %1270 = sbr.rel (%p1268) target = $region76
      $region75: #{tpu_custom_call.1} parent=5 // pred_region
        %s1271 = ssub.s32 %s21, 2
        // Predicated region
        $region77: #{tpu_custom_call.1} parent=75 // pred_check
          %p1272 = pneg %p307
        $region78: #{tpu_custom_call.1} parent=75 // pred_check_branch
          %1274 = sbr.rel (%p1272) target = $region80
        $region79: #{tpu_custom_call.1} parent=75 // pred_region
          %s1275 = sand.u32 %s292, 1
          %s1276 = scalar_lea.sflag [#allocation4], %s1275
          %s1277 = sand.u32 %s292, 1
          %s1278 = smul.addr %s1277, 8
          %s1279 = scalar_lea.vmem [#allocation3], %s1278
          %1280 = dma.done %s1276, 128
        $region80: #{tpu_custom_call.1} parent=75 // pred_fallthru
          _
      $region76: #{tpu_custom_call.1} parent=5 // pred_fallthru
        _
    $region6: #{tpu_custom_call.1} parent=1 // loop_footer
      %s25 = sadd.s32 1, %s21
    $region7: #{tpu_custom_call.1} parent=1 // loop_footer_branch
      %20 = sbr.rel target = $region3
    $region8: #{tpu_custom_call.1} parent=1 // loop_exit
      _
    %1281 = vsyncpa [#allocation4], 1
    %s1282 = scalar_lea.sflag [#allocation4], 1
    %1283 = vsyncpa %s1282, 1

// kernel: tpu_custom_call.1
$region0: #{tpu_custom_call.1}
  #allocation0 [shape = 'u32[]', space=smem, size = 0x4, offset = 0x4, fixed_abs, tag = 'smem constant byte address 0x4 - core index']
  #allocation1 [shape = 'u32[144,128]{1,0:T(1,128)}', space=vmem, size = 0x12000, scoped, tag = 'internal scratch']
  #allocation2 [shape = 'f32[8,32]{1,0:T(8,128)}', space=vmem, size = 0x1000, scoped, tag = 'scratch operand']
  %s0 = inlined_call_operand.vmem [shape: f32[2,8,32], index: 0, kind: input, shape index: {}]
  %s1 = inlined_call_operand.vmem [shape: f32[1,32], index: 1, kind: input, shape index: {}]
  %s2 = inlined_call_operand.vmem [shape: f32[1,32], index: 2, kind: input, shape index: {}]
  %s3 = inlined_call_operand.vmem [shape: bf16[32,96], index: 3, kind: input, shape index: {}]
  %s4 = inlined_call_operand.vmem [shape: bf16[32,32], index: 4, kind: input, shape index: {}]
  %s5 = inlined_call_operand.vmem [shape: f32[1,32], index: 5, kind: input, shape index: {}]
  %s6 = inlined_call_operand.vmem [shape: f32[1,32], index: 6, kind: input, shape index: {}]
  %s7 = inlined_call_operand.vmem [shape: f32[1,32], index: 7, kind: input, shape index: {}]
  %s8 = inlined_call_operand.vmem [shape: bf16[32,128], index: 8, kind: input, shape index: {}]
  %s9 = inlined_call_operand.vmem [shape: f32[1,128], index: 9, kind: input, shape index: {}]
  %s10 = inlined_call_operand.vmem [shape: bf16[128,32], index: 10, kind: input, shape index: {}]
  %s11 = inlined_call_operand.vmem [shape: f32[1,32], index: 11, kind: input, shape index: {}]
  %s12 = inlined_call_operand.hbm [shape: f32[2,8,32], index: 12, kind: output, shape index: {}]
  %s13 = sld [smem:[#allocation0]]
  $region81: #{tpu_custom_call.1} parent=0
    _
  %s15 = ssub.s32 1, %s13
  %s16 = scalar_select 0, %s15, %s13
  $region1: #{tpu_custom_call.1} parent=0
    #allocation3 [shape = 'u8[8192]{0}', space=vmem, size = 0x2000, scoped, tag = 'output window, operand 0']
    #allocation4 [shape = 's32[2]{0}', space=sflag, size = 0x8, scoped, tag = 'scoped memory for tpu_custom_call.1']
    %17 = vsyncpa [#allocation4], 0
    %s18 = scalar_lea.sflag [#allocation4], 1
    %19 = vsyncpa %s18, 0
    loop: start=0, step=1, limit=4
    $region2: #{tpu_custom_call.1} parent=1 // loop_pre_header
      _
    $region3: #{tpu_custom_call.1} parent=1 // loop_header
      %s21 = sphi 0, %s25
      %p22 = scmp.ge.s32.totalorder %s21, 4
      %s31 = sphi 0, %s33
      %s34 = sphi 0, %s31
      %s35 = sphi 0, %s34
      %s51 = sphi 0, %s35
      %s55 = sphi 0, %s55
      %s57 = sphi 0, %s55
      %s58 = sphi 0, %s57
      %s72 = sphi 0, %s58
      %s76 = sphi 0, %s76
      %s78 = sphi 0, %s76
      %s79 = sphi 0, %s78
      %s93 = sphi 0, %s79
      %s97 = sphi 0, %s97
      %s99 = sphi 0, %s97
      %s100 = sphi 0, %s99
      %s114 = sphi 0, %s100
      %s118 = sphi 0, %s118
      %s120 = sphi 0, %s118
      %s121 = sphi 0, %s120
      %s135 = sphi 0, %s121
      %s139 = sphi 0, %s139
      %s141 = sphi 0, %s139
      %s142 = sphi 0, %s141
      %s156 = sphi 0, %s142
      %s160 = sphi 0, %s160
      %s162 = sphi 0, %s160
      %s163 = sphi 0, %s162
      %s177 = sphi 0, %s163
      %s181 = sphi 0, %s181
      %s183 = sphi 0, %s181
      %s184 = sphi 0, %s183
      %s198 = sphi 0, %s184
      %s202 = sphi 0, %s202
      %s204 = sphi 0, %s202
      %s205 = sphi 0, %s204
      %s219 = sphi 0, %s205
      %s223 = sphi 0, %s223
      %s225 = sphi 0, %s223
      %s226 = sphi 0, %s225
      %s240 = sphi 0, %s226
      %s244 = sphi 0, %s244
      %s246 = sphi 0, %s244
      %s247 = sphi 0, %s246
      %s261 = sphi 0, %s247
      %s265 = sphi 0, %s265
      %s267 = sphi 0, %s265
      %s268 = sphi 0, %s267
      %s282 = sphi 0, %s268
      %s288 = sphi 0, %s290
      %s291 = sphi 0, %s288
      %s292 = sphi 0, %s291
      %s308 = sphi 0, %s292
    $region4: #{tpu_custom_call.1} parent=1 // loop_header_branch
      %24 = sbr.rel (%p22) target = $region8
    $region5: #{tpu_custom_call.1} parent=1 // loop_body
      %s26 = ssub.s32 %s21, 1
      %s27 = ssub.s32 %s21, 2
      %s28 = sadd.s32 %s21, 1
      %s29 = ssub.s32 %s21, %s28
      %p30 = scmp.eq.s32.totalorder %s29, 0
      %s32 = sadd.s32 %s31, 1
      %s33 = scalar_select %p30, %s31, %s32
      %p36 = pneg %p30
      %p37 = scmp.eq.s32.totalorder %s21, 1
      %p38 = por %p36, %p37
      %p39 = scmp.ne.s32.totalorder %s31, %s34
      %p40 = scmp.eq.s32.totalorder %s21, 0
      %p41 = por %p39, %p40
      %p42 = scmp.ne.s32.totalorder %s31, %s34
      %p43 = scmp.eq.s32.totalorder %s26, 1
      %p44 = por %p42, %p43
      %p45 = scmp.ne.s32.totalorder %s34, %s35
      %p46 = scmp.eq.s32.totalorder %s26, 0
      %p47 = por %p45, %p46
      %p48 = scmp.ne.s32.totalorder %s34, %s35
      %p49 = scmp.eq.s32.totalorder %s27, 1
      %p50 = por %p48, %p49
      %p52 = scmp.ne.s32.totalorder %s35, %s51
      %p53 = scmp.eq.s32.totalorder %s27, 0
      %p54 = por %p52, %p53
      %s56 = sadd.s32 %s55, 1
      %p59 = scmp.eq.s32.totalorder %s21, 1
      %p60 = scmp.ne.s32.totalorder %s55, %s57
      %p61 = scmp.eq.s32.totalorder %s21, 0
      %p62 = por %p60, %p61
      %p63 = scmp.ne.s32.totalorder %s55, %s57
      %p64 = scmp.eq.s32.totalorder %s26, 1
      %p65 = por %p63, %p64
      %p66 = scmp.ne.s32.totalorder %s57, %s58
      %p67 = scmp.eq.s32.totalorder %s26, 0
      %p68 = por %p66, %p67
      %p69 = scmp.ne.s32.totalorder %s57, %s58
      %p70 = scmp.eq.s32.totalorder %s27, 1
      %p71 = por %p69, %p70
      %p73 = scmp.ne.s32.totalorder %s58, %s72
      %p74 = scmp.eq.s32.totalorder %s27, 0
      %p75 = por %p73, %p74
      %s77 = sadd.s32 %s76, 1
      %p80 = scmp.eq.s32.totalorder %s21, 1
      %p81 = scmp.ne.s32.totalorder %s76, %s78
      %p82 = scmp.eq.s32.totalorder %s21, 0
      %p83 = por %p81, %p82
      %p84 = scmp.ne.s32.totalorder %s76, %s78
      %p85 = scmp.eq.s32.totalorder %s26, 1
      %p86 = por %p84, %p85
      %p87 = scmp.ne.s32.totalorder %s78, %s79
      %p88 = scmp.eq.s32.totalorder %s26, 0
      %p89 = por %p87, %p88
      %p90 = scmp.ne.s32.totalorder %s78, %s79
      %p91 = scmp.eq.s32.totalorder %s27, 1
      %p92 = por %p90, %p91
      %p94 = scmp.ne.s32.totalorder %s79, %s93
      %p95 = scmp.eq.s32.totalorder %s27, 0
      %p96 = por %p94, %p95
      %s98 = sadd.s32 %s97, 1
      %p101 = scmp.eq.s32.totalorder %s21, 1
      %p102 = scmp.ne.s32.totalorder %s97, %s99
      %p103 = scmp.eq.s32.totalorder %s21, 0
      %p104 = por %p102, %p103
      %p105 = scmp.ne.s32.totalorder %s97, %s99
      %p106 = scmp.eq.s32.totalorder %s26, 1
      %p107 = por %p105, %p106
      %p108 = scmp.ne.s32.totalorder %s99, %s100
      %p109 = scmp.eq.s32.totalorder %s26, 0
      %p110 = por %p108, %p109
      %p111 = scmp.ne.s32.totalorder %s99, %s100
      %p112 = scmp.eq.s32.totalorder %s27, 1
      %p113 = por %p111, %p112
      %p115 = scmp.ne.s32.totalorder %s100, %s114
      %p116 = scmp.eq.s32.totalorder %s27, 0
      %p117 = por %p115, %p116
      %s119 = sadd.s32 %s118, 1
      %p122 = scmp.eq.s32.totalorder %s21, 1
      %p123 = scmp.ne.s32.totalorder %s118, %s120
      %p124 = scmp.eq.s32.totalorder %s21, 0
      %p125 = por %p123, %p124
      %p126 = scmp.ne.s32.totalorder %s118, %s120
      %p127 = scmp.eq.s32.totalorder %s26, 1
      %p128 = por %p126, %p127
      %p129 = scmp.ne.s32.totalorder %s120, %s121
      %p130 = scmp.eq.s32.totalorder %s26, 0
      %p131 = por %p129, %p130
      %p132 = scmp.ne.s32.totalorder %s120, %s121
      %p133 = scmp.eq.s32.totalorder %s27, 1
      %p134 = por %p132, %p133
      %p136 = scmp.ne.s32.totalorder %s121, %s135
      %p137 = scmp.eq.s32.totalorder %s27, 0
      %p138 = por %p136, %p137
      %s140 = sadd.s32 %s139, 1
      %p143 = scmp.eq.s32.totalorder %s21, 1
      %p144 = scmp.ne.s32.totalorder %s139, %s141
      %p145 = scmp.eq.s32.totalorder %s21, 0
      %p146 = por %p144, %p145
      %p147 = scmp.ne.s32.totalorder %s139, %s141
      %p148 = scmp.eq.s32.totalorder %s26, 1
      %p149 = por %p147, %p148
      %p150 = scmp.ne.s32.totalorder %s141, %s142
      %p151 = scmp.eq.s32.totalorder %s26, 0
      %p152 = por %p150, %p151
      %p153 = scmp.ne.s32.totalorder %s141, %s142
      %p154 = scmp.eq.s32.totalorder %s27, 1
      %p155 = por %p153, %p154
      %p157 = scmp.ne.s32.totalorder %s142, %s156
      %p158 = scmp.eq.s32.totalorder %s27, 0
      %p159 = por %p157, %p158
      %s161 = sadd.s32 %s160, 1
      %p164 = scmp.eq.s32.totalorder %s21, 1
      %p165 = scmp.ne.s32.totalorder %s160, %s162
      %p166 = scmp.eq.s32.totalorder %s21, 0
      %p167 = por %p165, %p166
      %p168 = scmp.ne.s32.totalorder %s160, %s162
      %p169 = scmp.eq.s32.totalorder %s26, 1
      %p170 = por %p168, %p169
      %p171 = scmp.ne.s32.totalorder %s162, %s163
      %p172 = scmp.eq.s32.totalorder %s26, 0
      %p173 = por %p171, %p172
      %p174 = scmp.ne.s32.totalorder %s162, %s163
      %p175 = scmp.eq.s32.totalorder %s27, 1
      %p176 = por %p174, %p175
      %p178 = scmp.ne.s32.totalorder %s163, %s177
      %p179 = scmp.eq.s32.totalorder %s27, 0
      %p180 = por %p178, %p179
      %s182 = sadd.s32 %s181, 1
      %p185 = scmp.eq.s32.totalorder %s21, 1
      %p186 = scmp.ne.s32.totalorder %s181, %s183
      %p187 = scmp.eq.s32.totalorder %s21, 0
      %p188 = por %p186, %p187
      %p189 = scmp.ne.s32.totalorder %s181, %s183
      %p190 = scmp.eq.s32.totalorder %s26, 1
      %p191 = por %p189, %p190
      %p192 = scmp.ne.s32.totalorder %s183, %s184
      %p193 = scmp.eq.s32.totalorder %s26, 0
      %p194 = por %p192, %p193
      %p195 = scmp.ne.s32.totalorder %s183, %s184
      %p196 = scmp.eq.s32.totalorder %s27, 1
      %p197 = por %p195, %p196
      %p199 = scmp.ne.s32.totalorder %s184, %s198
      %p200 = scmp.eq.s32.totalorder %s27, 0
      %p201 = por %p199, %p200
      %s203 = sadd.s32 %s202, 1
      %p206 = scmp.eq.s32.totalorder %s21, 1
      %p207 = scmp.ne.s32.totalorder %s202, %s204
      %p208 = scmp.eq.s32.totalorder %s21, 0
      %p209 = por %p207, %p208
      %p210 = scmp.ne.s32.totalorder %s202, %s204
      %p211 = scmp.eq.s32.totalorder %s26, 1
      %p212 = por %p210, %p211
      %p213 = scmp.ne.s32.totalorder %s204, %s205
      %p214 = scmp.eq.s32.totalorder %s26, 0
      %p215 = por %p213, %p214
      %p216 = scmp.ne.s32.totalorder %s204, %s205
      %p217 = scmp.eq.s32.totalorder %s27, 1
      %p218 = por %p216, %p217
      %p220 = scmp.ne.s32.totalorder %s205, %s219
      %p221 = scmp.eq.s32.totalorder %s27, 0
      %p222 = por %p220, %p221
      %s224 = sadd.s32 %s223, 1
      %p227 = scmp.eq.s32.totalorder %s21, 1
      %p228 = scmp.ne.s32.totalorder %s223, %s225
      %p229 = scmp.eq.s32.totalorder %s21, 0
      %p230 = por %p228, %p229
      %p231 = scmp.ne.s32.totalorder %s223, %s225
      %p232 = scmp.eq.s32.totalorder %s26, 1
      %p233 = por %p231, %p232
      %p234 = scmp.ne.s32.totalorder %s225, %s226
      %p235 = scmp.eq.s32.totalorder %s26, 0
      %p236 = por %p234, %p235
      %p237 = scmp.ne.s32.totalorder %s225, %s226
      %p238 = scmp.eq.s32.totalorder %s27, 1
      %p239 = por %p237, %p238
      %p241 = scmp.ne.s32.totalorder %s226, %s240
      %p242 = scmp.eq.s32.totalorder %s27, 0
      %p243 = por %p241, %p242
      %s245 = sadd.s32 %s244, 1
      %p248 = scmp.eq.s32.totalorder %s21, 1
      %p249 = scmp.ne.s32.totalorder %s244, %s246
      %p250 = scmp.eq.s32.totalorder %s21, 0
      %p251 = por %p249, %p250
      %p252 = scmp.ne.s32.totalorder %s244, %s246
      %p253 = scmp.eq.s32.totalorder %s26, 1
      %p254 = por %p252, %p253
      %p255 = scmp.ne.s32.totalorder %s246, %s247
      %p256 = scmp.eq.s32.totalorder %s26, 0
      %p257 = por %p255, %p256
      %p258 = scmp.ne.s32.totalorder %s246, %s247
      %p259 = scmp.eq.s32.totalorder %s27, 1
      %p260 = por %p258, %p259
      %p262 = scmp.ne.s32.totalorder %s247, %s261
      %p263 = scmp.eq.s32.totalorder %s27, 0
      %p264 = por %p262, %p263
      %s266 = sadd.s32 %s265, 1
      %p269 = scmp.eq.s32.totalorder %s21, 1
      %p270 = scmp.ne.s32.totalorder %s265, %s267
      %p271 = scmp.eq.s32.totalorder %s21, 0
      %p272 = por %p270, %p271
      %p273 = scmp.ne.s32.totalorder %s265, %s267
      %p274 = scmp.eq.s32.totalorder %s26, 1
      %p275 = por %p273, %p274
      %p276 = scmp.ne.s32.totalorder %s267, %s268
      %p277 = scmp.eq.s32.totalorder %s26, 0
      %p278 = por %p276, %p277
      %p279 = scmp.ne.s32.totalorder %s267, %s268
      %p280 = scmp.eq.s32.totalorder %s27, 1
      %p281 = por %p279, %p280
      %p283 = scmp.ne.s32.totalorder %s268, %s282
      %p284 = scmp.eq.s32.totalorder %s27, 0
      %p285 = por %p283, %p284
      %s286 = ssub.s32 %s21, %s28
      %p287 = scmp.eq.s32.totalorder %s286, 0
      %s289 = sadd.s32 %s288, 1
      %s290 = scalar_select %p287, %s288, %s289
      %p293 = pneg %p287
      %p294 = scmp.eq.s32.totalorder %s21, 1
      %p295 = por %p293, %p294
      %p296 = scmp.ne.s32.totalorder %s288, %s291
      %p297 = scmp.eq.s32.totalorder %s21, 0
      %p298 = por %p296, %p297
      %p299 = scmp.ne.s32.totalorder %s288, %s291
      %p300 = scmp.eq.s32.totalorder %s26, 1
      %p301 = por %p299, %p300
      %p302 = scmp.ne.s32.totalorder %s291, %s292
      %p303 = scmp.eq.s32.totalorder %s26, 0
      %p304 = por %p302, %p303
      %p305 = scmp.ne.s32.totalorder %s291, %s292
      %p306 = scmp.eq.s32.totalorder %s27, 1
      %p307 = por %p305, %p306
      %p309 = scmp.ne.s32.totalorder %s292, %s308
      %p310 = scmp.eq.s32.totalorder %s27, 0
      %p311 = por %p309, %p310
      %p312 = scmp.le.s32.totalorder 1, %s21
      %p313 = scmp.lt.s32.totalorder %s21, 3
      %p314 = pnand %p312, %p313
      %p315 = pneg %p314
      // Predicated region
      $region9: #{tpu_custom_call.1} parent=5 // pred_check
        _
      $region10: #{tpu_custom_call.1} parent=5 // pred_check_branch
        %317 = sbr.rel (%p314) target = $region12
      $region11: #{tpu_custom_call.1} parent=5 // pred_region
        %s318 = ssub.s32 %s21, 1
        // Predicated region
        $region13: #{tpu_custom_call.1} parent=11 // pred_check
          %p319 = pneg %p68
        $region14: #{tpu_custom_call.1} parent=11 // pred_check_branch
          %321 = sbr.rel (%p319) target = $region16
        $region15: #{tpu_custom_call.1} parent=11 // pred_region
          _
        $region16: #{tpu_custom_call.1} parent=11 // pred_fallthru
          _
        // Predicated region
        $region17: #{tpu_custom_call.1} parent=11 // pred_check
          %p322 = pneg %p89
        $region18: #{tpu_custom_call.1} parent=11 // pred_check_branch
          %324 = sbr.rel (%p322) target = $region20
        $region19: #{tpu_custom_call.1} parent=11 // pred_region
          _
        $region20: #{tpu_custom_call.1} parent=11 // pred_fallthru
          _
        // Predicated region
        $region21: #{tpu_custom_call.1} parent=11 // pred_check
          %p325 = pneg %p110
        $region22: #{tpu_custom_call.1} parent=11 // pred_check_branch
          %327 = sbr.rel (%p325) target = $region24
        $region23: #{tpu_custom_call.1} parent=11 // pred_region
          _
        $region24: #{tpu_custom_call.1} parent=11 // pred_fallthru
          _
        // Predicated region
        $region25: #{tpu_custom_call.1} parent=11 // pred_check
          %p328 = pneg %p131
        $region26: #{tpu_custom_call.1} parent=11 // pred_check_branch
          %330 = sbr.rel (%p328) target = $region28
        $region27: #{tpu_custom_call.1} parent=11 // pred_region
          _
        $region28: #{tpu_custom_call.1} parent=11 // pred_fallthru
          _
        // Predicated region
        $region29: #{tpu_custom_call.1} parent=11 // pred_check
          %p331 = pneg %p152
        $region30: #{tpu_custom_call.1} parent=11 // pred_check_branch
          %333 = sbr.rel (%p331) target = $region32
        $region31: #{tpu_custom_call.1} parent=11 // pred_region
          _
        $region32: #{tpu_custom_call.1} parent=11 // pred_fallthru
          _
        // Predicated region
        $region33: #{tpu_custom_call.1} parent=11 // pred_check
          %p334 = pneg %p173
        $region34: #{tpu_custom_call.1} parent=11 // pred_check_branch
          %336 = sbr.rel (%p334) target = $region36
        $region35: #{tpu_custom_call.1} parent=11 // pred_region
          _
        $region36: #{tpu_custom_call.1} parent=11 // pred_fallthru
          _
        // Predicated region
        $region37: #{tpu_custom_call.1} parent=11 // pred_check
          %p337 = pneg %p194
        $region38: #{tpu_custom_call.1} parent=11 // pred_check_branch
          %339 = sbr.rel (%p337) target = $region40
        $region39: #{tpu_custom_call.1} parent=11 // pred_region
          _
        $region40: #{tpu_custom_call.1} parent=11 // pred_fallthru
          _
        // Predicated region
        $region41: #{tpu_custom_call.1} parent=11 // pred_check
          %p340 = pneg %p215
        $region42: #{tpu_custom_call.1} parent=11 // pred_check_branch
          %342 = sbr.rel (%p340) target = $region44
        $region43: #{tpu_custom_call.1} parent=11 // pred_region
          _
        $region44: #{tpu_custom_call.1} parent=11 // pred_fallthru
          _
        // Predicated region
        $region45: #{tpu_custom_call.1} parent=11 // pred_check
          %p343 = pneg %p236
        $region46: #{tpu_custom_call.1} parent=11 // pred_check_branch
          %345 = sbr.rel (%p343) target = $region48
        $region47: #{tpu_custom_call.1} parent=11 // pred_region
          _
        $region48: #{tpu_custom_call.1} parent=11 // pred_fallthru
          _
        // Predicated region
        $region49: #{tpu_custom_call.1} parent=11 // pred_check
          %p346 = pneg %p257
        $region50: #{tpu_custom_call.1} parent=11 // pred_check_branch
          %348 = sbr.rel (%p346) target = $region52
        $region51: #{tpu_custom_call.1} parent=11 // pred_region
          _
        $region52: #{tpu_custom_call.1} parent=11 // pred_fallthru
          _
        // Predicated region
        $region53: #{tpu_custom_call.1} parent=11 // pred_check
          %p349 = pneg %p278
        $region54: #{tpu_custom_call.1} parent=11 // pred_check_branch
          %351 = sbr.rel (%p349) target = $region56
        $region55: #{tpu_custom_call.1} parent=11 // pred_region
          _
        $region56: #{tpu_custom_call.1} parent=11 // pred_fallthru
          _
      $region12: #{tpu_custom_call.1} parent=5 // pred_fallthru
        _
      %p352 = scmp.lt.s32.totalorder %s21, 2
      // Predicated region
      $region57: #{tpu_custom_call.1} parent=5 // pred_check
        %p353 = pneg %p352
      $region58: #{tpu_custom_call.1} parent=5 // pred_check_branch
        %355 = sbr.rel (%p353) target = $region60
      $region59: #{tpu_custom_call.1} parent=5 // pred_region
        // Predicated region
        $region61: #{tpu_custom_call.1} parent=59 // pred_check
          %p356 = pneg %p41
        $region62: #{tpu_custom_call.1} parent=59 // pred_check_branch
          %358 = sbr.rel (%p356) target = $region64
        $region63: #{tpu_custom_call.1} parent=59 // pred_region
          %p359 = scmp.lt.s32.totalorder %s21, 1
          %s360 = scalar_select %p359, %s21, 1
          %s361 = smul.addr %s360, 8
          %s362 = scalar_lea.vmem %s0, %s361
        $region64: #{tpu_custom_call.1} parent=59 // pred_fallthru
          _
      $region60: #{tpu_custom_call.1} parent=5 // pred_fallthru
        _
      %p363 = scmp.le.s32.totalorder 1, %s21
      %p364 = scmp.lt.s32.totalorder %s21, 3
      %p365 = pnand %p363, %p364
      %p366 = pneg %p365
      // Predicated region
      $region65: #{tpu_custom_call.1} parent=5 // pred_check
        _
      $region66: #{tpu_custom_call.1} parent=5 // pred_check_branch
        %368 = sbr.rel (%p365) target = $region68
      $region67: #{tpu_custom_call.1} parent=5 // pred_region
        %s369 = ssub.s32 %s21, 1
        %p370 = scmp.lt.s32.totalorder %s26, 1
        %s371 = scalar_select %p370, %s26, 1
        %s372 = smul.addr %s371, 8
        %s373 = scalar_lea.vmem %s0, %s372
        %p374 = pneg %p47
        %p375 = pneg %p44
        %p376 = pneg %p68
        %p377 = pneg %p65
        %p378 = pneg %p89
        %p379 = pneg %p86
        %p380 = pneg %p110
        %p381 = pneg %p107
        %p382 = pneg %p131
        %p383 = pneg %p128
        %p384 = pneg %p152
        %p385 = pneg %p149
        %p386 = pneg %p173
        %p387 = pneg %p170
        %p388 = pneg %p194
        %p389 = pneg %p191
        %p390 = pneg %p215
        %p391 = pneg %p212
        %p392 = pneg %p236
        %p393 = pneg %p233
        %p394 = pneg %p257
        %p395 = pneg %p254
        %p396 = pneg %p278
        %p397 = pneg %p275
        %p398 = pneg %p304
        %p399 = pneg %p301
        %s400 = sand.u32 %s291, 1
        %s401 = scalar_lea.sflag [#allocation4], %s400
        %s402 = sand.u32 %s291, 1
        %s403 = smul.addr %s402, 8
        %s404 = scalar_lea.vmem [#allocation3], %s403
        %p405 = scmp.lt.s32.totalorder %s26, 1
        %s406 = scalar_select %p405, %s26, 1
        %s407 = smul.addr %s406, 8
        %s408 = scalar_lea.vmem %s0, %s407
        %v410 = vld [vmem:[%s408] sm:$0xff]
        %v411 = vld [vmem:[%s1] sm:$0x1]
        %v412 = vld [vmem:[%s2] sm:$0x1]
        %vm413 = vcmask 261120
        %v414 = vsel %vm413, %v410, 0.0
        %415 = vadd.xlane.f32.xlu0 %v414
        %v416 = vpop.xlane.xlu0 %415
        %v417 = vrcp.pop 32.0
        %v418 = vmul.f32 %v416, %v417
        %v419 = vsub.f32 %v410, %v418
        %v420 = vmul.f32 %v419, %v419
        %v421 = vsel %vm413, %v420, 0.0
        %422 = vadd.xlane.f32.xlu0 %v421
        %v423 = vpop.xlane.xlu0 %422
        %v424 = vmul.f32 %v423, %v417
        %v425 = vadd.f32 %v424, 1e-05
        %v426 = vrsqrt.pop %v425
        %v427 = vmul.f32 %v419, %v426
        %v429 = vlaneseq
        %v430 = vshrl.u32 %v429, 7
        %v431 = vsub.s32 0, %v430
        %v432 = vrot.slane %v411, %v431
        %v434 = vmul.f32 %v427, %v432
        %v436 = vlaneseq
        %v437 = vshrl.u32 %v436, 7
        %v438 = vsub.s32 0, %v437
        %v439 = vrot.slane %v412, %v438
        %v441 = vadd.f32 %v434, %v439
        %v442 = vpack.c.bf16 %v441, %v441
        %v443 = vld [vmem:[%s3] sm:$0xf]
        %v444 = vld [vmem:[%s3 + $0x4] sm:$0xf]
        %v445 = vld [vmem:[%s3 + $0x8] sm:$0xf]
        %v446 = vld [vmem:[%s3 + $0xc] sm:$0xf]
        %v451 = vunpack.c.l.b16 %v443
        %v452 = vunpack.c.l.b16 %v444
        %v453 = vunpack.c.l.b16 %v445
        %v454 = vunpack.c.l.b16 %v446
        %v455 = vpack.c.b16 %v452, %v451
        %v456 = vpack.c.b16 %v454, %v453
        %v460 = vsel %vm413, %v442, 0
        %462 = vmatprep.subr.bf16.mxu0 0
        %463 = vmatpush1.bf16.msra.mxu0 0
        %464 = vmatprep.subr.bf16.mxu0 0
        %465 = vmatpush1.bf16.msra.mxu0 0
        %466 = vmatprep.subr.bf16.mxu0 0
        %467 = vmatpush1.bf16.msra.mxu0 0
        %468 = vmatprep.subr.bf16.mxu0 0
        %469 = vmatpush1.bf16.msra.mxu0 0
        %470 = vmatprep.subr.bf16.mxu0 0
        %471 = vmatpush1.bf16.msra.mxu0 0
        %472 = vmatprep.subr.bf16.mxu0 0
        %473 = vmatpush1.bf16.msra.mxu0 0
        %474 = vmatprep.subr.bf16.mxu0 0
        %475 = vmatpush1.bf16.msra.mxu0 %v456
        %476 = vmatprep.subr.bf16.mxu0 0
        %477 = vmatpush1.bf16.msra.mxu0 %v455
        %478 = vmatprep.subr.bf16.mxu0 0
        %479 = vmatpush2.bf16.msra.mxu0 0
        %480 = vmatprep.subr.bf16.mxu0 0
        %481 = vmatpush2.bf16.msra.mxu0 0
        %482 = vmatprep.subr.bf16.mxu0 0
        %483 = vmatpush2.bf16.msra.mxu0 0
        %484 = vmatprep.subr.bf16.mxu0 0
        %485 = vmatpush2.bf16.msra.mxu0 0
        %486 = vmatprep.subr.bf16.mxu0 0
        %487 = vmatpush2.bf16.msra.mxu0 0
        %488 = vmatprep.subr.bf16.mxu0 0
        %489 = vmatpush2.bf16.msra.mxu0 0
        %490 = vmatprep.subr.bf16.mxu0 0
        %491 = vmatpush2.bf16.msra.mxu0 0
        %492 = vmatprep.subr.bf16.mxu0 0
        %493 = vmatpush2.bf16.msra.mxu0 0
        %494 = vmatprep.mubr.bf16.mxu0 0
        %495 = vmatmul.mubr.bf16.gmra.mxu0 %v460
        %v496 = vpop.f32.mrf.mxu0
        %v497 = vadd.f32 0.0, %v496
        %v498 = vpop.f32.mrf.mxu0
        %v499 = vpop.f32.mrf.mxu0
        %v500 = vpop.f32.mrf.mxu0
        %501 = vdwg.mxu0
        %v502 = vlaneseq
        %v503 = vshrl.u32 %v502, 7
        %v504 = vlaneseq
        %v505 = vand.u32 %v504, 127
        %vm506 = vcmp.ge.s32.totalorder %v503, %v505
        %v507 = vsel %vm506, 0.0, -1e+30
        %v508 = vpack.c.bf16 %v497, %v497
        %510 = vrot.lane.b32.xlu0 %v508, 96
        %v511 = vpop.permute.xlu0 %510
        %vm512 = vcmask 64512
        %v514 = vsel %vm512, %v508, 0
        %v517 = vsel %vm512, %v511, 0
        %519 = vmatprep.subr.bf16.mxu0 0
        %520 = vmatpush1.bf16.xpose.msra.mxu0 0
        %521 = vmatprep.subr.bf16.mxu0 0
        %522 = vmatpush1.bf16.xpose.msra.mxu0 0
        %523 = vmatprep.subr.bf16.mxu0 0
        %524 = vmatpush1.bf16.xpose.msra.mxu0 0
        %525 = vmatprep.subr.bf16.mxu0 0
        %526 = vmatpush1.bf16.xpose.msra.mxu0 0
        %527 = vmatprep.subr.bf16.mxu0 0
        %528 = vmatpush1.bf16.xpose.msra.mxu0 0
        %529 = vmatprep.subr.bf16.mxu0 0
        %530 = vmatpush1.bf16.xpose.msra.mxu0 0
        %531 = vmatprep.subr.bf16.mxu0 0
        %532 = vmatpush1.bf16.xpose.msra.mxu0 0
        %533 = vmatprep.subr.bf16.mxu0 0
        %534 = vmatpush1.bf16.xpose.msra.mxu0 %v517
        %535 = vmatprep.subr.bf16.mxu0 0
        %536 = vmatpush2.bf16.xpose.msra.mxu0 0
        %537 = vmatprep.subr.bf16.mxu0 0
        %538 = vmatpush2.bf16.xpose.msra.mxu0 0
        %539 = vmatprep.subr.bf16.mxu0 0
        %540 = vmatpush2.bf16.xpose.msra.mxu0 0
        %541 = vmatprep.subr.bf16.mxu0 0
        %542 = vmatpush2.bf16.xpose.msra.mxu0 0
        %543 = vmatprep.subr.bf16.mxu0 0
        %544 = vmatpush2.bf16.xpose.msra.mxu0 0
        %545 = vmatprep.subr.bf16.mxu0 0
        %546 = vmatpush2.bf16.xpose.msra.mxu0 0
        %547 = vmatprep.subr.bf16.mxu0 0
        %548 = vmatpush2.bf16.xpose.msra.mxu0 0
        %549 = vmatprep.subr.bf16.mxu0 0
        %550 = vmatpush2.bf16.xpose.msra.mxu0 0
        %551 = vmatprep.mubr.bf16.mxu0 0
        %552 = vmatmul.mubr.bf16.gmra.mxu0 %v514
        %v553 = vpop.f32.mrf.mxu0
        %v554 = vadd.f32 %v507, %v553
        %v555 = vpop.f32.mrf.mxu0
        %v556 = vpop.f32.mrf.mxu0
        %v557 = vpop.f32.mrf.mxu0
        %558 = vdwg.mxu0
        %v559 = vsel %vm512, %v554, -inf
        %560 = vmax.xlane.f32.xlu0 %v559
        %v561 = vpop.xlane.xlu0 %560
        %v562 = vsub.f32 %v554, %v561
        %v563 = vmul.f32 %v562, 1.442695
        %v564 = vpow.pop %v563
        %v565 = vsel %vm512, %v564, 0.0
        %566 = vadd.xlane.f32.xlu0 %v565
        %v567 = vpop.xlane.xlu0 %566
        %v568 = vrcp.pop %v567
        %v569 = vmul.f32 %v564, %v568
        %v570 = vpack.c.bf16 %v569, %v569
        %571 = vrot.lane.b32.xlu0 %v508, 64
        %v572 = vpop.permute.xlu0 %571
        %v574 = vsel %vm512, %v570, 0
        %vm576 = vcmask 1043456
        %v578 = vsel %vm576, %v572, 0
        %580 = vmatprep.subr.bf16.mxu0 0
        %581 = vmatpush1.bf16.msra.mxu0 0
        %582 = vmatprep.subr.bf16.mxu0 0
        %583 = vmatpush1.bf16.msra.mxu0 0
        %584 = vmatprep.subr.bf16.mxu0 0
        %585 = vmatpush1.bf16.msra.mxu0 0
        %586 = vmatprep.subr.bf16.mxu0 0
        %587 = vmatpush1.bf16.msra.mxu0 0
        %588 = vmatprep.subr.bf16.mxu0 0
        %589 = vmatpush1.bf16.msra.mxu0 0
        %590 = vmatprep.subr.bf16.mxu0 0
        %591 = vmatpush1.bf16.msra.mxu0 0
        %592 = vmatprep.subr.bf16.mxu0 0
        %593 = vmatpush1.bf16.msra.mxu0 0
        %594 = vmatprep.subr.bf16.mxu0 0
        %595 = vmatpush1.bf16.msra.mxu0 %v578
        %596 = vmatprep.subr.bf16.mxu0 0
        %597 = vmatpush2.bf16.msra.mxu0 0
        %598 = vmatprep.subr.bf16.mxu0 0
        %599 = vmatpush2.bf16.msra.mxu0 0
        %600 = vmatprep.subr.bf16.mxu0 0
        %601 = vmatpush2.bf16.msra.mxu0 0
        %602 = vmatprep.subr.bf16.mxu0 0
        %603 = vmatpush2.bf16.msra.mxu0 0
        %604 = vmatprep.subr.bf16.mxu0 0
        %605 = vmatpush2.bf16.msra.mxu0 0
        %606 = vmatprep.subr.bf16.mxu0 0
        %607 = vmatpush2.bf16.msra.mxu0 0
        %608 = vmatprep.subr.bf16.mxu0 0
        %609 = vmatpush2.bf16.msra.mxu0 0
        %610 = vmatprep.subr.bf16.mxu0 0
        %611 = vmatpush2.bf16.msra.mxu0 0
        %612 = vmatprep.mubr.bf16.mxu0 0
        %613 = vmatmul.mubr.bf16.gmra.mxu0 %v574
        %v614 = vpop.f32.mrf.mxu0
        %v615 = vadd.f32 0.0, %v614
        %v616 = vpop.f32.mrf.mxu0
        %v617 = vpop.f32.mrf.mxu0
        %v618 = vpop.f32.mrf.mxu0
        %619 = vdwg.mxu0
        %620 = vst.msk [vmem:[#allocation2] sm:$0xff] %vm512, %v615
        %621 = vrot.lane.b32.xlu0 %v508, 120
        %v622 = vpop.permute.xlu0 %621
        %623 = vrot.lane.b32.xlu0 %v508, 88
        %v624 = vpop.permute.xlu0 %623
        %v626 = vsel %vm512, %v622, 0
        %v629 = vsel %vm512, %v624, 0
        %631 = vmatprep.subr.bf16.mxu0 0
        %632 = vmatpush1.bf16.xpose.msra.mxu0 0
        %633 = vmatprep.subr.bf16.mxu0 0
        %634 = vmatpush1.bf16.xpose.msra.mxu0 0
        %635 = vmatprep.subr.bf16.mxu0 0
        %636 = vmatpush1.bf16.xpose.msra.mxu0 0
        %637 = vmatprep.subr.bf16.mxu0 0
        %638 = vmatpush1.bf16.xpose.msra.mxu0 0
        %639 = vmatprep.subr.bf16.mxu0 0
        %640 = vmatpush1.bf16.xpose.msra.mxu0 0
        %641 = vmatprep.subr.bf16.mxu0 0
        %642 = vmatpush1.bf16.xpose.msra.mxu0 0
        %643 = vmatprep.subr.bf16.mxu0 0
        %644 = vmatpush1.bf16.xpose.msra.mxu0 0
        %645 = vmatprep.subr.bf16.mxu0 0
        %646 = vmatpush1.bf16.xpose.msra.mxu0 %v629
        %647 = vmatprep.subr.bf16.mxu0 0
        %648 = vmatpush2.bf16.xpose.msra.mxu0 0
        %649 = vmatprep.subr.bf16.mxu0 0
        %650 = vmatpush2.bf16.xpose.msra.mxu0 0
        %651 = vmatprep.subr.bf16.mxu0 0
        %652 = vmatpush2.bf16.xpose.msra.mxu0 0
        %653 = vmatprep.subr.bf16.mxu0 0
        %654 = vmatpush2.bf16.xpose.msra.mxu0 0
        %655 = vmatprep.subr.bf16.mxu0 0
        %656 = vmatpush2.bf16.xpose.msra.mxu0 0
        %657 = vmatprep.subr.bf16.mxu0 0
        %658 = vmatpush2.bf16.xpose.msra.mxu0 0
        %659 = vmatprep.subr.bf16.mxu0 0
        %660 = vmatpush2.bf16.xpose.msra.mxu0 0
        %661 = vmatprep.subr.bf16.mxu0 0
        %662 = vmatpush2.bf16.xpose.msra.mxu0 0
        %663 = vmatprep.mubr.bf16.mxu0 0
        %664 = vmatmul.mubr.bf16.gmra.mxu0 %v626
        %v665 = vpop.f32.mrf.mxu0
        %v666 = vadd.f32 %v507, %v665
        %v667 = vpop.f32.mrf.mxu0
        %v668 = vpop.f32.mrf.mxu0
        %v669 = vpop.f32.mrf.mxu0
        %670 = vdwg.mxu0
        %v671 = vsel %vm512, %v666, -inf
        %672 = vmax.xlane.f32.xlu0 %v671
        %v673 = vpop.xlane.xlu0 %672
        %v674 = vsub.f32 %v666, %v673
        %v675 = vmul.f32 %v674, 1.442695
        %v676 = vpow.pop %v675
        %v677 = vsel %vm512, %v676, 0.0
        %678 = vadd.xlane.f32.xlu0 %v677
        %v679 = vpop.xlane.xlu0 %678
        %v680 = vrcp.pop %v679
        %v681 = vmul.f32 %v676, %v680
        %v682 = vpack.c.bf16 %v681, %v681
        %683 = vrot.lane.b32.xlu0 %v508, 56
        %v684 = vpop.permute.xlu0 %683
        %v686 = vsel %vm512, %v682, 0
        %v689 = vsel %vm576, %v684, 0
        %691 = vmatprep.subr.bf16.mxu0 0
        %692 = vmatpush1.bf16.msra.mxu0 0
        %693 = vmatprep.subr.bf16.mxu0 0
        %694 = vmatpush1.bf16.msra.mxu0 0
        %695 = vmatprep.subr.bf16.mxu0 0
        %696 = vmatpush1.bf16.msra.mxu0 0
        %697 = vmatprep.subr.bf16.mxu0 0
        %698 = vmatpush1.bf16.msra.mxu0 0
        %699 = vmatprep.subr.bf16.mxu0 0
        %700 = vmatpush1.bf16.msra.mxu0 0
        %701 = vmatprep.subr.bf16.mxu0 0
        %702 = vmatpush1.bf16.msra.mxu0 0
        %703 = vmatprep.subr.bf16.mxu0 0
        %704 = vmatpush1.bf16.msra.mxu0 0
        %705 = vmatprep.subr.bf16.mxu0 0
        %706 = vmatpush1.bf16.msra.mxu0 %v689
        %707 = vmatprep.subr.bf16.mxu0 0
        %708 = vmatpush2.bf16.msra.mxu0 0
        %709 = vmatprep.subr.bf16.mxu0 0
        %710 = vmatpush2.bf16.msra.mxu0 0
        %711 = vmatprep.subr.bf16.mxu0 0
        %712 = vmatpush2.bf16.msra.mxu0 0
        %713 = vmatprep.subr.bf16.mxu0 0
        %714 = vmatpush2.bf16.msra.mxu0 0
        %715 = vmatprep.subr.bf16.mxu0 0
        %716 = vmatpush2.bf16.msra.mxu0 0
        %717 = vmatprep.subr.bf16.mxu0 0
        %718 = vmatpush2.bf16.msra.mxu0 0
        %719 = vmatprep.subr.bf16.mxu0 0
        %720 = vmatpush2.bf16.msra.mxu0 0
        %721 = vmatprep.subr.bf16.mxu0 0
        %722 = vmatpush2.bf16.msra.mxu0 0
        %723 = vmatprep.mubr.bf16.mxu0 0
        %724 = vmatmul.mubr.bf16.gmra.mxu0 %v686
        %v725 = vpop.f32.mrf.mxu0
        %v726 = vadd.f32 0.0, %v725
        %v727 = vpop.f32.mrf.mxu0
        %v728 = vpop.f32.mrf.mxu0
        %v729 = vpop.f32.mrf.mxu0
        %730 = vdwg.mxu0
        %732 = vrot.lane.b32.xlu0 %v726, 8
        %v733 = vpop.permute.xlu0 %732
        %vm735 = vcmask 130112
        %736 = vst.msk [vmem:[#allocation2] sm:$0xff] %vm735, %v733
        %737 = vrot.lane.b32.xlu0 %v508, 112
        %v738 = vpop.permute.xlu0 %737
        %739 = vrot.lane.b32.xlu0 %v508, 80
        %v740 = vpop.permute.xlu0 %739
        %v742 = vsel %vm512, %v738, 0
        %v745 = vsel %vm512, %v740, 0
        %747 = vmatprep.subr.bf16.mxu0 0
        %748 = vmatpush1.bf16.xpose.msra.mxu0 0
        %749 = vmatprep.subr.bf16.mxu0 0
        %750 = vmatpush1.bf16.xpose.msra.mxu0 0
        %751 = vmatprep.subr.bf16.mxu0 0
        %752 = vmatpush1.bf16.xpose.msra.mxu0 0
        %753 = vmatprep.subr.bf16.mxu0 0
        %754 = vmatpush1.bf16.xpose.msra.mxu0 0
        %755 = vmatprep.subr.bf16.mxu0 0
        %756 = vmatpush1.bf16.xpose.msra.mxu0 0
        %757 = vmatprep.subr.bf16.mxu0 0
        %758 = vmatpush1.bf16.xpose.msra.mxu0 0
        %759 = vmatprep.subr.bf16.mxu0 0
        %760 = vmatpush1.bf16.xpose.msra.mxu0 0
        %761 = vmatprep.subr.bf16.mxu0 0
        %762 = vmatpush1.bf16.xpose.msra.mxu0 %v745
        %763 = vmatprep.subr.bf16.mxu0 0
        %764 = vmatpush2.bf16.xpose.msra.mxu0 0
        %765 = vmatprep.subr.bf16.mxu0 0
        %766 = vmatpush2.bf16.xpose.msra.mxu0 0
        %767 = vmatprep.subr.bf16.mxu0 0
        %768 = vmatpush2.bf16.xpose.msra.mxu0 0
        %769 = vmatprep.subr.bf16.mxu0 0
        %770 = vmatpush2.bf16.xpose.msra.mxu0 0
        %771 = vmatprep.subr.bf16.mxu0 0
        %772 = vmatpush2.bf16.xpose.msra.mxu0 0
        %773 = vmatprep.subr.bf16.mxu0 0
        %774 = vmatpush2.bf16.xpose.msra.mxu0 0
        %775 = vmatprep.subr.bf16.mxu0 0
        %776 = vmatpush2.bf16.xpose.msra.mxu0 0
        %777 = vmatprep.subr.bf16.mxu0 0
        %778 = vmatpush2.bf16.xpose.msra.mxu0 0
        %779 = vmatprep.mubr.bf16.mxu0 0
        %780 = vmatmul.mubr.bf16.gmra.mxu0 %v742
        %v781 = vpop.f32.mrf.mxu0
        %v782 = vadd.f32 %v507, %v781
        %v783 = vpop.f32.mrf.mxu0
        %v784 = vpop.f32.mrf.mxu0
        %v785 = vpop.f32.mrf.mxu0
        %786 = vdwg.mxu0
        %v787 = vsel %vm512, %v782, -inf
        %788 = vmax.xlane.f32.xlu0 %v787
        %v789 = vpop.xlane.xlu0 %788
        %v790 = vsub.f32 %v782, %v789
        %v791 = vmul.f32 %v790, 1.442695
        %v792 = vpow.pop %v791
        %v793 = vsel %vm512, %v792, 0.0
        %794 = vadd.xlane.f32.xlu0 %v793
        %v795 = vpop.xlane.xlu0 %794
        %v796 = vrcp.pop %v795
        %v797 = vmul.f32 %v792, %v796
        %v798 = vpack.c.bf16 %v797, %v797
        %799 = vrot.lane.b32.xlu0 %v508, 48
        %v800 = vpop.permute.xlu0 %799
        %v802 = vsel %vm512, %v798, 0
        %v805 = vsel %vm576, %v800, 0
        %807 = vmatprep.subr.bf16.mxu0 0
        %808 = vmatpush1.bf16.msra.mxu0 0
        %809 = vmatprep.subr.bf16.mxu0 0
        %810 = vmatpush1.bf16.msra.mxu0 0
        %811 = vmatprep.subr.bf16.mxu0 0
        %812 = vmatpush1.bf16.msra.mxu0 0
        %813 = vmatprep.subr.bf16.mxu0 0
        %814 = vmatpush1.bf16.msra.mxu0 0
        %815 = vmatprep.subr.bf16.mxu0 0
        %816 = vmatpush1.bf16.msra.mxu0 0
        %817 = vmatprep.subr.bf16.mxu0 0
        %818 = vmatpush1.bf16.msra.mxu0 0
        %819 = vmatprep.subr.bf16.mxu0 0
        %820 = vmatpush1.bf16.msra.mxu0 0
        %821 = vmatprep.subr.bf16.mxu0 0
        %822 = vmatpush1.bf16.msra.mxu0 %v805
        %823 = vmatprep.subr.bf16.mxu0 0
        %824 = vmatpush2.bf16.msra.mxu0 0
        %825 = vmatprep.subr.bf16.mxu0 0
        %826 = vmatpush2.bf16.msra.mxu0 0
        %827 = vmatprep.subr.bf16.mxu0 0
        %828 = vmatpush2.bf16.msra.mxu0 0
        %829 = vmatprep.subr.bf16.mxu0 0
        %830 = vmatpush2.bf16.msra.mxu0 0
        %831 = vmatprep.subr.bf16.mxu0 0
        %832 = vmatpush2.bf16.msra.mxu0 0
        %833 = vmatprep.subr.bf16.mxu0 0
        %834 = vmatpush2.bf16.msra.mxu0 0
        %835 = vmatprep.subr.bf16.mxu0 0
        %836 = vmatpush2.bf16.msra.mxu0 0
        %837 = vmatprep.subr.bf16.mxu0 0
        %838 = vmatpush2.bf16.msra.mxu0 0
        %839 = vmatprep.mubr.bf16.mxu0 0
        %840 = vmatmul.mubr.bf16.gmra.mxu0 %v802
        %v841 = vpop.f32.mrf.mxu0
        %v842 = vadd.f32 0.0, %v841
        %v843 = vpop.f32.mrf.mxu0
        %v844 = vpop.f32.mrf.mxu0
        %v845 = vpop.f32.mrf.mxu0
        %846 = vdwg.mxu0
        %848 = vrot.lane.b32.xlu0 %v842, 16
        %v849 = vpop.permute.xlu0 %848
        %vm851 = vcmask 195712
        %852 = vst.msk [vmem:[#allocation2] sm:$0xff] %vm851, %v849
        %853 = vrot.lane.b32.xlu0 %v508, 104
        %v854 = vpop.permute.xlu0 %853
        %855 = vrot.lane.b32.xlu0 %v508, 72
        %v856 = vpop.permute.xlu0 %855
        %v858 = vsel %vm512, %v854, 0
        %v861 = vsel %vm512, %v856, 0
        %863 = vmatprep.subr.bf16.mxu0 0
        %864 = vmatpush1.bf16.xpose.msra.mxu0 0
        %865 = vmatprep.subr.bf16.mxu0 0
        %866 = vmatpush1.bf16.xpose.msra.mxu0 0
        %867 = vmatprep.subr.bf16.mxu0 0
        %868 = vmatpush1.bf16.xpose.msra.mxu0 0
        %869 = vmatprep.subr.bf16.mxu0 0
        %870 = vmatpush1.bf16.xpose.msra.mxu0 0
        %871 = vmatprep.subr.bf16.mxu0 0
        %872 = vmatpush1.bf16.xpose.msra.mxu0 0
        %873 = vmatprep.subr.bf16.mxu0 0
        %874 = vmatpush1.bf16.xpose.msra.mxu0 0
        %875 = vmatprep.subr.bf16.mxu0 0
        %876 = vmatpush1.bf16.xpose.msra.mxu0 0
        %877 = vmatprep.subr.bf16.mxu0 0
        %878 = vmatpush1.bf16.xpose.msra.mxu0 %v861
        %879 = vmatprep.subr.bf16.mxu0 0
        %880 = vmatpush2.bf16.xpose.msra.mxu0 0
        %881 = vmatprep.subr.bf16.mxu0 0
        %882 = vmatpush2.bf16.xpose.msra.mxu0 0
        %883 = vmatprep.subr.bf16.mxu0 0
        %884 = vmatpush2.bf16.xpose.msra.mxu0 0
        %885 = vmatprep.subr.bf16.mxu0 0
        %886 = vmatpush2.bf16.xpose.msra.mxu0 0
        %887 = vmatprep.subr.bf16.mxu0 0
        %888 = vmatpush2.bf16.xpose.msra.mxu0 0
        %889 = vmatprep.subr.bf16.mxu0 0
        %890 = vmatpush2.bf16.xpose.msra.mxu0 0
        %891 = vmatprep.subr.bf16.mxu0 0
        %892 = vmatpush2.bf16.xpose.msra.mxu0 0
        %893 = vmatprep.subr.bf16.mxu0 0
        %894 = vmatpush2.bf16.xpose.msra.mxu0 0
        %895 = vmatprep.mubr.bf16.mxu0 0
        %896 = vmatmul.mubr.bf16.gmra.mxu0 %v858
        %v897 = vpop.f32.mrf.mxu0
        %v898 = vadd.f32 %v507, %v897
        %v899 = vpop.f32.mrf.mxu0
        %v900 = vpop.f32.mrf.mxu0
        %v901 = vpop.f32.mrf.mxu0
        %902 = vdwg.mxu0
        %v903 = vsel %vm512, %v898, -inf
        %904 = vmax.xlane.f32.xlu0 %v903
        %v905 = vpop.xlane.xlu0 %904
        %v906 = vsub.f32 %v898, %v905
        %v907 = vmul.f32 %v906, 1.442695
        %v908 = vpow.pop %v907
        %v909 = vsel %vm512, %v908, 0.0
        %910 = vadd.xlane.f32.xlu0 %v909
        %v911 = vpop.xlane.xlu0 %910
        %v912 = vrcp.pop %v911
        %v913 = vmul.f32 %v908, %v912
        %v914 = vpack.c.bf16 %v913, %v913
        %915 = vrot.lane.b32.xlu0 %v508, 40
        %v916 = vpop.permute.xlu0 %915
        %v918 = vsel %vm512, %v914, 0
        %v921 = vsel %vm576, %v916, 0
        %923 = vmatprep.subr.bf16.mxu0 0
        %924 = vmatpush1.bf16.msra.mxu0 0
        %925 = vmatprep.subr.bf16.mxu0 0
        %926 = vmatpush1.bf16.msra.mxu0 0
        %927 = vmatprep.subr.bf16.mxu0 0
        %928 = vmatpush1.bf16.msra.mxu0 0
        %929 = vmatprep.subr.bf16.mxu0 0
        %930 = vmatpush1.bf16.msra.mxu0 0
        %931 = vmatprep.subr.bf16.mxu0 0
        %932 = vmatpush1.bf16.msra.mxu0 0
        %933 = vmatprep.subr.bf16.mxu0 0
        %934 = vmatpush1.bf16.msra.mxu0 0
        %935 = vmatprep.subr.bf16.mxu0 0
        %936 = vmatpush1.bf16.msra.mxu0 0
        %937 = vmatprep.subr.bf16.mxu0 0
        %938 = vmatpush1.bf16.msra.mxu0 %v921
        %939 = vmatprep.subr.bf16.mxu0 0
        %940 = vmatpush2.bf16.msra.mxu0 0
        %941 = vmatprep.subr.bf16.mxu0 0
        %942 = vmatpush2.bf16.msra.mxu0 0
        %943 = vmatprep.subr.bf16.mxu0 0
        %944 = vmatpush2.bf16.msra.mxu0 0
        %945 = vmatprep.subr.bf16.mxu0 0
        %946 = vmatpush2.bf16.msra.mxu0 0
        %947 = vmatprep.subr.bf16.mxu0 0
        %948 = vmatpush2.bf16.msra.mxu0 0
        %949 = vmatprep.subr.bf16.mxu0 0
        %950 = vmatpush2.bf16.msra.mxu0 0
        %951 = vmatprep.subr.bf16.mxu0 0
        %952 = vmatpush2.bf16.msra.mxu0 0
        %953 = vmatprep.subr.bf16.mxu0 0
        %954 = vmatpush2.bf16.msra.mxu0 0
        %955 = vmatprep.mubr.bf16.mxu0 0
        %956 = vmatmul.mubr.bf16.gmra.mxu0 %v918
        %v957 = vpop.f32.mrf.mxu0
        %v958 = vadd.f32 0.0, %v957
        %v959 = vpop.f32.mrf.mxu0
        %v960 = vpop.f32.mrf.mxu0
        %v961 = vpop.f32.mrf.mxu0
        %962 = vdwg.mxu0
        %964 = vrot.lane.b32.xlu0 %v958, 24
        %v965 = vpop.permute.xlu0 %964
        %vm967 = vcmask 261312
        %968 = vst.msk [vmem:[#allocation2] sm:$0xff] %vm967, %v965
        %v969 = vld [vmem:[#allocation2] sm:$0xff]
        %v970 = vpack.c.bf16 %v969, %v969
        %v971 = vld [vmem:[%s4] sm:$0xf]
        %v972 = vld [vmem:[%s4 + $0x4] sm:$0xf]
        %v973 = vld [vmem:[%s4 + $0x8] sm:$0xf]
        %v974 = vld [vmem:[%s4 + $0xc] sm:$0xf]
        %v975 = vld [vmem:[%s5] sm:$0x1]
        %v977 = vlaneseq
        %v978 = vshrl.u32 %v977, 7
        %v979 = vsub.s32 0, %v978
        %v980 = vrot.slane %v975, %v979
        %v986 = vunpack.c.l.b16 %v971
        %v987 = vunpack.c.l.b16 %v972
        %v988 = vunpack.c.l.b16 %v973
        %v989 = vunpack.c.l.b16 %v974
        %v990 = vpack.c.b16 %v987, %v986
        %v991 = vpack.c.b16 %v989, %v988
        %v995 = vsel %vm413, %v970, 0
        %997 = vmatprep.subr.bf16.mxu0 0
        %998 = vmatpush1.bf16.msra.mxu0 0
        %999 = vmatprep.subr.bf16.mxu0 0
        %1000 = vmatpush1.bf16.msra.mxu0 0
        %1001 = vmatprep.subr.bf16.mxu0 0
        %1002 = vmatpush1.bf16.msra.mxu0 0
        %1003 = vmatprep.subr.bf16.mxu0 0
        %1004 = vmatpush1.bf16.msra.mxu0 0
        %1005 = vmatprep.subr.bf16.mxu0 0
        %1006 = vmatpush1.bf16.msra.mxu0 0
        %1007 = vmatprep.subr.bf16.mxu0 0
        %1008 = vmatpush1.bf16.msra.mxu0 0
        %1009 = vmatprep.subr.bf16.mxu0 0
        %1010 = vmatpush1.bf16.msra.mxu0 %v991
        %1011 = vmatprep.subr.bf16.mxu0 0
        %1012 = vmatpush1.bf16.msra.mxu0 %v990
        %1013 = vmatprep.subr.bf16.mxu0 0
        %1014 = vmatpush2.bf16.msra.mxu0 0
        %1015 = vmatprep.subr.bf16.mxu0 0
        %1016 = vmatpush2.bf16.msra.mxu0 0
        %1017 = vmatprep.subr.bf16.mxu0 0
        %1018 = vmatpush2.bf16.msra.mxu0 0
        %1019 = vmatprep.subr.bf16.mxu0 0
        %1020 = vmatpush2.bf16.msra.mxu0 0
        %1021 = vmatprep.subr.bf16.mxu0 0
        %1022 = vmatpush2.bf16.msra.mxu0 0
        %1023 = vmatprep.subr.bf16.mxu0 0
        %1024 = vmatpush2.bf16.msra.mxu0 0
        %1025 = vmatprep.subr.bf16.mxu0 0
        %1026 = vmatpush2.bf16.msra.mxu0 0
        %1027 = vmatprep.subr.bf16.mxu0 0
        %1028 = vmatpush2.bf16.msra.mxu0 0
        %1029 = vmatprep.mubr.bf16.mxu0 0
        %1030 = vmatmul.mubr.bf16.gmra.mxu0 %v995
        %v1031 = vpop.f32.mrf.mxu0
        %v1032 = vadd.f32 %v980, %v1031
        %v1033 = vpop.f32.mrf.mxu0
        %v1034 = vpop.f32.mrf.mxu0
        %v1035 = vpop.f32.mrf.mxu0
        %1036 = vdwg.mxu0
        %v1037 = vadd.f32 %v1032, %v410
        %v1038 = vld [vmem:[%s6] sm:$0x1]
        %v1039 = vld [vmem:[%s7] sm:$0x1]
        %v1040 = vsel %vm413, %v1037, 0.0
        %1041 = vadd.xlane.f32.xlu0 %v1040
        %v1042 = vpop.xlane.xlu0 %1041
        %v1043 = vmul.f32 %v1042, %v417
        %v1044 = vsub.f32 %v1037, %v1043
        %v1045 = vmul.f32 %v1044, %v1044
        %v1046 = vsel %vm413, %v1045, 0.0
        %1047 = vadd.xlane.f32.xlu0 %v1046
        %v1048 = vpop.xlane.xlu0 %1047
        %v1049 = vmul.f32 %v1048, %v417
        %v1050 = vadd.f32 %v1049, 1e-05
        %v1051 = vrsqrt.pop %v1050
        %v1052 = vmul.f32 %v1044, %v1051
        %v1054 = vlaneseq
        %v1055 = vshrl.u32 %v1054, 7
        %v1056 = vsub.s32 0, %v1055
        %v1057 = vrot.slane %v1038, %v1056
        %v1059 = vmul.f32 %v1052, %v1057
        %v1061 = vlaneseq
        %v1062 = vshrl.u32 %v1061, 7
        %v1063 = vsub.s32 0, %v1062
        %v1064 = vrot.slane %v1039, %v1063
        %v1066 = vadd.f32 %v1059, %v1064
        %v1067 = vpack.c.bf16 %v1066, %v1066
        %v1068 = vld [vmem:[%s8] sm:$0xf]
        %v1069 = vld [vmem:[%s8 + $0x4] sm:$0xf]
        %v1070 = vld [vmem:[%s8 + $0x8] sm:$0xf]
        %v1071 = vld [vmem:[%s8 + $0xc] sm:$0xf]
        %v1072 = vld [vmem:[%s9] sm:$0x1]
        %v1074 = vlaneseq
        %v1075 = vshrl.u32 %v1074, 7
        %v1076 = vsub.s32 0, %v1075
        %v1077 = vrot.slane %v1072, %v1076
        %v1083 = vunpack.c.l.b16 %v1068
        %v1084 = vunpack.c.l.b16 %v1069
        %v1085 = vunpack.c.l.b16 %v1070
        %v1086 = vunpack.c.l.b16 %v1071
        %v1087 = vpack.c.b16 %v1084, %v1083
        %v1088 = vpack.c.b16 %v1086, %v1085
        %v1092 = vsel %vm413, %v1067, 0
        %1094 = vmatprep.subr.bf16.mxu0 0
        %1095 = vmatpush1.bf16.msra.mxu0 0
        %1096 = vmatprep.subr.bf16.mxu0 0
        %1097 = vmatpush1.bf16.msra.mxu0 0
        %1098 = vmatprep.subr.bf16.mxu0 0
        %1099 = vmatpush1.bf16.msra.mxu0 0
        %1100 = vmatprep.subr.bf16.mxu0 0
        %1101 = vmatpush1.bf16.msra.mxu0 0
        %1102 = vmatprep.subr.bf16.mxu0 0
        %1103 = vmatpush1.bf16.msra.mxu0 0
        %1104 = vmatprep.subr.bf16.mxu0 0
        %1105 = vmatpush1.bf16.msra.mxu0 0
        %1106 = vmatprep.subr.bf16.mxu0 0
        %1107 = vmatpush1.bf16.msra.mxu0 %v1088
        %1108 = vmatprep.subr.bf16.mxu0 0
        %1109 = vmatpush1.bf16.msra.mxu0 %v1087
        %1110 = vmatprep.subr.bf16.mxu0 0
        %1111 = vmatpush2.bf16.msra.mxu0 0
        %1112 = vmatprep.subr.bf16.mxu0 0
        %1113 = vmatpush2.bf16.msra.mxu0 0
        %1114 = vmatprep.subr.bf16.mxu0 0
        %1115 = vmatpush2.bf16.msra.mxu0 0
        %1116 = vmatprep.subr.bf16.mxu0 0
        %1117 = vmatpush2.bf16.msra.mxu0 0
        %1118 = vmatprep.subr.bf16.mxu0 0
        %1119 = vmatpush2.bf16.msra.mxu0 0
        %1120 = vmatprep.subr.bf16.mxu0 0
        %1121 = vmatpush2.bf16.msra.mxu0 0
        %1122 = vmatprep.subr.bf16.mxu0 0
        %1123 = vmatpush2.bf16.msra.mxu0 0
        %1124 = vmatprep.subr.bf16.mxu0 0
        %1125 = vmatpush2.bf16.msra.mxu0 0
        %1126 = vmatprep.mubr.bf16.mxu0 0
        %1127 = vmatmul.mubr.bf16.gmra.mxu0 %v1092
        %v1128 = vpop.f32.mrf.mxu0
        %v1129 = vadd.f32 %v1077, %v1128
        %v1130 = vpop.f32.mrf.mxu0
        %v1131 = vpop.f32.mrf.mxu0
        %v1132 = vpop.f32.mrf.mxu0
        %1133 = vdwg.mxu0
        %v1134 = vmax.f32 %v1129, 0.0
        %v1135 = vpack.c.bf16 %v1134, %v1134
        %v1136 = vld [vmem:[%s10] sm:$0xf]
        %v1137 = vld [vmem:[%s10 + $0x4] sm:$0xf]
        %v1138 = vld [vmem:[%s10 + $0x8] sm:$0xf]
        %v1139 = vld [vmem:[%s10 + $0xc] sm:$0xf]
        %v1140 = vld [vmem:[%s10 + $0x10] sm:$0xf]
        %v1141 = vld [vmem:[%s10 + $0x14] sm:$0xf]
        %v1142 = vld [vmem:[%s10 + $0x18] sm:$0xf]
        %v1143 = vld [vmem:[%s10 + $0x1c] sm:$0xf]
        %v1144 = vld [vmem:[%s10 + $0x20] sm:$0xf]
        %v1145 = vld [vmem:[%s10 + $0x24] sm:$0xf]
        %v1146 = vld [vmem:[%s10 + $0x28] sm:$0xf]
        %v1147 = vld [vmem:[%s10 + $0x2c] sm:$0xf]
        %v1148 = vld [vmem:[%s10 + $0x30] sm:$0xf]
        %v1149 = vld [vmem:[%s10 + $0x34] sm:$0xf]
        %v1150 = vld [vmem:[%s10 + $0x38] sm:$0xf]
        %v1151 = vld [vmem:[%s10 + $0x3c] sm:$0xf]
        %v1152 = vld [vmem:[%s11] sm:$0x1]
        %v1154 = vlaneseq
        %v1155 = vshrl.u32 %v1154, 7
        %v1156 = vsub.s32 0, %v1155
        %v1157 = vrot.slane %v1152, %v1156
        %v1175 = vunpack.c.l.b16 %v1136
        %v1176 = vunpack.c.l.b16 %v1137
        %v1177 = vunpack.c.l.b16 %v1138
        %v1178 = vunpack.c.l.b16 %v1139
        %v1179 = vunpack.c.l.b16 %v1140
        %v1180 = vunpack.c.l.b16 %v1141
        %v1181 = vunpack.c.l.b16 %v1142
        %v1182 = vunpack.c.l.b16 %v1143
        %v1183 = vunpack.c.l.b16 %v1144
        %v1184 = vunpack.c.l.b16 %v1145
        %v1185 = vunpack.c.l.b16 %v1146
        %v1186 = vunpack.c.l.b16 %v1147
        %v1187 = vunpack.c.l.b16 %v1148
        %v1188 = vunpack.c.l.b16 %v1149
        %v1189 = vunpack.c.l.b16 %v1150
        %v1190 = vunpack.c.l.b16 %v1151
        %v1191 = vpack.c.b16 %v1176, %v1175
        %v1192 = vpack.c.b16 %v1178, %v1177
        %v1193 = vpack.c.b16 %v1180, %v1179
        %v1194 = vpack.c.b16 %v1182, %v1181
        %v1195 = vpack.c.b16 %v1184, %v1183
        %v1196 = vpack.c.b16 %v1186, %v1185
        %v1197 = vpack.c.b16 %v1188, %v1187
        %v1198 = vpack.c.b16 %v1190, %v1189
        %1207 = vmatprep.subr.bf16.mxu0 0
        %1208 = vmatpush1.bf16.msra.mxu0 %v1198
        %1209 = vmatprep.subr.bf16.mxu0 0
        %1210 = vmatpush1.bf16.msra.mxu0 %v1197
        %1211 = vmatprep.subr.bf16.mxu0 0
        %1212 = vmatpush1.bf16.msra.mxu0 %v1196
        %1213 = vmatprep.subr.bf16.mxu0 0
        %1214 = vmatpush1.bf16.msra.mxu0 %v1195
        %1215 = vmatprep.subr.bf16.mxu0 0
        %1216 = vmatpush1.bf16.msra.mxu0 %v1194
        %1217 = vmatprep.subr.bf16.mxu0 0
        %1218 = vmatpush1.bf16.msra.mxu0 %v1193
        %1219 = vmatprep.subr.bf16.mxu0 0
        %1220 = vmatpush1.bf16.msra.mxu0 %v1192
        %1221 = vmatprep.subr.bf16.mxu0 0
        %1222 = vmatpush1.bf16.msra.mxu0 %v1191
        %1223 = vmatprep.subr.bf16.mxu0 0
        %1224 = vmatpush2.bf16.msra.mxu0 0
        %1225 = vmatprep.subr.bf16.mxu0 0
        %1226 = vmatpush2.bf16.msra.mxu0 0
        %1227 = vmatprep.subr.bf16.mxu0 0
        %1228 = vmatpush2.bf16.msra.mxu0 0
        %1229 = vmatprep.subr.bf16.mxu0 0
        %1230 = vmatpush2.bf16.msra.mxu0 0
        %1231 = vmatprep.subr.bf16.mxu0 0
        %1232 = vmatpush2.bf16.msra.mxu0 0
        %1233 = vmatprep.subr.bf16.mxu0 0
        %1234 = vmatpush2.bf16.msra.mxu0 0
        %1235 = vmatprep.subr.bf16.mxu0 0
        %1236 = vmatpush2.bf16.msra.mxu0 0
        %1237 = vmatprep.subr.bf16.mxu0 0
        %1238 = vmatpush2.bf16.msra.mxu0 0
        %1239 = vmatprep.mubr.bf16.mxu0 0
        %1240 = vmatmul.mubr.bf16.gmra.mxu0 %v1135
        %v1241 = vpop.f32.mrf.mxu0
        %v1242 = vadd.f32 %v1157, %v1241
        %v1243 = vpop.f32.mrf.mxu0
        %v1244 = vpop.f32.mrf.mxu0
        %v1245 = vpop.f32.mrf.mxu0
        %1246 = vdwg.mxu0
        %v1247 = vadd.f32 %v1242, %v410
        %1248 = vst.msk [vmem:[%s404] sm:$0xff] %vm413, %v1247
        %s1249 = sand.u32 %s291, 1
        %s1250 = scalar_lea.sflag [#allocation4], %s1249
        %s1251 = sand.u32 %s291, 1
        %s1252 = smul.addr %s1251, 8
        %s1253 = scalar_lea.vmem [#allocation3], %s1252
        // Predicated region
        $region69: #{tpu_custom_call.1} parent=67 // pred_check
          %p1254 = pneg %p301
        $region70: #{tpu_custom_call.1} parent=67 // pred_check_branch
          %1256 = sbr.rel (%p1254) target = $region72
        $region71: #{tpu_custom_call.1} parent=67 // pred_region
          %s1258 = ssub.s32 128, 128
          %1259 = vsyncadd %s1250, %s1258
          %s1260 = smul.addr %s26, 128
          %s1261 = scalar_lea.hbm %s12, %s1260
          %s1263 = sshll.u32 %s1253, 4
          %s1264 = int_to_ptr.vmem [resolvable:$true] %s1263
          %1266 = dma.vmem_to_hbm [thread:$0]  %s1264, 128, %s1261, %s1250
        $region72: #{tpu_custom_call.1} parent=67 // pred_fallthru
          _
      $region68: #{tpu_custom_call.1} parent=5 // pred_fallthru
        _
      %p1267 = scmp.le.s32.totalorder 2, %s21
      // Predicated region
      $region73: #{tpu_custom_call.1} parent=5 // pred_check
        %p1268 = pneg %p1267
      $region74: #{tpu_custom_call.1} parent=5 // pred_check_branch
        %1270 = sbr.rel (%p1268) target = $region76
      $region75: #{tpu_custom_call.1} parent=5 // pred_region
        %s1271 = ssub.s32 %s21, 2
        // Predicated region
        $region77: #{tpu_custom_call.1} parent=75 // pred_check
          %p1272 = pneg %p307
        $region78: #{tpu_custom_call.1} parent=75 // pred_check_branch
          %1274 = sbr.rel (%p1272) target = $region80
        $region79: #{tpu_custom_call.1} parent=75 // pred_region
          %s1275 = sand.u32 %s292, 1
          %s1276 = scalar_lea.sflag [#allocation4], %s1275
          %s1277 = sand.u32 %s292, 1
          %s1278 = smul.addr %s1277, 8
          %s1279 = scalar_lea.vmem [#allocation3], %s1278
          %1280 = dma.done %s1276, 128
        $region80: #{tpu_custom_call.1} parent=75 // pred_fallthru
          _
      $region76: #{tpu_custom_call.1} parent=5 // pred_fallthru
        _
    $region6: #{tpu_custom_call.1} parent=1 // loop_footer
      %s25 = sadd.s32 1, %s21
    $region7: #{tpu_custom_call.1} parent=1 // loop_footer_branch
      %20 = sbr.rel target = $region3
    $region8: #{tpu_custom_call.1} parent=1 // loop_exit
      _
    %1281 = vsyncpa [#allocation4], 1
    %s1282 = scalar_lea.sflag [#allocation4], 1
    %1283 = vsyncpa %s1282, 1

</llo_original>
